<compile_context>
chip_gen: v7x
topology: tpu7x:2x2x1
jax: 0.10.0
libtpu: 0.0.40
codegen_flags: <defaults>
</compile_context>

<pallas_src>
import functools

import jax
import jax.numpy as jnp
from jax.experimental import pallas as pl
from jax.experimental.pallas import tpu as pltpu


_VMEM_LIMIT_BYTES = 32 * 1024 * 1024  # explicit scoped-VMEM budget (v5e..v7x safe)


# ----------------------------------------------------------------------------
# Fused matmul + bias + activation kernel (N-tiled, weight-streaming grid)
# ----------------------------------------------------------------------------
def _matmul_bias_act_kernel(a_ref, w_ref, b_ref, o_ref, *, activation):
    acc = jnp.dot(a_ref[...], w_ref[...], preferred_element_type=jnp.float32)
    acc = acc + b_ref[...]                       # bias kept in f32
    if activation == "relu":
        acc = jnp.maximum(acc, 0.0)
    elif activation == "sigmoid":
        # stable sigmoid via tanh (EUP slot, no inf intermediates)
        acc = 0.5 * (jnp.tanh(0.5 * acc) + 1.0)
    o_ref[...] = acc.astype(o_ref.dtype)


def _choose_tn(n):
    """Largest MXU-friendly output tile that still yields >= 2 grid steps.

    >=2 steps keeps both v7x TensorCores streaming weights; the 512 cap keeps
    the double-buffered weight tile (2*K*tn*2B, K up to 4608) within v5e's
    scoped-VMEM budget and the f32 accumulator (M<=128 x tn) in registers.
    """
    for tn in (512, 256, 128):
        if n % tn == 0 and n // tn >= 2:
            return tn
    return n


def _pad_rows16(a):
    """Pad rows to a multiple of 16 (full bf16 sublane-packed vregs)."""
    m = a.shape[0]
    mp = ((m + 15) // 16) * 16
    if mp != m:
        a = jnp.pad(a, ((0, mp - m), (0, 0)))
    return a, mp


def matmul_bias_act(a, w, b2d, activation="none", out_dtype=jnp.bfloat16):
    """out = activation(a @ w + b); a:[M,K], w:[K,N] bf16, b2d:[1,N] f32."""
    M, K = a.shape
    K2, N = w.shape
    assert K == K2, (K, K2)
    assert b2d.shape == (1, N), (b2d.shape, N)
    a, Mp = _pad_rows16(a.astype(jnp.bfloat16))
    tn = _choose_tn(N)
    grid = (N // tn,)
    out_isize = jnp.dtype(out_dtype).itemsize
    cost = pl.CostEstimate(
        flops=2 * Mp * K * N,
        transcendentals=(Mp * N if activation == "sigmoid" else 0),
        bytes_accessed=Mp * K * 2 + K * N * 2 + N * 4 + Mp * N * out_isize,
    )
    kernel = functools.partial(_matmul_bias_act_kernel, activation=activation)
    out = pl.pallas_call(
        kernel,
        out_shape=jax.ShapeDtypeStruct((Mp, N), out_dtype),
        grid=grid,
        in_specs=[
            pl.BlockSpec((Mp, K), lambda n: (0, 0)),    # A resident across steps
            pl.BlockSpec((K, tn), lambda n: (0, n)),    # weight tiles stream in
            pl.BlockSpec((1, tn), lambda n: (0, n)),
        ],
        out_specs=pl.BlockSpec((Mp, tn), lambda n: (0, n)),
        compiler_params=pltpu.CompilerParams(
            dimension_semantics=("parallel",),          # v7x: shard N over 2 TCs
            vmem_limit_bytes=_VMEM_LIMIT_BYTES),
        cost_estimate=cost,
    )(a, w, b2d)
    return out if Mp == M else out[:M]


# ----------------------------------------------------------------------------
# Fused fc_mu / fc_var + reparameterize, Z-tiled grid (two weight streams)
# ----------------------------------------------------------------------------
def _muvar_reparam_kernel(h_ref, wmu_ref, wvar_ref, bmu_ref, bvar_ref, eps_ref,
                          mu_ref, lv_ref, hx_ref):
    h = h_ref[...]
    mu = jnp.dot(h, wmu_ref[...], preferred_element_type=jnp.float32) + bmu_ref[...]
    lv = jnp.dot(h, wvar_ref[...], preferred_element_type=jnp.float32) + bvar_ref[...]
    mu_ref[...] = mu
    lv_ref[...] = lv
    # z = mu + exp(0.5*logvar) * eps   (eps supplied from outside)
    hx_ref[...] = mu + jnp.exp(0.5 * lv) * eps_ref[...]


def muvar_reparam(h, w_mu, w_var, b_mu2d, b_var2d, eps):
    """h:[B,F], w_mu/w_var:[F,Z] bf16, b_*:[1,Z] f32, eps:[B,Z] f32."""
    B, F = h.shape
    Z = w_mu.shape[1]
    h, Bp = _pad_rows16(h.astype(jnp.bfloat16))
    eps = eps.astype(jnp.float32)
    if Bp != B:
        eps = jnp.pad(eps, ((0, Bp - B), (0, 0)))
    tz = _choose_tn(Z)
    grid = (Z // tz,)
    cost = pl.CostEstimate(
        flops=2 * 2 * Bp * F * Z,
        transcendentals=Bp * Z,
        bytes_accessed=Bp * F * 2 + 2 * F * Z * 2 + 2 * Z * 4
        + Bp * Z * 4 + 3 * Bp * Z * 4,
    )
    out_z = jax.ShapeDtypeStruct((Bp, Z), jnp.float32)
    mu, lv, hx = pl.pallas_call(
        _muvar_reparam_kernel,
        out_shape=(out_z, out_z, out_z),
        grid=grid,
        in_specs=[
            pl.BlockSpec((Bp, F), lambda n: (0, 0)),    # h resident
            pl.BlockSpec((F, tz), lambda n: (0, n)),    # mu weight tiles stream
            pl.BlockSpec((F, tz), lambda n: (0, n)),    # var weight tiles stream
            pl.BlockSpec((1, tz), lambda n: (0, n)),
            pl.BlockSpec((1, tz), lambda n: (0, n)),
            pl.BlockSpec((Bp, tz), lambda n: (0, n)),
        ],
        out_specs=(
            pl.BlockSpec((Bp, tz), lambda n: (0, n)),
            pl.BlockSpec((Bp, tz), lambda n: (0, n)),
            pl.BlockSpec((Bp, tz), lambda n: (0, n)),
        ),
        compiler_params=pltpu.CompilerParams(
            dimension_semantics=("parallel",),
            vmem_limit_bytes=_VMEM_LIMIT_BYTES),
        cost_estimate=cost,
    )(h, w_mu, w_var, b_mu2d, b_var2d, eps)
    if Bp != B:
        mu, lv, hx = mu[:B], lv[:B], hx[:B]
    return mu, lv, hx


# ----------------------------------------------------------------------------
# NHWC conv glue (patch extraction is thin XLA glue; matmul is the Pallas kernel)
# ----------------------------------------------------------------------------
def _im2col_nhwc(x, kh, kw):
    """x:[B,H,W,C] -> patches:[B*Ho*Wo, kh*kw*C] (row col = (i*kw+j)*C + c)."""
    B, H, W, C = x.shape
    Ho, Wo = H - kh + 1, W - kw + 1
    cols = [x[:, i:i + Ho, j:j + Wo, :] for i in range(kh) for j in range(kw)]
    patches = jnp.concatenate(cols, axis=-1)           # [B,Ho,Wo,kh*kw*C]
    return patches.reshape(B * Ho * Wo, kh * kw * C), (Ho, Wo)


def conv2d_nhwc(x, w_mat, b2d, kh=3, kw=3, padding=0, activation="none",
                out_dtype=jnp.bfloat16):
    """x:[B,H,W,Cin] NHWC, w_mat:[kh*kw*Cin, Cout] (pre-packed bf16)."""
    if padding:
        x = jnp.pad(x, ((0, 0), (padding, padding), (padding, padding), (0, 0)))
    B = x.shape[0]
    patches, (Ho, Wo) = _im2col_nhwc(x, kh, kw)
    out = matmul_bias_act(patches, w_mat, b2d, activation, out_dtype)
    return out.reshape(B, Ho, Wo, -1)


# ----------------------------------------------------------------------------
# Parameter init (PyTorch-style) and one-time repack to kernel layout (bf16)
# ----------------------------------------------------------------------------
def _xavier_uniform(key, shape, fan_in, fan_out):
    bound = (6.0 / (fan_in + fan_out)) ** 0.5
    return jax.random.uniform(key, shape, jnp.float32, -bound, bound)


def _linear_default(key, shape, fan_in):
    bound = 1.0 / (fan_in ** 0.5)
    return jax.random.uniform(key, shape, jnp.float32, -bound, bound)


def init_params(key, dim, z_dim):
    """Torch-layout parameters (convs xavier + zero bias per weights_init;
    Linear layers use PyTorch's default +/-1/sqrt(fan_in))."""
    ks = jax.random.split(key, 16)
    d2 = dim // 2
    p = {}
    # encoder
    p["enc_w1"] = _xavier_uniform(ks[0], (dim, dim, 3, 3), dim * 9, dim * 9)
    p["enc_b1"] = jnp.zeros((dim,), jnp.float32)
    p["enc_w2"] = _xavier_uniform(ks[1], (d2, dim, 3, 3), dim * 9, d2 * 9)
    p["enc_b2"] = jnp.zeros((d2,), jnp.float32)
    # fc_mu / fc_var ([in,out]; flatten order here is NHWC's (h,w,c))
    # NOTE: fine for fresh init; loading torch-trained weights would require a
    # row permutation since torch flattens NCHW as (c,h,w).
    fin = d2 * 3 * 3
    p["mu_w"] = _linear_default(ks[2], (fin, z_dim), fin)
    p["mu_b"] = _linear_default(ks[3], (z_dim,), fin)
    p["var_w"] = _linear_default(ks[4], (fin, z_dim), fin)
    p["var_b"] = _linear_default(ks[5], (z_dim,), fin)
    # conditioner
    p["cond_w1"] = _xavier_uniform(ks[6], (dim, dim, 3, 3), dim * 9, dim * 9)
    p["cond_b1"] = jnp.zeros((dim,), jnp.float32)
    p["cond_w2"] = _xavier_uniform(ks[7], (d2, dim, 3, 3), dim * 9, d2 * 9)
    p["cond_b2"] = jnp.zeros((d2,), jnp.float32)
    cfin = d2 * 5 * 5
    p["cond_fc_w"] = _linear_default(ks[8], (cfin, z_dim), cfin)
    p["cond_fc_b"] = _linear_default(ks[9], (z_dim,), cfin)
    # decoder ConvTranspose weights in PyTorch layout [Cin, Cout, kh, kw]
    p["dec_w1"] = _xavier_uniform(ks[10], (2 * z_dim, dim, 3, 3), dim * 9, 2 * z_dim * 9)
    p["dec_b1"] = jnp.zeros((dim,), jnp.float32)
    p["dec_w2"] = _xavier_uniform(ks[11], (dim, dim, 3, 3), dim * 9, dim * 9)
    p["dec_b2"] = jnp.zeros((dim,), jnp.float32)
    p["dec_w3"] = _xavier_uniform(ks[12], (dim, dim, 3, 3), dim * 9, dim * 9)
    p["dec_b3"] = jnp.zeros((dim,), jnp.float32)
    return p


def prepare_params(p, dim, z_dim):
    """One-time repack (outside jit): bf16 weights in matmul layout,
    f32 biases already shaped (1, N) so no per-call reshape/astype glue."""
    def conv_mat(w):      # [Cout,Cin,kh,kw] -> [kh*kw*Cin, Cout]
        Cout, Cin, kh, kw = w.shape
        return w.transpose(2, 3, 1, 0).reshape(kh * kw * Cin, Cout).astype(jnp.bfloat16)

    def convt_mat(w):     # ConvT [Cin,Cout,kh,kw] -> flipped/swapped conv matrix
        Cin, Cout, kh, kw = w.shape
        w_eq = jnp.flip(w, axis=(2, 3))
        return w_eq.transpose(2, 3, 0, 1).reshape(kh * kw * Cin, Cout).astype(jnp.bfloat16)

    def bias2d(b):
        return b.reshape(1, -1).astype(jnp.float32)

    q = {}
    q["enc_w1"], q["enc_b1"] = conv_mat(p["enc_w1"]), bias2d(p["enc_b1"])
    q["enc_w2"], q["enc_b2"] = conv_mat(p["enc_w2"]), bias2d(p["enc_b2"])
    # fc_mu / fc_var kept as two weights so the reparam kernel can tile Z
    q["mu_w"], q["mu_b"] = p["mu_w"].astype(jnp.bfloat16), bias2d(p["mu_b"])
    q["var_w"], q["var_b"] = p["var_w"].astype(jnp.bfloat16), bias2d(p["var_b"])
    q["cond_w1"], q["cond_b1"] = conv_mat(p["cond_w1"]), bias2d(p["cond_b1"])
    q["cond_w2"], q["cond_b2"] = conv_mat(p["cond_w2"]), bias2d(p["cond_b2"])
    q["cond_fc_w"] = p["cond_fc_w"].astype(jnp.bfloat16)
    q["cond_fc_b"] = bias2d(p["cond_fc_b"])
    # decoder layer 1: ConvT on a 1x1 input == dense matmul [2Z, 9*dim].
    # Columns are (kh, kw, Cout)-major; dec_b1 tiling below MUST match.
    q["dec_w1"] = (p["dec_w1"].transpose(0, 2, 3, 1)
                   .reshape(2 * z_dim, 9 * dim).astype(jnp.bfloat16))
    q["dec_b1"] = bias2d(jnp.tile(p["dec_b1"], 9))       # bias per (i,j,co) column
    assert q["dec_w1"].shape == (2 * z_dim, 9 * dim)
    assert q["dec_b1"].shape == (1, 9 * dim)
    q["dec_w2"], q["dec_b2"] = convt_mat(p["dec_w2"]), bias2d(p["dec_b2"])
    q["dec_w3"], q["dec_b3"] = convt_mat(p["dec_w3"]), bias2d(p["dec_b3"])
    return q


# ----------------------------------------------------------------------------
# Forward pass (mirrors VAE_res.forward); x, z are NCHW like the torch module
# ----------------------------------------------------------------------------
def vae_res_forward(q, x, z, eps, *, dim, z_dim):
    d2 = dim // 2
    B = x.shape[0]
    xh = jnp.transpose(x, (0, 2, 3, 1))                  # NCHW -> NHWC (once)
    zh = jnp.transpose(z, (0, 2, 3, 1))

    # encoder: Conv3x3 -> ReLU -> Conv3x3 -> Flatten   (7x7 -> 5x5 -> 3x3)
    h = conv2d_nhwc(xh, q["enc_w1"], q["enc_b1"], activation="relu")
    h = conv2d_nhwc(h, q["enc_w2"], q["enc_b2"], activation="none")    # [B,3,3,d2]
    h = h.reshape(B, 9 * d2)

    # fc_mu + fc_var + reparameterize, fused in one Z-tiled Pallas kernel
    mu, logvar, hx = muvar_reparam(h, q["mu_w"], q["var_w"],
                                   q["mu_b"], q["var_b"], eps)

    # conditioner: Conv3x3(pad=1) -> ReLU -> Conv3x3 -> Flatten -> Linear
    hy = conv2d_nhwc(zh, q["cond_w1"], q["cond_b1"], padding=1, activation="relu")
    hy = conv2d_nhwc(hy, q["cond_w2"], q["cond_b2"], activation="none")  # [B,5,5,d2]
    hy = hy.reshape(B, 25 * d2)
    hy = matmul_bias_act(hy, q["cond_fc_w"], q["cond_fc_b"],
                         activation="none", out_dtype=jnp.float32)       # [B, Z]

    # decoder: UnFlatten -> ConvT(1->3) -> ReLU -> ConvT(3->5) -> ReLU
    #          -> ConvT(5->7) -> Sigmoid
    hcat = jnp.concatenate([hx, hy], axis=1)             # [B, 2Z]
    y = matmul_bias_act(hcat, q["dec_w1"], q["dec_b1"], activation="relu")  # [B,9*dim]
    y = y.reshape(B, 3, 3, dim)                          # NHWC
    y = conv2d_nhwc(y, q["dec_w2"], q["dec_b2"], padding=2, activation="relu")
    y = conv2d_nhwc(y, q["dec_w3"], q["dec_b3"], padding=2, activation="sigmoid",
                    out_dtype=jnp.float32)               # [B,7,7,dim]
    y = jnp.transpose(y, (0, 3, 1, 2))                   # back to NCHW
    return y, mu, logvar


# ----------------------------------------------------------------------------
if __name__ == "__main__":
    # Small config (module defaults are dim=512, z_dim=1024; spatial must be 7x7
    # because fc_mu expects dim//2*3*3 and the conditioner fc expects dim//2*5*5).
    dim, z_dim, B = 32, 64, 2

    key = jax.random.PRNGKey(0)
    kx, kz, keps, kp = jax.random.split(key, 4)
    params = init_params(kp, dim, z_dim)
    q = prepare_params(params, dim, z_dim)               # one-time bf16 repack

    x = jax.random.normal(kx, (B, dim, 7, 7), jnp.float32)   # NCHW
    z = jax.random.normal(kz, (B, dim, 7, 7), jnp.float32)   # NCHW
    eps = jax.random.normal(keps, (B, z_dim), jnp.float32)   # torch.randn equivalent

    fwd = jax.jit(functools.partial(vae_res_forward, dim=dim, z_dim=z_dim))
    y, mu, logvar = fwd(q, x, z, eps)
    jax.block_until_ready((y, mu, logvar))

    assert y.shape == (B, dim, 7, 7)
    assert mu.shape == (B, z_dim)
    assert logvar.shape == (B, z_dim)
    assert bool(jnp.all(jnp.isfinite(y)))
    assert bool(jnp.all((y >= 0.0) & (y <= 1.0)))  # sigmoid output
    print("KERNEL_OK")
</pallas_src>

<mosaic_0001>
module attributes {stable_mosaic.version = 11 : i64} {
  func.func @_matmul_bias_act_kernel(%arg0: i32, %arg1: memref<64x288xbf16, #tpu.memory_space<vmem>>, %arg2: memref<288x32xbf16, #tpu.memory_space<vmem>>, %arg3: memref<1x32xf32, #tpu.memory_space<vmem>>, %arg4: memref<64x32xbf16, #tpu.memory_space<vmem>>) attributes {dimension_semantics = [#tpu.dimension_semantics<parallel>], iteration_bounds = array<i64: 1>, scalar_prefetch = 0 : i64, scratch_operands = 0 : i64, tpu.core_type = #tpu.core_type<tc>, window_params = [{pipeline_mode = #tpu.pipeline_mode<synchronous>, transform_indices = @transform_0, window_bounds = array<i64: 64, 288>}, {transform_indices = @transform_1, window_bounds = array<i64: 288, 32>}, {transform_indices = @transform_2, window_bounds = array<i64: 1, 32>}, {transform_indices = @transform_3, window_bounds = array<i64: 64, 32>}]} {
    %c0 = arith.constant 0 : index
    %c0_0 = arith.constant 0 : index
    %0 = vector.load %arg1[%c0, %c0_0] : memref<64x288xbf16, #tpu.memory_space<vmem>>, vector<64x288xbf16>
    %c0_1 = arith.constant 0 : index
    %c0_2 = arith.constant 0 : index
    %1 = vector.load %arg2[%c0_1, %c0_2] : memref<288x32xbf16, #tpu.memory_space<vmem>>, vector<288x32xbf16>
    %cst = arith.constant dense<0.000000e+00> : vector<64x32xf32>
    %2 = tpu.matmul %0, %1, %cst {dimension_numbers = #tpu.dot_dimension_numbers<[1], [0], [0], [1], [0, 0, 1, 1], [], []>} : vector<64x288xbf16>, vector<288x32xbf16>, vector<64x32xf32> -> vector<64x32xf32>
    %c0_3 = arith.constant 0 : index
    %c0_4 = arith.constant 0 : index
    %3 = vector.load %arg3[%c0_3, %c0_4] : memref<1x32xf32, #tpu.memory_space<vmem>>, vector<1x32xf32>
    %4 = vector.broadcast %3 : vector<1x32xf32> to vector<64x32xf32>
    %5 = arith.addf %2, %4 : vector<64x32xf32>
    %cst_5 = arith.constant 0.000000e+00 : f32
    %6 = vector.broadcast %cst_5 : f32 to vector<64x32xf32>
    %7 = arith.maximumf %5, %6 : vector<64x32xf32>
    %8 = arith.truncf %7 : vector<64x32xf32> to vector<64x32xbf16>
    %c0_6 = arith.constant 0 : index
    %c0_7 = arith.constant 0 : index
    %9 = vector.load %arg4[%c0_6, %c0_7] : memref<64x32xbf16, #tpu.memory_space<vmem>>, vector<64x32xbf16>
    tpu.vector_store %arg4[%c0_6, %c0_7], %8 {strides = array<i32>} : memref<64x32xbf16, #tpu.memory_space<vmem>>, vector<64x32xbf16>,
    return
  }
  func.func @transform_0(%arg0: i32) -> (i32, i32) {
    %c0_i32 = arith.constant 0 : i32
    %c0_i32_0 = arith.constant 0 : i32
    %c0_i32_1 = arith.constant 0 : i32
    return %c0_i32, %c0_i32_0 : i32, i32
  }
  func.func @transform_1(%arg0: i32) -> (i32, i32) {
    %c0_i32 = arith.constant 0 : i32
    %c0_i32_0 = arith.constant 0 : i32
    return %c0_i32, %arg0 : i32, i32
  }
  func.func @transform_2(%arg0: i32) -> (i32, i32) {
    %c0_i32 = arith.constant 0 : i32
    %c0_i32_0 = arith.constant 0 : i32
    return %c0_i32, %arg0 : i32, i32
  }
  func.func @transform_3(%arg0: i32) -> (i32, i32) {
    %c0_i32 = arith.constant 0 : i32
    %c0_i32_0 = arith.constant 0 : i32
    return %c0_i32, %arg0 : i32, i32
  }
}

module attributes {stable_mosaic.version = 11 : i64} {
  func.func @_matmul_bias_act_kernel(%arg0: i32, %arg1: memref<32x288xbf16, #tpu.memory_space<vmem>>, %arg2: memref<288x16xbf16, #tpu.memory_space<vmem>>, %arg3: memref<1x16xf32, #tpu.memory_space<vmem>>, %arg4: memref<32x16xbf16, #tpu.memory_space<vmem>>) attributes {dimension_semantics = [#tpu.dimension_semantics<parallel>], iteration_bounds = array<i64: 1>, scalar_prefetch = 0 : i64, scratch_operands = 0 : i64, tpu.core_type = #tpu.core_type<tc>, window_params = [{pipeline_mode = #tpu.pipeline_mode<synchronous>, transform_indices = @transform_0, window_bounds = array<i64: 32, 288>}, {transform_indices = @transform_1, window_bounds = array<i64: 288, 16>}, {transform_indices = @transform_2, window_bounds = array<i64: 1, 16>}, {transform_indices = @transform_3, window_bounds = array<i64: 32, 16>}]} {
    %c0 = arith.constant 0 : index
    %c0_0 = arith.constant 0 : index
    %0 = vector.load %arg1[%c0, %c0_0] : memref<32x288xbf16, #tpu.memory_space<vmem>>, vector<32x288xbf16>
    %c0_1 = arith.constant 0 : index
    %c0_2 = arith.constant 0 : index
    %1 = vector.load %arg2[%c0_1, %c0_2] : memref<288x16xbf16, #tpu.memory_space<vmem>>, vector<288x16xbf16>
    %cst = arith.constant dense<0.000000e+00> : vector<32x16xf32>
    %2 = tpu.matmul %0, %1, %cst {dimension_numbers = #tpu.dot_dimension_numbers<[1], [0], [0], [1], [0, 0, 1, 1], [], []>} : vector<32x288xbf16>, vector<288x16xbf16>, vector<32x16xf32> -> vector<32x16xf32>
    %c0_3 = arith.constant 0 : index
    %c0_4 = arith.constant 0 : index
    %3 = vector.load %arg3[%c0_3, %c0_4] : memref<1x16xf32, #tpu.memory_space<vmem>>, vector<1x16xf32>
    %4 = vector.broadcast %3 : vector<1x16xf32> to vector<32x16xf32>
    %5 = arith.addf %2, %4 : vector<32x16xf32>
    %6 = arith.truncf %5 : vector<32x16xf32> to vector<32x16xbf16>
    %c0_5 = arith.constant 0 : index
    %c0_6 = arith.constant 0 : index
    %7 = vector.load %arg4[%c0_5, %c0_6] : memref<32x16xbf16, #tpu.memory_space<vmem>>, vector<32x16xbf16>
    tpu.vector_store %arg4[%c0_5, %c0_6], %6 {strides = array<i32>} : memref<32x16xbf16, #tpu.memory_space<vmem>>, vector<32x16xbf16>,
    return
  }
  func.func @transform_0(%arg0: i32) -> (i32, i32) {
    %c0_i32 = arith.constant 0 : i32
    %c0_i32_0 = arith.constant 0 : i32
    %c0_i32_1 = arith.constant 0 : i32
    return %c0_i32, %c0_i32_0 : i32, i32
  }
  func.func @transform_1(%arg0: i32) -> (i32, i32) {
    %c0_i32 = arith.constant 0 : i32
    %c0_i32_0 = arith.constant 0 : i32
    return %c0_i32, %arg0 : i32, i32
  }
  func.func @transform_2(%arg0: i32) -> (i32, i32) {
    %c0_i32 = arith.constant 0 : i32
    %c0_i32_0 = arith.constant 0 : i32
    return %c0_i32, %arg0 : i32, i32
  }
  func.func @transform_3(%arg0: i32) -> (i32, i32) {
    %c0_i32 = arith.constant 0 : i32
    %c0_i32_0 = arith.constant 0 : i32
    return %c0_i32, %arg0 : i32, i32
  }
}

module attributes {stable_mosaic.version = 11 : i64} {
  func.func @_muvar_reparam_kernel(%arg0: i32, %arg1: memref<16x144xbf16, #tpu.memory_space<vmem>>, %arg2: memref<144x64xbf16, #tpu.memory_space<vmem>>, %arg3: memref<144x64xbf16, #tpu.memory_space<vmem>>, %arg4: memref<1x64xf32, #tpu.memory_space<vmem>>, %arg5: memref<1x64xf32, #tpu.memory_space<vmem>>, %arg6: memref<16x64xf32, #tpu.memory_space<vmem>>, %arg7: memref<16x64xf32, #tpu.memory_space<vmem>>, %arg8: memref<16x64xf32, #tpu.memory_space<vmem>>, %arg9: memref<16x64xf32, #tpu.memory_space<vmem>>) attributes {dimension_semantics = [#tpu.dimension_semantics<parallel>], iteration_bounds = array<i64: 1>, scalar_prefetch = 0 : i64, scratch_operands = 0 : i64, tpu.core_type = #tpu.core_type<tc>, window_params = [{pipeline_mode = #tpu.pipeline_mode<synchronous>, transform_indices = @transform_0, window_bounds = array<i64: 16, 144>}, {transform_indices = @transform_1, window_bounds = array<i64: 144, 64>}, {transform_indices = @transform_2, window_bounds = array<i64: 144, 64>}, {transform_indices = @transform_3, window_bounds = array<i64: 1, 64>}, {transform_indices = @transform_4, window_bounds = array<i64: 1, 64>}, {transform_indices = @transform_5, window_bounds = array<i64: 16, 64>}, {transform_indices = @transform_6, window_bounds = array<i64: 16, 64>}, {transform_indices = @transform_7, window_bounds = array<i64: 16, 64>}, {transform_indices = @transform_8, window_bounds = array<i64: 16, 64>}]} {
    %c0 = arith.constant 0 : index
    %c0_0 = arith.constant 0 : index
    %0 = vector.load %arg1[%c0, %c0_0] : memref<16x144xbf16, #tpu.memory_space<vmem>>, vector<16x144xbf16>
    %c0_1 = arith.constant 0 : index
    %c0_2 = arith.constant 0 : index
    %1 = vector.load %arg2[%c0_1, %c0_2] : memref<144x64xbf16, #tpu.memory_space<vmem>>, vector<144x64xbf16>
    %cst = arith.constant dense<0.000000e+00> : vector<16x64xf32>
    %2 = tpu.matmul %0, %1, %cst {dimension_numbers = #tpu.dot_dimension_numbers<[1], [0], [0], [1], [0, 0, 1, 1], [], []>} : vector<16x144xbf16>, vector<144x64xbf16>, vector<16x64xf32> -> vector<16x64xf32>
    %c0_3 = arith.constant 0 : index
    %c0_4 = arith.constant 0 : index
    %3 = vector.load %arg4[%c0_3, %c0_4] : memref<1x64xf32, #tpu.memory_space<vmem>>, vector<1x64xf32>
    %4 = vector.broadcast %3 : vector<1x64xf32> to vector<16x64xf32>
    %5 = arith.addf %2, %4 : vector<16x64xf32>
    %c0_5 = arith.constant 0 : index
    %c0_6 = arith.constant 0 : index
    %6 = vector.load %arg3[%c0_5, %c0_6] : memref<144x64xbf16, #tpu.memory_space<vmem>>, vector<144x64xbf16>
    %cst_7 = arith.constant dense<0.000000e+00> : vector<16x64xf32>
    %7 = tpu.matmul %0, %6, %cst_7 {dimension_numbers = #tpu.dot_dimension_numbers<[1], [0], [0], [1], [0, 0, 1, 1], [], []>} : vector<16x144xbf16>, vector<144x64xbf16>, vector<16x64xf32> -> vector<16x64xf32>
    %c0_8 = arith.constant 0 : index
    %c0_9 = arith.constant 0 : index
    %8 = vector.load %arg5[%c0_8, %c0_9] : memref<1x64xf32, #tpu.memory_space<vmem>>, vector<1x64xf32>
    %9 = vector.broadcast %8 : vector<1x64xf32> to vector<16x64xf32>
    %10 = arith.addf %7, %9 : vector<16x64xf32>
    %c0_10 = arith.constant 0 : index
    %c0_11 = arith.constant 0 : index
    %11 = vector.load %arg7[%c0_10, %c0_11] : memref<16x64xf32, #tpu.memory_space<vmem>>, vector<16x64xf32>
    tpu.vector_store %arg7[%c0_10, %c0_11], %5 {strides = array<i32>} : memref<16x64xf32, #tpu.memory_space<vmem>>, vector<16x64xf32>,
    %c0_12 = arith.constant 0 : index
    %c0_13 = arith.constant 0 : index
    %12 = vector.load %arg8[%c0_12, %c0_13] : memref<16x64xf32, #tpu.memory_space<vmem>>, vector<16x64xf32>
    tpu.vector_store %arg8[%c0_12, %c0_13], %10 {strides = array<i32>} : memref<16x64xf32, #tpu.memory_space<vmem>>, vector<16x64xf32>,
    %cst_14 = arith.constant 5.000000e-01 : f32
    %13 = vector.broadcast %cst_14 : f32 to vector<16x64xf32>
    %14 = arith.mulf %13, %10 : vector<16x64xf32>
    %15 = math.exp %14 : vector<16x64xf32>
    %c0_15 = arith.constant 0 : index
    %c0_16 = arith.constant 0 : index
    %16 = vector.load %arg6[%c0_15, %c0_16] : memref<16x64xf32, #tpu.memory_space<vmem>>, vector<16x64xf32>
    %17 = arith.mulf %15, %16 : vector<16x64xf32>
    %18 = arith.addf %5, %17 : vector<16x64xf32>
    %c0_17 = arith.constant 0 : index
    %c0_18 = arith.constant 0 : index
    %19 = vector.load %arg9[%c0_17, %c0_18] : memref<16x64xf32, #tpu.memory_space<vmem>>, vector<16x64xf32>
    tpu.vector_store %arg9[%c0_17, %c0_18], %18 {strides = array<i32>} : memref<16x64xf32, #tpu.memory_space<vmem>>, vector<16x64xf32>,
    return
  }
  func.func @transform_0(%arg0: i32) -> (i32, i32) {
    %c0_i32 = arith.constant 0 : i32
    %c0_i32_0 = arith.constant 0 : i32
    %c0_i32_1 = arith.constant 0 : i32
    return %c0_i32, %c0_i32_0 : i32, i32
  }
  func.func @transform_1(%arg0: i32) -> (i32, i32) {
    %c0_i32 = arith.constant 0 : i32
    %c0_i32_0 = arith.constant 0 : i32
    return %c0_i32, %arg0 : i32, i32
  }
  func.func @transform_2(%arg0: i32) -> (i32, i32) {
    %c0_i32 = arith.constant 0 : i32
    %c0_i32_0 = arith.constant 0 : i32
    return %c0_i32, %arg0 : i32, i32
  }
  func.func @transform_3(%arg0: i32) -> (i32, i32) {
    %c0_i32 = arith.constant 0 : i32
    %c0_i32_0 = arith.constant 0 : i32
    return %c0_i32, %arg0 : i32, i32
  }
  func.func @transform_4(%arg0: i32) -> (i32, i32) {
    %c0_i32 = arith.constant 0 : i32
    %c0_i32_0 = arith.constant 0 : i32
    return %c0_i32, %arg0 : i32, i32
  }
  func.func @transform_5(%arg0: i32) -> (i32, i32) {
    %c0_i32 = arith.constant 0 : i32
    %c0_i32_0 = arith.constant 0 : i32
    return %c0_i32, %arg0 : i32, i32
  }
  func.func @transform_6(%arg0: i32) -> (i32, i32) {
    %c0_i32 = arith.constant 0 : i32
    %c0_i32_0 = arith.constant 0 : i32
    return %c0_i32, %arg0 : i32, i32
  }
  func.func @transform_7(%arg0: i32) -> (i32, i32) {
    %c0_i32 = arith.constant 0 : i32
    %c0_i32_0 = arith.constant 0 : i32
    return %c0_i32, %arg0 : i32, i32
  }
  func.func @transform_8(%arg0: i32) -> (i32, i32) {
    %c0_i32 = arith.constant 0 : i32
    %c0_i32_0 = arith.constant 0 : i32
    return %c0_i32, %arg0 : i32, i32
  }
}

module attributes {stable_mosaic.version = 11 : i64} {
  func.func @_matmul_bias_act_kernel(%arg0: i32, %arg1: memref<112x288xbf16, #tpu.memory_space<vmem>>, %arg2: memref<288x32xbf16, #tpu.memory_space<vmem>>, %arg3: memref<1x32xf32, #tpu.memory_space<vmem>>, %arg4: memref<112x32xbf16, #tpu.memory_space<vmem>>) attributes {dimension_semantics = [#tpu.dimension_semantics<parallel>], iteration_bounds = array<i64: 1>, scalar_prefetch = 0 : i64, scratch_operands = 0 : i64, tpu.core_type = #tpu.core_type<tc>, window_params = [{pipeline_mode = #tpu.pipeline_mode<synchronous>, transform_indices = @transform_0, window_bounds = array<i64: 112, 288>}, {transform_indices = @transform_1, window_bounds = array<i64: 288, 32>}, {transform_indices = @transform_2, window_bounds = array<i64: 1, 32>}, {transform_indices = @transform_3, window_bounds = array<i64: 112, 32>}]} {
    %c0 = arith.constant 0 : index
    %c0_0 = arith.constant 0 : index
    %0 = vector.load %arg1[%c0, %c0_0] : memref<112x288xbf16, #tpu.memory_space<vmem>>, vector<112x288xbf16>
    %c0_1 = arith.constant 0 : index
    %c0_2 = arith.constant 0 : index
    %1 = vector.load %arg2[%c0_1, %c0_2] : memref<288x32xbf16, #tpu.memory_space<vmem>>, vector<288x32xbf16>
    %cst = arith.constant dense<0.000000e+00> : vector<112x32xf32>
    %2 = tpu.matmul %0, %1, %cst {dimension_numbers = #tpu.dot_dimension_numbers<[1], [0], [0], [1], [0, 0, 1, 1], [], []>} : vector<112x288xbf16>, vector<288x32xbf16>, vector<112x32xf32> -> vector<112x32xf32>
    %c0_3 = arith.constant 0 : index
    %c0_4 = arith.constant 0 : index
    %3 = vector.load %arg3[%c0_3, %c0_4] : memref<1x32xf32, #tpu.memory_space<vmem>>, vector<1x32xf32>
    %4 = vector.broadcast %3 : vector<1x32xf32> to vector<112x32xf32>
    %5 = arith.addf %2, %4 : vector<112x32xf32>
    %cst_5 = arith.constant 0.000000e+00 : f32
    %6 = vector.broadcast %cst_5 : f32 to vector<112x32xf32>
    %7 = arith.maximumf %5, %6 : vector<112x32xf32>
    %8 = arith.truncf %7 : vector<112x32xf32> to vector<112x32xbf16>
    %c0_6 = arith.constant 0 : index
    %c0_7 = arith.constant 0 : index
    %9 = vector.load %arg4[%c0_6, %c0_7] : memref<112x32xbf16, #tpu.memory_space<vmem>>, vector<112x32xbf16>
    tpu.vector_store %arg4[%c0_6, %c0_7], %8 {strides = array<i32>} : memref<112x32xbf16, #tpu.memory_space<vmem>>, vector<112x32xbf16>,
    return
  }
  func.func @transform_0(%arg0: i32) -> (i32, i32) {
    %c0_i32 = arith.constant 0 : i32
    %c0_i32_0 = arith.constant 0 : i32
    %c0_i32_1 = arith.constant 0 : i32
    return %c0_i32, %c0_i32_0 : i32, i32
  }
  func.func @transform_1(%arg0: i32) -> (i32, i32) {
    %c0_i32 = arith.constant 0 : i32
    %c0_i32_0 = arith.constant 0 : i32
    return %c0_i32, %arg0 : i32, i32
  }
  func.func @transform_2(%arg0: i32) -> (i32, i32) {
    %c0_i32 = arith.constant 0 : i32
    %c0_i32_0 = arith.constant 0 : i32
    return %c0_i32, %arg0 : i32, i32
  }
  func.func @transform_3(%arg0: i32) -> (i32, i32) {
    %c0_i32 = arith.constant 0 : i32
    %c0_i32_0 = arith.constant 0 : i32
    return %c0_i32, %arg0 : i32, i32
  }
}

module attributes {stable_mosaic.version = 11 : i64} {
  func.func @_matmul_bias_act_kernel(%arg0: i32, %arg1: memref<64x288xbf16, #tpu.memory_space<vmem>>, %arg2: memref<288x16xbf16, #tpu.memory_space<vmem>>, %arg3: memref<1x16xf32, #tpu.memory_space<vmem>>, %arg4: memref<64x16xbf16, #tpu.memory_space<vmem>>) attributes {dimension_semantics = [#tpu.dimension_semantics<parallel>], iteration_bounds = array<i64: 1>, scalar_prefetch = 0 : i64, scratch_operands = 0 : i64, tpu.core_type = #tpu.core_type<tc>, window_params = [{pipeline_mode = #tpu.pipeline_mode<synchronous>, transform_indices = @transform_0, window_bounds = array<i64: 64, 288>}, {transform_indices = @transform_1, window_bounds = array<i64: 288, 16>}, {transform_indices = @transform_2, window_bounds = array<i64: 1, 16>}, {transform_indices = @transform_3, window_bounds = array<i64: 64, 16>}]} {
    %c0 = arith.constant 0 : index
    %c0_0 = arith.constant 0 : index
    %0 = vector.load %arg1[%c0, %c0_0] : memref<64x288xbf16, #tpu.memory_space<vmem>>, vector<64x288xbf16>
    %c0_1 = arith.constant 0 : index
    %c0_2 = arith.constant 0 : index
    %1 = vector.load %arg2[%c0_1, %c0_2] : memref<288x16xbf16, #tpu.memory_space<vmem>>, vector<288x16xbf16>
    %cst = arith.constant dense<0.000000e+00> : vector<64x16xf32>
    %2 = tpu.matmul %0, %1, %cst {dimension_numbers = #tpu.dot_dimension_numbers<[1], [0], [0], [1], [0, 0, 1, 1], [], []>} : vector<64x288xbf16>, vector<288x16xbf16>, vector<64x16xf32> -> vector<64x16xf32>
    %c0_3 = arith.constant 0 : index
    %c0_4 = arith.constant 0 : index
    %3 = vector.load %arg3[%c0_3, %c0_4] : memref<1x16xf32, #tpu.memory_space<vmem>>, vector<1x16xf32>
    %4 = vector.broadcast %3 : vector<1x16xf32> to vector<64x16xf32>
    %5 = arith.addf %2, %4 : vector<64x16xf32>
    %6 = arith.truncf %5 : vector<64x16xf32> to vector<64x16xbf16>
    %c0_5 = arith.constant 0 : index
    %c0_6 = arith.constant 0 : index
    %7 = vector.load %arg4[%c0_5, %c0_6] : memref<64x16xbf16, #tpu.memory_space<vmem>>, vector<64x16xbf16>
    tpu.vector_store %arg4[%c0_5, %c0_6], %6 {strides = array<i32>} : memref<64x16xbf16, #tpu.memory_space<vmem>>, vector<64x16xbf16>,
    return
  }
  func.func @transform_0(%arg0: i32) -> (i32, i32) {
    %c0_i32 = arith.constant 0 : i32
    %c0_i32_0 = arith.constant 0 : i32
    %c0_i32_1 = arith.constant 0 : i32
    return %c0_i32, %c0_i32_0 : i32, i32
  }
  func.func @transform_1(%arg0: i32) -> (i32, i32) {
    %c0_i32 = arith.constant 0 : i32
    %c0_i32_0 = arith.constant 0 : i32
    return %c0_i32, %arg0 : i32, i32
  }
  func.func @transform_2(%arg0: i32) -> (i32, i32) {
    %c0_i32 = arith.constant 0 : i32
    %c0_i32_0 = arith.constant 0 : i32
    return %c0_i32, %arg0 : i32, i32
  }
  func.func @transform_3(%arg0: i32) -> (i32, i32) {
    %c0_i32 = arith.constant 0 : i32
    %c0_i32_0 = arith.constant 0 : i32
    return %c0_i32, %arg0 : i32, i32
  }
}

module attributes {stable_mosaic.version = 11 : i64} {
  func.func @_matmul_bias_act_kernel(%arg0: i32, %arg1: memref<16x400xbf16, #tpu.memory_space<vmem>>, %arg2: memref<400x64xbf16, #tpu.memory_space<vmem>>, %arg3: memref<1x64xf32, #tpu.memory_space<vmem>>, %arg4: memref<16x64xf32, #tpu.memory_space<vmem>>) attributes {dimension_semantics = [#tpu.dimension_semantics<parallel>], iteration_bounds = array<i64: 1>, scalar_prefetch = 0 : i64, scratch_operands = 0 : i64, tpu.core_type = #tpu.core_type<tc>, window_params = [{pipeline_mode = #tpu.pipeline_mode<synchronous>, transform_indices = @transform_0, window_bounds = array<i64: 16, 400>}, {transform_indices = @transform_1, window_bounds = array<i64: 400, 64>}, {transform_indices = @transform_2, window_bounds = array<i64: 1, 64>}, {transform_indices = @transform_3, window_bounds = array<i64: 16, 64>}]} {
    %c0 = arith.constant 0 : index
    %c0_0 = arith.constant 0 : index
    %0 = vector.load %arg1[%c0, %c0_0] : memref<16x400xbf16, #tpu.memory_space<vmem>>, vector<16x400xbf16>
    %c0_1 = arith.constant 0 : index
    %c0_2 = arith.constant 0 : index
    %1 = vector.load %arg2[%c0_1, %c0_2] : memref<400x64xbf16, #tpu.memory_space<vmem>>, vector<400x64xbf16>
    %cst = arith.constant dense<0.000000e+00> : vector<16x64xf32>
    %2 = tpu.matmul %0, %1, %cst {dimension_numbers = #tpu.dot_dimension_numbers<[1], [0], [0], [1], [0, 0, 1, 1], [], []>} : vector<16x400xbf16>, vector<400x64xbf16>, vector<16x64xf32> -> vector<16x64xf32>
    %c0_3 = arith.constant 0 : index
    %c0_4 = arith.constant 0 : index
    %3 = vector.load %arg3[%c0_3, %c0_4] : memref<1x64xf32, #tpu.memory_space<vmem>>, vector<1x64xf32>
    %4 = vector.broadcast %3 : vector<1x64xf32> to vector<16x64xf32>
    %5 = arith.addf %2, %4 : vector<16x64xf32>
    %c0_5 = arith.constant 0 : index
    %c0_6 = arith.constant 0 : index
    %6 = vector.load %arg4[%c0_5, %c0_6] : memref<16x64xf32, #tpu.memory_space<vmem>>, vector<16x64xf32>
    tpu.vector_store %arg4[%c0_5, %c0_6], %5 {strides = array<i32>} : memref<16x64xf32, #tpu.memory_space<vmem>>, vector<16x64xf32>,
    return
  }
  func.func @transform_0(%arg0: i32) -> (i32, i32) {
    %c0_i32 = arith.constant 0 : i32
    %c0_i32_0 = arith.constant 0 : i32
    %c0_i32_1 = arith.constant 0 : i32
    return %c0_i32, %c0_i32_0 : i32, i32
  }
  func.func @transform_1(%arg0: i32) -> (i32, i32) {
    %c0_i32 = arith.constant 0 : i32
    %c0_i32_0 = arith.constant 0 : i32
    return %c0_i32, %arg0 : i32, i32
  }
  func.func @transform_2(%arg0: i32) -> (i32, i32) {
    %c0_i32 = arith.constant 0 : i32
    %c0_i32_0 = arith.constant 0 : i32
    return %c0_i32, %arg0 : i32, i32
  }
  func.func @transform_3(%arg0: i32) -> (i32, i32) {
    %c0_i32 = arith.constant 0 : i32
    %c0_i32_0 = arith.constant 0 : i32
    return %c0_i32, %arg0 : i32, i32
  }
}

module attributes {stable_mosaic.version = 11 : i64} {
  func.func @_matmul_bias_act_kernel(%arg0: i32, %arg1: memref<16x128xbf16, #tpu.memory_space<vmem>>, %arg2: memref<128x288xbf16, #tpu.memory_space<vmem>>, %arg3: memref<1x288xf32, #tpu.memory_space<vmem>>, %arg4: memref<16x288xbf16, #tpu.memory_space<vmem>>) attributes {dimension_semantics = [#tpu.dimension_semantics<parallel>], iteration_bounds = array<i64: 1>, scalar_prefetch = 0 : i64, scratch_operands = 0 : i64, tpu.core_type = #tpu.core_type<tc>, window_params = [{pipeline_mode = #tpu.pipeline_mode<synchronous>, transform_indices = @transform_0, window_bounds = array<i64: 16, 128>}, {transform_indices = @transform_1, window_bounds = array<i64: 128, 288>}, {transform_indices = @transform_2, window_bounds = array<i64: 1, 288>}, {transform_indices = @transform_3, window_bounds = array<i64: 16, 288>}]} {
    %c0 = arith.constant 0 : index
    %c0_0 = arith.constant 0 : index
    %0 = vector.load %arg1[%c0, %c0_0] : memref<16x128xbf16, #tpu.memory_space<vmem>>, vector<16x128xbf16>
    %c0_1 = arith.constant 0 : index
    %c0_2 = arith.constant 0 : index
    %1 = vector.load %arg2[%c0_1, %c0_2] : memref<128x288xbf16, #tpu.memory_space<vmem>>, vector<128x288xbf16>
    %cst = arith.constant dense<0.000000e+00> : vector<16x288xf32>
    %2 = tpu.matmul %0, %1, %cst {dimension_numbers = #tpu.dot_dimension_numbers<[1], [0], [0], [1], [0, 0, 1, 1], [], []>} : vector<16x128xbf16>, vector<128x288xbf16>, vector<16x288xf32> -> vector<16x288xf32>
    %c0_3 = arith.constant 0 : index
    %c0_4 = arith.constant 0 : index
    %3 = vector.load %arg3[%c0_3, %c0_4] : memref<1x288xf32, #tpu.memory_space<vmem>>, vector<1x288xf32>
    %4 = vector.broadcast %3 : vector<1x288xf32> to vector<16x288xf32>
    %5 = arith.addf %2, %4 : vector<16x288xf32>
    %cst_5 = arith.constant 0.000000e+00 : f32
    %6 = vector.broadcast %cst_5 : f32 to vector<16x288xf32>
    %7 = arith.maximumf %5, %6 : vector<16x288xf32>
    %8 = arith.truncf %7 : vector<16x288xf32> to vector<16x288xbf16>
    %c0_6 = arith.constant 0 : index
    %c0_7 = arith.constant 0 : index
    %9 = vector.load %arg4[%c0_6, %c0_7] : memref<16x288xbf16, #tpu.memory_space<vmem>>, vector<16x288xbf16>
    tpu.vector_store %arg4[%c0_6, %c0_7], %8 {strides = array<i32>} : memref<16x288xbf16, #tpu.memory_space<vmem>>, vector<16x288xbf16>,
    return
  }
  func.func @transform_0(%arg0: i32) -> (i32, i32) {
    %c0_i32 = arith.constant 0 : i32
    %c0_i32_0 = arith.constant 0 : i32
    %c0_i32_1 = arith.constant 0 : i32
    return %c0_i32, %c0_i32_0 : i32, i32
  }
  func.func @transform_1(%arg0: i32) -> (i32, i32) {
    %c0_i32 = arith.constant 0 : i32
    %c0_i32_0 = arith.constant 0 : i32
    return %c0_i32, %arg0 : i32, i32
  }
  func.func @transform_2(%arg0: i32) -> (i32, i32) {
    %c0_i32 = arith.constant 0 : i32
    %c0_i32_0 = arith.constant 0 : i32
    return %c0_i32, %arg0 : i32, i32
  }
  func.func @transform_3(%arg0: i32) -> (i32, i32) {
    %c0_i32 = arith.constant 0 : i32
    %c0_i32_0 = arith.constant 0 : i32
    return %c0_i32, %arg0 : i32, i32
  }
}

module attributes {stable_mosaic.version = 11 : i64} {
  func.func @_matmul_bias_act_kernel(%arg0: i32, %arg1: memref<112x288xbf16, #tpu.memory_space<vmem>>, %arg2: memref<288x32xbf16, #tpu.memory_space<vmem>>, %arg3: memref<1x32xf32, #tpu.memory_space<vmem>>, %arg4: memref<112x32xf32, #tpu.memory_space<vmem>>) attributes {dimension_semantics = [#tpu.dimension_semantics<parallel>], iteration_bounds = array<i64: 1>, scalar_prefetch = 0 : i64, scratch_operands = 0 : i64, tpu.core_type = #tpu.core_type<tc>, window_params = [{pipeline_mode = #tpu.pipeline_mode<synchronous>, transform_indices = @transform_0, window_bounds = array<i64: 112, 288>}, {transform_indices = @transform_1, window_bounds = array<i64: 288, 32>}, {transform_indices = @transform_2, window_bounds = array<i64: 1, 32>}, {transform_indices = @transform_3, window_bounds = array<i64: 112, 32>}]} {
    %c0 = arith.constant 0 : index
    %c0_0 = arith.constant 0 : index
    %0 = vector.load %arg1[%c0, %c0_0] : memref<112x288xbf16, #tpu.memory_space<vmem>>, vector<112x288xbf16>
    %c0_1 = arith.constant 0 : index
    %c0_2 = arith.constant 0 : index
    %1 = vector.load %arg2[%c0_1, %c0_2] : memref<288x32xbf16, #tpu.memory_space<vmem>>, vector<288x32xbf16>
    %cst = arith.constant dense<0.000000e+00> : vector<112x32xf32>
    %2 = tpu.matmul %0, %1, %cst {dimension_numbers = #tpu.dot_dimension_numbers<[1], [0], [0], [1], [0, 0, 1, 1], [], []>} : vector<112x288xbf16>, vector<288x32xbf16>, vector<112x32xf32> -> vector<112x32xf32>
    %c0_3 = arith.constant 0 : index
    %c0_4 = arith.constant 0 : index
    %3 = vector.load %arg3[%c0_3, %c0_4] : memref<1x32xf32, #tpu.memory_space<vmem>>, vector<1x32xf32>
    %4 = vector.broadcast %3 : vector<1x32xf32> to vector<112x32xf32>
    %5 = arith.addf %2, %4 : vector<112x32xf32>
    %cst_5 = arith.constant 5.000000e-01 : f32
    %6 = vector.broadcast %cst_5 : f32 to vector<112x32xf32>
    %7 = arith.mulf %6, %5 : vector<112x32xf32>
    %8 = math.tanh %7 : vector<112x32xf32>
    %cst_6 = arith.constant 1.000000e+00 : f32
    %9 = vector.broadcast %cst_6 : f32 to vector<112x32xf32>
    %10 = arith.addf %8, %9 : vector<112x32xf32>
    %cst_7 = arith.constant 5.000000e-01 : f32
    %11 = vector.broadcast %cst_7 : f32 to vector<112x32xf32>
    %12 = arith.mulf %11, %10 : vector<112x32xf32>
    %c0_8 = arith.constant 0 : index
    %c0_9 = arith.constant 0 : index
    %13 = vector.load %arg4[%c0_8, %c0_9] : memref<112x32xf32, #tpu.memory_space<vmem>>, vector<112x32xf32>
    tpu.vector_store %arg4[%c0_8, %c0_9], %12 {strides = array<i32>} : memref<112x32xf32, #tpu.memory_space<vmem>>, vector<112x32xf32>,
    return
  }
  func.func @transform_0(%arg0: i32) -> (i32, i32) {
    %c0_i32 = arith.constant 0 : i32
    %c0_i32_0 = arith.constant 0 : i32
    %c0_i32_1 = arith.constant 0 : i32
    return %c0_i32, %c0_i32_0 : i32, i32
  }
  func.func @transform_1(%arg0: i32) -> (i32, i32) {
    %c0_i32 = arith.constant 0 : i32
    %c0_i32_0 = arith.constant 0 : i32
    return %c0_i32, %arg0 : i32, i32
  }
  func.func @transform_2(%arg0: i32) -> (i32, i32) {
    %c0_i32 = arith.constant 0 : i32
    %c0_i32_0 = arith.constant 0 : i32
    return %c0_i32, %arg0 : i32, i32
  }
  func.func @transform_3(%arg0: i32) -> (i32, i32) {
    %c0_i32 = arith.constant 0 : i32
    %c0_i32_0 = arith.constant 0 : i32
    return %c0_i32, %arg0 : i32, i32
  }
}

</mosaic_0001>

<llo_original>
// kernel: vae_res_forward.9
$region0: #{vae_res_forward.9}
  #allocation0 [shape = 'u32[]', space=smem, size = 0x4, offset = 0x4, fixed_abs, tag = 'smem constant byte address 0x4 - core index']
  #allocation1 [shape = 'u32[144,128]{1,0:T(1,128)}', space=vmem, size = 0x12000, scoped, tag = 'internal scratch']
  %s0 = inlined_call_operand.vmem [shape: bf16[64,288], index: 0, kind: input, shape index: {}]
  %s1 = inlined_call_operand.vmem [shape: bf16[288,32], index: 1, kind: input, shape index: {}]
  %s2 = inlined_call_operand.vmem [shape: f32[1,32], index: 2, kind: input, shape index: {}]
  %s3 = inlined_call_operand.vmem [shape: bf16[64,32], index: 3, kind: output, shape index: {}]
  %s4 = sld [smem:[#allocation0]]
  $region22: #{vae_res_forward.9} parent=0
    _
  %s6 = ssub.s32 1, %s4
  %s7 = scalar_select 0, %s6, %s4
  // Predicated region
  $region2: #{vae_res_forward.9} parent=0 // pred_check
    _
  $region3: #{vae_res_forward.9} parent=0 // pred_check_branch
    %9 = sbr.rel (0) target = $region5
  $region4: #{vae_res_forward.9} parent=0 // pred_region
    _
  $region5: #{vae_res_forward.9} parent=0 // pred_fallthru
    _
  // Predicated region
  $region6: #{vae_res_forward.9} parent=0 // pred_check
    _
  $region7: #{vae_res_forward.9} parent=0 // pred_check_branch
    %11 = sbr.rel (0) target = $region9
  $region8: #{vae_res_forward.9} parent=0 // pred_region
    _
  $region9: #{vae_res_forward.9} parent=0 // pred_fallthru
    _
  // Predicated region
  $region10: #{vae_res_forward.9} parent=0 // pred_check
    _
  $region11: #{vae_res_forward.9} parent=0 // pred_check_branch
    %13 = sbr.rel (0) target = $region13
  $region12: #{vae_res_forward.9} parent=0 // pred_region
    _
  $region13: #{vae_res_forward.9} parent=0 // pred_fallthru
    _
  %v15 = vld [vmem:[%s0] sm:$0xff]
  %v16 = vld [vmem:[%s0 + $0x8] sm:$0xf]
  %v17 = vld [vmem:[%s0 + $0xc] sm:$0xff]
  %v18 = vld [vmem:[%s0 + $0x14] sm:$0xf]
  %v19 = vld [vmem:[%s0 + $0x18] sm:$0xff]
  %v20 = vld [vmem:[%s0 + $0x20] sm:$0xf]
  %v21 = vld [vmem:[%s0 + $0x24] sm:$0xff]
  %v22 = vld [vmem:[%s0 + $0x2c] sm:$0xf]
  %v23 = vld [vmem:[%s0 + $0x30] sm:$0xff]
  %v24 = vld [vmem:[%s0 + $0x38] sm:$0xf]
  %v25 = vld [vmem:[%s0 + $0x3c] sm:$0xff]
  %v26 = vld [vmem:[%s0 + $0x44] sm:$0xf]
  %v27 = vld [vmem:[%s0 + $0x48] sm:$0xff]
  %v28 = vld [vmem:[%s0 + $0x50] sm:$0xf]
  %v29 = vld [vmem:[%s0 + $0x54] sm:$0xff]
  %v30 = vld [vmem:[%s0 + $0x5c] sm:$0xf]
  %v31 = vld [vmem:[%s1] sm:$0xf]
  %v32 = vld [vmem:[%s1 + $0x4] sm:$0xf]
  %v33 = vld [vmem:[%s1 + $0x8] sm:$0xf]
  %v34 = vld [vmem:[%s1 + $0xc] sm:$0xf]
  %v35 = vld [vmem:[%s1 + $0x10] sm:$0xf]
  %v36 = vld [vmem:[%s1 + $0x14] sm:$0xf]
  %v37 = vld [vmem:[%s1 + $0x18] sm:$0xf]
  %v38 = vld [vmem:[%s1 + $0x1c] sm:$0xf]
  %v39 = vld [vmem:[%s1 + $0x20] sm:$0xf]
  %v40 = vld [vmem:[%s1 + $0x24] sm:$0xf]
  %v41 = vld [vmem:[%s1 + $0x28] sm:$0xf]
  %v42 = vld [vmem:[%s1 + $0x2c] sm:$0xf]
  %v43 = vld [vmem:[%s1 + $0x30] sm:$0xf]
  %v44 = vld [vmem:[%s1 + $0x34] sm:$0xf]
  %v45 = vld [vmem:[%s1 + $0x38] sm:$0xf]
  %v46 = vld [vmem:[%s1 + $0x3c] sm:$0xf]
  %v47 = vld [vmem:[%s1 + $0x40] sm:$0xf]
  %v48 = vld [vmem:[%s1 + $0x44] sm:$0xf]
  %v49 = vld [vmem:[%s1 + $0x48] sm:$0xf]
  %v50 = vld [vmem:[%s1 + $0x4c] sm:$0xf]
  %v51 = vld [vmem:[%s1 + $0x50] sm:$0xf]
  %v52 = vld [vmem:[%s1 + $0x54] sm:$0xf]
  %v53 = vld [vmem:[%s1 + $0x58] sm:$0xf]
  %v54 = vld [vmem:[%s1 + $0x5c] sm:$0xf]
  %v55 = vld [vmem:[%s1 + $0x60] sm:$0xf]
  %v56 = vld [vmem:[%s1 + $0x64] sm:$0xf]
  %v57 = vld [vmem:[%s1 + $0x68] sm:$0xf]
  %v58 = vld [vmem:[%s1 + $0x6c] sm:$0xf]
  %v59 = vld [vmem:[%s1 + $0x70] sm:$0xf]
  %v60 = vld [vmem:[%s1 + $0x74] sm:$0xf]
  %v61 = vld [vmem:[%s1 + $0x78] sm:$0xf]
  %v62 = vld [vmem:[%s1 + $0x7c] sm:$0xf]
  %v63 = vld [vmem:[%s1 + $0x80] sm:$0xf]
  %v64 = vld [vmem:[%s1 + $0x84] sm:$0xf]
  %v65 = vld [vmem:[%s1 + $0x88] sm:$0xf]
  %v66 = vld [vmem:[%s1 + $0x8c] sm:$0xf]
  %v67 = vld [vmem:[%s2] sm:$0x1]
  %v69 = vlaneseq
  %v70 = vshrl.u32 %v69, 7
  %v71 = vsub.s32 0, %v70
  %v72 = vrot.slane %v67, %v71
  %v90 = vunpack.c.l.b16 %v15
  %v91 = vunpack.c.h.b16 %v15
  %v92 = vunpack.c.l.b16 %v16
  %v93 = vunpack.c.l.b16 %v17
  %v94 = vunpack.c.h.b16 %v17
  %v95 = vunpack.c.l.b16 %v18
  %v96 = vunpack.c.l.b16 %v19
  %v97 = vunpack.c.h.b16 %v19
  %v98 = vunpack.c.l.b16 %v20
  %v99 = vunpack.c.l.b16 %v21
  %v100 = vunpack.c.h.b16 %v21
  %v101 = vunpack.c.l.b16 %v22
  %v102 = vunpack.c.l.b16 %v23
  %v103 = vunpack.c.h.b16 %v23
  %v104 = vunpack.c.l.b16 %v24
  %v105 = vunpack.c.l.b16 %v25
  %v106 = vunpack.c.h.b16 %v25
  %v107 = vunpack.c.l.b16 %v26
  %v108 = vunpack.c.l.b16 %v27
  %v109 = vunpack.c.h.b16 %v27
  %v110 = vunpack.c.l.b16 %v28
  %v111 = vunpack.c.l.b16 %v29
  %v112 = vunpack.c.h.b16 %v29
  %v113 = vunpack.c.l.b16 %v30
  %v114 = vpack.c.b16 %v93, %v90
  %v115 = vpack.c.b16 %v94, %v91
  %v116 = vpack.c.b16 %v95, %v92
  %v117 = vpack.c.b16 %v99, %v96
  %v118 = vpack.c.b16 %v100, %v97
  %v119 = vpack.c.b16 %v101, %v98
  %v120 = vpack.c.b16 %v105, %v102
  %v121 = vpack.c.b16 %v106, %v103
  %v122 = vpack.c.b16 %v107, %v104
  %v123 = vpack.c.b16 %v111, %v108
  %v124 = vpack.c.b16 %v112, %v109
  %v125 = vpack.c.b16 %v113, %v110
  %v170 = vunpack.c.l.b16 %v31
  %v171 = vunpack.c.l.b16 %v32
  %v172 = vunpack.c.l.b16 %v33
  %v173 = vunpack.c.l.b16 %v34
  %v174 = vunpack.c.l.b16 %v35
  %v175 = vunpack.c.l.b16 %v36
  %v176 = vunpack.c.l.b16 %v37
  %v177 = vunpack.c.l.b16 %v38
  %v178 = vunpack.c.l.b16 %v39
  %v179 = vunpack.c.l.b16 %v40
  %v180 = vunpack.c.l.b16 %v41
  %v181 = vunpack.c.l.b16 %v42
  %v182 = vunpack.c.l.b16 %v43
  %v183 = vunpack.c.l.b16 %v44
  %v184 = vunpack.c.l.b16 %v45
  %v185 = vunpack.c.l.b16 %v46
  %v186 = vunpack.c.l.b16 %v47
  %v187 = vunpack.c.l.b16 %v48
  %v188 = vunpack.c.l.b16 %v49
  %v189 = vunpack.c.l.b16 %v50
  %v190 = vunpack.c.l.b16 %v51
  %v191 = vunpack.c.l.b16 %v52
  %v192 = vunpack.c.l.b16 %v53
  %v193 = vunpack.c.l.b16 %v54
  %v194 = vunpack.c.l.b16 %v55
  %v195 = vunpack.c.l.b16 %v56
  %v196 = vunpack.c.l.b16 %v57
  %v197 = vunpack.c.l.b16 %v58
  %v198 = vunpack.c.l.b16 %v59
  %v199 = vunpack.c.l.b16 %v60
  %v200 = vunpack.c.l.b16 %v61
  %v201 = vunpack.c.l.b16 %v62
  %v202 = vunpack.c.l.b16 %v63
  %v203 = vunpack.c.l.b16 %v64
  %v204 = vunpack.c.l.b16 %v65
  %v205 = vunpack.c.l.b16 %v66
  %v206 = vpack.c.b16 %v171, %v170
  %v207 = vpack.c.b16 %v173, %v172
  %v208 = vpack.c.b16 %v175, %v174
  %v209 = vpack.c.b16 %v177, %v176
  %v210 = vpack.c.b16 %v179, %v178
  %v211 = vpack.c.b16 %v181, %v180
  %v212 = vpack.c.b16 %v183, %v182
  %v213 = vpack.c.b16 %v185, %v184
  %v214 = vpack.c.b16 %v187, %v186
  %v215 = vpack.c.b16 %v189, %v188
  %v216 = vpack.c.b16 %v191, %v190
  %v217 = vpack.c.b16 %v193, %v192
  %v218 = vpack.c.b16 %v195, %v194
  %v219 = vpack.c.b16 %v197, %v196
  %v220 = vpack.c.b16 %v199, %v198
  %v221 = vpack.c.b16 %v201, %v200
  %v222 = vpack.c.b16 %v203, %v202
  %v223 = vpack.c.b16 %v205, %v204
  %vm242 = vcmask 261120
  %v244 = vsel %vm242, %v116, 0
  %v247 = vsel %vm242, %v119, 0
  %v250 = vsel %vm242, %v122, 0
  %v253 = vsel %vm242, %v125, 0
  %255 = vmatprep.subr.bf16.mxu0 0
  %256 = vmatpush1.bf16.msra.mxu0 %v206
  %257 = vmatprep.subr.bf16.mxu0 0
  %258 = vmatpush1.bf16.msra.mxu0 %v207
  %259 = vmatprep.subr.bf16.mxu0 0
  %260 = vmatpush1.bf16.msra.mxu0 %v208
  %261 = vmatprep.subr.bf16.mxu0 0
  %262 = vmatpush1.bf16.msra.mxu0 %v209
  %263 = vmatprep.subr.bf16.mxu0 0
  %264 = vmatpush1.bf16.msra.mxu0 %v210
  %265 = vmatprep.subr.bf16.mxu0 0
  %266 = vmatpush1.bf16.msra.mxu0 %v211
  %267 = vmatprep.subr.bf16.mxu0 0
  %268 = vmatpush1.bf16.msra.mxu0 %v212
  %269 = vmatprep.subr.bf16.mxu0 0
  %270 = vmatpush1.bf16.msra.mxu0 %v213
  %271 = vmatprep.subr.bf16.mxu0 0
  %272 = vmatpush1.bf16.msra.mxu0 %v214
  %273 = vmatprep.subr.bf16.mxu0 0
  %274 = vmatpush1.bf16.msra.mxu0 %v215
  %275 = vmatprep.subr.bf16.mxu0 0
  %276 = vmatpush1.bf16.msra.mxu0 %v216
  %277 = vmatprep.subr.bf16.mxu0 0
  %278 = vmatpush1.bf16.msra.mxu0 %v217
  %279 = vmatprep.subr.bf16.mxu0 0
  %280 = vmatpush1.bf16.msra.mxu0 %v218
  %281 = vmatprep.subr.bf16.mxu0 0
  %282 = vmatpush1.bf16.msra.mxu0 %v219
  %283 = vmatprep.subr.bf16.mxu0 0
  %284 = vmatpush1.bf16.msra.mxu0 %v220
  %285 = vmatprep.subr.bf16.mxu0 0
  %286 = vmatpush1.bf16.msra.mxu0 %v221
  %287 = vmatprep.mubr.bf16.mxu0 %v115
  %288 = vmatmul.mubr.bf16.gmra.mrb[0].mxu0 %v114
  %v289 = vpop.f32.mrb[0].mxu0
  %v290 = vadd.f32 %v72, %v289
  %v291 = vpop.f32.mrb[0].mxu0
  %v292 = vpop.f32.mrb[0].mxu0
  %v293 = vadd.f32 %v72, %v292
  %v294 = vpop.f32.mrb[0].mxu0
  %295 = vmatprep.mubr.bf16.mxu0 %v118
  %296 = vmatmul.mubr.bf16.gmra.mrb[0].mxu0 %v117
  %v297 = vpop.f32.mrb[0].mxu0
  %v298 = vadd.f32 %v72, %v297
  %v299 = vpop.f32.mrb[0].mxu0
  %v300 = vpop.f32.mrb[0].mxu0
  %v301 = vadd.f32 %v72, %v300
  %v302 = vpop.f32.mrb[0].mxu0
  %303 = vmatprep.mubr.bf16.mxu0 %v121
  %304 = vmatmul.mubr.bf16.gmra.mrb[0].mxu0 %v120
  %v305 = vpop.f32.mrb[0].mxu0
  %v306 = vadd.f32 %v72, %v305
  %v307 = vpop.f32.mrb[0].mxu0
  %v308 = vpop.f32.mrb[0].mxu0
  %v309 = vadd.f32 %v72, %v308
  %v310 = vpop.f32.mrb[0].mxu0
  %311 = vmatprep.mubr.bf16.mxu0 %v124
  %312 = vmatmul.mubr.bf16.gmra.mrb[0].mxu0 %v123
  %v313 = vpop.f32.mrb[0].mxu0
  %v314 = vadd.f32 %v72, %v313
  %v315 = vpop.f32.mrb[0].mxu0
  %v316 = vpop.f32.mrb[0].mxu0
  %v317 = vadd.f32 %v72, %v316
  %v318 = vpop.f32.mrb[0].mxu0
  %319 = vdwg.mxu0
  %320 = vmatprep.subr.bf16.mxu0 0
  %321 = vmatpush1.bf16.msra.mxu0 %v222
  %322 = vmatprep.subr.bf16.mxu0 0
  %323 = vmatpush1.bf16.msra.mxu0 %v223
  %324 = vmatprep.subr.bf16.mxu0 0
  %325 = vmatpush1.bf16.msra.mxu0 0
  %326 = vmatprep.subr.bf16.mxu0 0
  %327 = vmatpush1.bf16.msra.mxu0 0
  %328 = vmatprep.subr.bf16.mxu0 0
  %329 = vmatpush1.bf16.msra.mxu0 0
  %330 = vmatprep.subr.bf16.mxu0 0
  %331 = vmatpush1.bf16.msra.mxu0 0
  %332 = vmatprep.subr.bf16.mxu0 0
  %333 = vmatpush1.bf16.msra.mxu0 0
  %334 = vmatprep.subr.bf16.mxu0 0
  %335 = vmatpush1.bf16.msra.mxu0 0
  %336 = vmatprep.subr.bf16.mxu0 0
  %337 = vmatpush1.bf16.msra.mxu0 0
  %338 = vmatprep.subr.bf16.mxu0 0
  %339 = vmatpush1.bf16.msra.mxu0 0
  %340 = vmatprep.subr.bf16.mxu0 0
  %341 = vmatpush1.bf16.msra.mxu0 0
  %342 = vmatprep.subr.bf16.mxu0 0
  %343 = vmatpush1.bf16.msra.mxu0 0
  %344 = vmatprep.subr.bf16.mxu0 0
  %345 = vmatpush1.bf16.msra.mxu0 0
  %346 = vmatprep.subr.bf16.mxu0 0
  %347 = vmatpush1.bf16.msra.mxu0 0
  %348 = vmatprep.subr.bf16.mxu0 0
  %349 = vmatpush1.bf16.msra.mxu0 0
  %350 = vmatprep.subr.bf16.mxu0 0
  %351 = vmatpush1.bf16.msra.mxu0 0
  %352 = vmatprep.mubr.bf16.mxu0 0
  %353 = vmatmul.mubr.bf16.gmra.mrb[0].mxu0 %v244
  %v354 = vpop.f32.mrb[0].mxu0
  %v355 = vadd.f32 %v290, %v354
  %v356 = vpop.f32.mrb[0].mxu0
  %v357 = vpop.f32.mrb[0].mxu0
  %v358 = vadd.f32 %v293, %v357
  %v359 = vpop.f32.mrb[0].mxu0
  %360 = vmatprep.mubr.bf16.mxu0 0
  %361 = vmatmul.mubr.bf16.gmra.mrb[0].mxu0 %v247
  %v362 = vpop.f32.mrb[0].mxu0
  %v363 = vadd.f32 %v298, %v362
  %v364 = vpop.f32.mrb[0].mxu0
  %v365 = vpop.f32.mrb[0].mxu0
  %v366 = vadd.f32 %v301, %v365
  %v367 = vpop.f32.mrb[0].mxu0
  %368 = vmatprep.mubr.bf16.mxu0 0
  %369 = vmatmul.mubr.bf16.gmra.mrb[0].mxu0 %v250
  %v370 = vpop.f32.mrb[0].mxu0
  %v371 = vadd.f32 %v306, %v370
  %v372 = vpop.f32.mrb[0].mxu0
  %v373 = vpop.f32.mrb[0].mxu0
  %v374 = vadd.f32 %v309, %v373
  %v375 = vpop.f32.mrb[0].mxu0
  %376 = vmatprep.mubr.bf16.mxu0 0
  %377 = vmatmul.mubr.bf16.gmra.mrb[0].mxu0 %v253
  %v378 = vpop.f32.mrb[0].mxu0
  %v379 = vadd.f32 %v314, %v378
  %v380 = vpop.f32.mrb[0].mxu0
  %v381 = vpop.f32.mrb[0].mxu0
  %v382 = vadd.f32 %v317, %v381
  %v383 = vpop.f32.mrb[0].mxu0
  %384 = vdwg.mxu0
  %v385 = vmax.f32 %v355, 0.0
  %v386 = vmax.f32 %v358, 0.0
  %v387 = vmax.f32 %v363, 0.0
  %v388 = vmax.f32 %v366, 0.0
  %v389 = vmax.f32 %v371, 0.0
  %v390 = vmax.f32 %v374, 0.0
  %v391 = vmax.f32 %v379, 0.0
  %v392 = vmax.f32 %v382, 0.0
  %v393 = vpack.c.bf16 %v386, %v385
  %v394 = vpack.c.bf16 %v388, %v387
  %v395 = vpack.c.bf16 %v390, %v389
  %v396 = vpack.c.bf16 %v392, %v391
  %v401 = vunpack.c.l.b16 %v393
  %v402 = vunpack.c.h.b16 %v393
  %v403 = vunpack.c.l.b16 %v394
  %v404 = vunpack.c.h.b16 %v394
  %v405 = vunpack.c.l.b16 %v395
  %v406 = vunpack.c.h.b16 %v395
  %v407 = vunpack.c.l.b16 %v396
  %v408 = vunpack.c.h.b16 %v396
  %v409 = vpack.c.b16 %v401, %v401
  %v410 = vpack.c.b16 %v402, %v402
  %v411 = vpack.c.b16 %v403, %v403
  %v412 = vpack.c.b16 %v404, %v404
  %v413 = vpack.c.b16 %v405, %v405
  %v414 = vpack.c.b16 %v406, %v406
  %v415 = vpack.c.b16 %v407, %v407
  %v416 = vpack.c.b16 %v408, %v408
  %vm425 = vcmask 257024
  %426 = vst.msk [vmem:[%s3] sm:$0xf] %vm425, %v409
  %427 = vst.msk [vmem:[%s3 + $0x4] sm:$0xf] %vm425, %v410
  %428 = vst.msk [vmem:[%s3 + $0x8] sm:$0xf] %vm425, %v411
  %429 = vst.msk [vmem:[%s3 + $0xc] sm:$0xf] %vm425, %v412
  %430 = vst.msk [vmem:[%s3 + $0x10] sm:$0xf] %vm425, %v413
  %431 = vst.msk [vmem:[%s3 + $0x14] sm:$0xf] %vm425, %v414
  %432 = vst.msk [vmem:[%s3 + $0x18] sm:$0xf] %vm425, %v415
  %433 = vst.msk [vmem:[%s3 + $0x1c] sm:$0xf] %vm425, %v416
  // Predicated region
  $region14: #{vae_res_forward.9} parent=0 // pred_check
    _
  $region15: #{vae_res_forward.9} parent=0 // pred_check_branch
    %435 = sbr.rel (0) target = $region17
  $region16: #{vae_res_forward.9} parent=0 // pred_region
    _
  $region17: #{vae_res_forward.9} parent=0 // pred_fallthru
    _
  // Predicated region
  $region18: #{vae_res_forward.9} parent=0 // pred_check
    _
  $region19: #{vae_res_forward.9} parent=0 // pred_check_branch
    %437 = sbr.rel (0) target = $region21
  $region20: #{vae_res_forward.9} parent=0 // pred_region
    _
  $region21: #{vae_res_forward.9} parent=0 // pred_fallthru
    _

// kernel: vae_res_forward.10
$region0: #{vae_res_forward.10}
  #allocation0 [shape = 'u32[]', space=smem, size = 0x4, offset = 0x4, fixed_abs, tag = 'smem constant byte address 0x4 - core index']
  #allocation1 [shape = 'u32[144,128]{1,0:T(1,128)}', space=vmem, size = 0x12000, scoped, tag = 'internal scratch']
  %s0 = inlined_call_operand.vmem [shape: bf16[32,288], index: 0, kind: input, shape index: {}]
  %s1 = inlined_call_operand.vmem [shape: bf16[288,16], index: 1, kind: input, shape index: {}]
  %s2 = inlined_call_operand.vmem [shape: f32[1,16], index: 2, kind: input, shape index: {}]
  %s3 = inlined_call_operand.vmem [shape: bf16[32,16], index: 3, kind: output, shape index: {}]
  %s4 = sld [smem:[#allocation0]]
  $region22: #{vae_res_forward.10} parent=0
    _
  %s6 = ssub.s32 1, %s4
  %s7 = scalar_select 0, %s6, %s4
  // Predicated region
  $region2: #{vae_res_forward.10} parent=0 // pred_check
    _
  $region3: #{vae_res_forward.10} parent=0 // pred_check_branch
    %9 = sbr.rel (0) target = $region5
  $region4: #{vae_res_forward.10} parent=0 // pred_region
    _
  $region5: #{vae_res_forward.10} parent=0 // pred_fallthru
    _
  // Predicated region
  $region6: #{vae_res_forward.10} parent=0 // pred_check
    _
  $region7: #{vae_res_forward.10} parent=0 // pred_check_branch
    %11 = sbr.rel (0) target = $region9
  $region8: #{vae_res_forward.10} parent=0 // pred_region
    _
  $region9: #{vae_res_forward.10} parent=0 // pred_fallthru
    _
  // Predicated region
  $region10: #{vae_res_forward.10} parent=0 // pred_check
    _
  $region11: #{vae_res_forward.10} parent=0 // pred_check_branch
    %13 = sbr.rel (0) target = $region13
  $region12: #{vae_res_forward.10} parent=0 // pred_region
    _
  $region13: #{vae_res_forward.10} parent=0 // pred_fallthru
    _
  %v15 = vld [vmem:[%s0] sm:$0xff]
  %v16 = vld [vmem:[%s0 + $0x8] sm:$0xf]
  %v17 = vld [vmem:[%s0 + $0xc] sm:$0xff]
  %v18 = vld [vmem:[%s0 + $0x14] sm:$0xf]
  %v19 = vld [vmem:[%s0 + $0x18] sm:$0xff]
  %v20 = vld [vmem:[%s0 + $0x20] sm:$0xf]
  %v21 = vld [vmem:[%s0 + $0x24] sm:$0xff]
  %v22 = vld [vmem:[%s0 + $0x2c] sm:$0xf]
  %v23 = vld [vmem:[%s1] sm:$0xf]
  %v24 = vld [vmem:[%s1 + $0x4] sm:$0xf]
  %v25 = vld [vmem:[%s1 + $0x8] sm:$0xf]
  %v26 = vld [vmem:[%s1 + $0xc] sm:$0xf]
  %v27 = vld [vmem:[%s1 + $0x10] sm:$0xf]
  %v28 = vld [vmem:[%s1 + $0x14] sm:$0xf]
  %v29 = vld [vmem:[%s1 + $0x18] sm:$0xf]
  %v30 = vld [vmem:[%s1 + $0x1c] sm:$0xf]
  %v31 = vld [vmem:[%s1 + $0x20] sm:$0xf]
  %v32 = vld [vmem:[%s1 + $0x24] sm:$0xf]
  %v33 = vld [vmem:[%s1 + $0x28] sm:$0xf]
  %v34 = vld [vmem:[%s1 + $0x2c] sm:$0xf]
  %v35 = vld [vmem:[%s1 + $0x30] sm:$0xf]
  %v36 = vld [vmem:[%s1 + $0x34] sm:$0xf]
  %v37 = vld [vmem:[%s1 + $0x38] sm:$0xf]
  %v38 = vld [vmem:[%s1 + $0x3c] sm:$0xf]
  %v39 = vld [vmem:[%s1 + $0x40] sm:$0xf]
  %v40 = vld [vmem:[%s1 + $0x44] sm:$0xf]
  %v41 = vld [vmem:[%s1 + $0x48] sm:$0xf]
  %v42 = vld [vmem:[%s1 + $0x4c] sm:$0xf]
  %v43 = vld [vmem:[%s1 + $0x50] sm:$0xf]
  %v44 = vld [vmem:[%s1 + $0x54] sm:$0xf]
  %v45 = vld [vmem:[%s1 + $0x58] sm:$0xf]
  %v46 = vld [vmem:[%s1 + $0x5c] sm:$0xf]
  %v47 = vld [vmem:[%s1 + $0x60] sm:$0xf]
  %v48 = vld [vmem:[%s1 + $0x64] sm:$0xf]
  %v49 = vld [vmem:[%s1 + $0x68] sm:$0xf]
  %v50 = vld [vmem:[%s1 + $0x6c] sm:$0xf]
  %v51 = vld [vmem:[%s1 + $0x70] sm:$0xf]
  %v52 = vld [vmem:[%s1 + $0x74] sm:$0xf]
  %v53 = vld [vmem:[%s1 + $0x78] sm:$0xf]
  %v54 = vld [vmem:[%s1 + $0x7c] sm:$0xf]
  %v55 = vld [vmem:[%s1 + $0x80] sm:$0xf]
  %v56 = vld [vmem:[%s1 + $0x84] sm:$0xf]
  %v57 = vld [vmem:[%s1 + $0x88] sm:$0xf]
  %v58 = vld [vmem:[%s1 + $0x8c] sm:$0xf]
  %v59 = vld [vmem:[%s2] sm:$0x1]
  %v61 = vlaneseq
  %v62 = vshrl.u32 %v61, 7
  %v63 = vsub.s32 0, %v62
  %v64 = vrot.slane %v59, %v63
  %v74 = vunpack.c.l.b16 %v15
  %v75 = vunpack.c.h.b16 %v15
  %v76 = vunpack.c.l.b16 %v16
  %v77 = vunpack.c.l.b16 %v17
  %v78 = vunpack.c.h.b16 %v17
  %v79 = vunpack.c.l.b16 %v18
  %v80 = vunpack.c.l.b16 %v19
  %v81 = vunpack.c.h.b16 %v19
  %v82 = vunpack.c.l.b16 %v20
  %v83 = vunpack.c.l.b16 %v21
  %v84 = vunpack.c.h.b16 %v21
  %v85 = vunpack.c.l.b16 %v22
  %v86 = vpack.c.b16 %v77, %v74
  %v87 = vpack.c.b16 %v78, %v75
  %v88 = vpack.c.b16 %v79, %v76
  %v89 = vpack.c.b16 %v83, %v80
  %v90 = vpack.c.b16 %v84, %v81
  %v91 = vpack.c.b16 %v85, %v82
  %v132 = vunpack.c.l.b16 %v23
  %v133 = vunpack.c.l.b16 %v24
  %v134 = vunpack.c.l.b16 %v25
  %v135 = vunpack.c.l.b16 %v26
  %v136 = vunpack.c.l.b16 %v27
  %v137 = vunpack.c.l.b16 %v28
  %v138 = vunpack.c.l.b16 %v29
  %v139 = vunpack.c.l.b16 %v30
  %v140 = vunpack.c.l.b16 %v31
  %v141 = vunpack.c.l.b16 %v32
  %v142 = vunpack.c.l.b16 %v33
  %v143 = vunpack.c.l.b16 %v34
  %v144 = vunpack.c.l.b16 %v35
  %v145 = vunpack.c.l.b16 %v36
  %v146 = vunpack.c.l.b16 %v37
  %v147 = vunpack.c.l.b16 %v38
  %v148 = vunpack.c.l.b16 %v39
  %v149 = vunpack.c.l.b16 %v40
  %v150 = vunpack.c.l.b16 %v41
  %v151 = vunpack.c.l.b16 %v42
  %v152 = vunpack.c.l.b16 %v43
  %v153 = vunpack.c.l.b16 %v44
  %v154 = vunpack.c.l.b16 %v45
  %v155 = vunpack.c.l.b16 %v46
  %v156 = vunpack.c.l.b16 %v47
  %v157 = vunpack.c.l.b16 %v48
  %v158 = vunpack.c.l.b16 %v49
  %v159 = vunpack.c.l.b16 %v50
  %v160 = vunpack.c.l.b16 %v51
  %v161 = vunpack.c.l.b16 %v52
  %v162 = vunpack.c.l.b16 %v53
  %v163 = vunpack.c.l.b16 %v54
  %v164 = vunpack.c.l.b16 %v55
  %v165 = vunpack.c.l.b16 %v56
  %v166 = vunpack.c.l.b16 %v57
  %v167 = vunpack.c.l.b16 %v58
  %v168 = vpack.c.b16 %v133, %v132
  %v169 = vpack.c.b16 %v135, %v134
  %v170 = vpack.c.b16 %v137, %v136
  %v171 = vpack.c.b16 %v139, %v138
  %v172 = vpack.c.b16 %v141, %v140
  %v173 = vpack.c.b16 %v143, %v142
  %v174 = vpack.c.b16 %v145, %v144
  %v175 = vpack.c.b16 %v147, %v146
  %v176 = vpack.c.b16 %v149, %v148
  %v177 = vpack.c.b16 %v151, %v150
  %v178 = vpack.c.b16 %v153, %v152
  %v179 = vpack.c.b16 %v155, %v154
  %v180 = vpack.c.b16 %v157, %v156
  %v181 = vpack.c.b16 %v159, %v158
  %v182 = vpack.c.b16 %v161, %v160
  %v183 = vpack.c.b16 %v163, %v162
  %v184 = vpack.c.b16 %v165, %v164
  %v185 = vpack.c.b16 %v167, %v166
  %vm204 = vcmask 261120
  %v206 = vsel %vm204, %v88, 0
  %v209 = vsel %vm204, %v91, 0
  %211 = vmatprep.subr.bf16.mxu0 0
  %212 = vmatpush1.bf16.msra.mxu0 %v168
  %213 = vmatprep.subr.bf16.mxu0 0
  %214 = vmatpush1.bf16.msra.mxu0 %v169
  %215 = vmatprep.subr.bf16.mxu0 0
  %216 = vmatpush1.bf16.msra.mxu0 %v170
  %217 = vmatprep.subr.bf16.mxu0 0
  %218 = vmatpush1.bf16.msra.mxu0 %v171
  %219 = vmatprep.subr.bf16.mxu0 0
  %220 = vmatpush1.bf16.msra.mxu0 %v172
  %221 = vmatprep.subr.bf16.mxu0 0
  %222 = vmatpush1.bf16.msra.mxu0 %v173
  %223 = vmatprep.subr.bf16.mxu0 0
  %224 = vmatpush1.bf16.msra.mxu0 %v174
  %225 = vmatprep.subr.bf16.mxu0 0
  %226 = vmatpush1.bf16.msra.mxu0 %v175
  %227 = vmatprep.subr.bf16.mxu0 0
  %228 = vmatpush1.bf16.msra.mxu0 %v176
  %229 = vmatprep.subr.bf16.mxu0 0
  %230 = vmatpush1.bf16.msra.mxu0 %v177
  %231 = vmatprep.subr.bf16.mxu0 0
  %232 = vmatpush1.bf16.msra.mxu0 %v178
  %233 = vmatprep.subr.bf16.mxu0 0
  %234 = vmatpush1.bf16.msra.mxu0 %v179
  %235 = vmatprep.subr.bf16.mxu0 0
  %236 = vmatpush1.bf16.msra.mxu0 %v180
  %237 = vmatprep.subr.bf16.mxu0 0
  %238 = vmatpush1.bf16.msra.mxu0 %v181
  %239 = vmatprep.subr.bf16.mxu0 0
  %240 = vmatpush1.bf16.msra.mxu0 %v182
  %241 = vmatprep.subr.bf16.mxu0 0
  %242 = vmatpush1.bf16.msra.mxu0 %v183
  %243 = vmatprep.mubr.bf16.mxu0 %v87
  %244 = vmatmul.mubr.bf16.gmra.mrb[0].mxu0 %v86
  %v245 = vpop.f32.mrb[0].mxu0
  %v246 = vadd.f32 %v64, %v245
  %v247 = vpop.f32.mrb[0].mxu0
  %v248 = vpop.f32.mrb[0].mxu0
  %v249 = vadd.f32 %v64, %v248
  %v250 = vpop.f32.mrb[0].mxu0
  %251 = vmatprep.mubr.bf16.mxu0 %v90
  %252 = vmatmul.mubr.bf16.gmra.mrb[0].mxu0 %v89
  %v253 = vpop.f32.mrb[0].mxu0
  %v254 = vadd.f32 %v64, %v253
  %v255 = vpop.f32.mrb[0].mxu0
  %v256 = vpop.f32.mrb[0].mxu0
  %v257 = vadd.f32 %v64, %v256
  %v258 = vpop.f32.mrb[0].mxu0
  %259 = vdwg.mxu0
  %260 = vmatprep.subr.bf16.mxu0 0
  %261 = vmatpush1.bf16.msra.mxu0 %v184
  %262 = vmatprep.subr.bf16.mxu0 0
  %263 = vmatpush1.bf16.msra.mxu0 %v185
  %264 = vmatprep.subr.bf16.mxu0 0
  %265 = vmatpush1.bf16.msra.mxu0 0
  %266 = vmatprep.subr.bf16.mxu0 0
  %267 = vmatpush1.bf16.msra.mxu0 0
  %268 = vmatprep.subr.bf16.mxu0 0
  %269 = vmatpush1.bf16.msra.mxu0 0
  %270 = vmatprep.subr.bf16.mxu0 0
  %271 = vmatpush1.bf16.msra.mxu0 0
  %272 = vmatprep.subr.bf16.mxu0 0
  %273 = vmatpush1.bf16.msra.mxu0 0
  %274 = vmatprep.subr.bf16.mxu0 0
  %275 = vmatpush1.bf16.msra.mxu0 0
  %276 = vmatprep.subr.bf16.mxu0 0
  %277 = vmatpush1.bf16.msra.mxu0 0
  %278 = vmatprep.subr.bf16.mxu0 0
  %279 = vmatpush1.bf16.msra.mxu0 0
  %280 = vmatprep.subr.bf16.mxu0 0
  %281 = vmatpush1.bf16.msra.mxu0 0
  %282 = vmatprep.subr.bf16.mxu0 0
  %283 = vmatpush1.bf16.msra.mxu0 0
  %284 = vmatprep.subr.bf16.mxu0 0
  %285 = vmatpush1.bf16.msra.mxu0 0
  %286 = vmatprep.subr.bf16.mxu0 0
  %287 = vmatpush1.bf16.msra.mxu0 0
  %288 = vmatprep.subr.bf16.mxu0 0
  %289 = vmatpush1.bf16.msra.mxu0 0
  %290 = vmatprep.subr.bf16.mxu0 0
  %291 = vmatpush1.bf16.msra.mxu0 0
  %292 = vmatprep.mubr.bf16.mxu0 0
  %293 = vmatmul.mubr.bf16.gmra.mrb[0].mxu0 %v206
  %v294 = vpop.f32.mrb[0].mxu0
  %v295 = vadd.f32 %v246, %v294
  %v296 = vpop.f32.mrb[0].mxu0
  %v297 = vpop.f32.mrb[0].mxu0
  %v298 = vadd.f32 %v249, %v297
  %v299 = vpop.f32.mrb[0].mxu0
  %300 = vmatprep.mubr.bf16.mxu0 0
  %301 = vmatmul.mubr.bf16.gmra.mrb[0].mxu0 %v209
  %v302 = vpop.f32.mrb[0].mxu0
  %v303 = vadd.f32 %v254, %v302
  %v304 = vpop.f32.mrb[0].mxu0
  %v305 = vpop.f32.mrb[0].mxu0
  %v306 = vadd.f32 %v257, %v305
  %v307 = vpop.f32.mrb[0].mxu0
  %308 = vdwg.mxu0
  %v309 = vpack.c.bf16 %v298, %v295
  %v310 = vpack.c.bf16 %v306, %v303
  %v313 = vunpack.c.l.b16 %v309
  %v314 = vunpack.c.h.b16 %v309
  %v315 = vunpack.c.l.b16 %v310
  %v316 = vunpack.c.h.b16 %v310
  %v317 = vpack.c.b16 %v313, %v313
  %v318 = vpack.c.b16 %v314, %v314
  %v319 = vpack.c.b16 %v315, %v315
  %v320 = vpack.c.b16 %v316, %v316
  %vm325 = vcmask 125952
  %326 = vst.msk [vmem:[%s3] sm:$0xf] %vm325, %v317
  %327 = vst.msk [vmem:[%s3 + $0x4] sm:$0xf] %vm325, %v318
  %328 = vst.msk [vmem:[%s3 + $0x8] sm:$0xf] %vm325, %v319
  %329 = vst.msk [vmem:[%s3 + $0xc] sm:$0xf] %vm325, %v320
  // Predicated region
  $region14: #{vae_res_forward.10} parent=0 // pred_check
    _
  $region15: #{vae_res_forward.10} parent=0 // pred_check_branch
    %331 = sbr.rel (0) target = $region17
  $region16: #{vae_res_forward.10} parent=0 // pred_region
    _
  $region17: #{vae_res_forward.10} parent=0 // pred_fallthru
    _
  // Predicated region
  $region18: #{vae_res_forward.10} parent=0 // pred_check
    _
  $region19: #{vae_res_forward.10} parent=0 // pred_check_branch
    %333 = sbr.rel (0) target = $region21
  $region20: #{vae_res_forward.10} parent=0 // pred_region
    _
  $region21: #{vae_res_forward.10} parent=0 // pred_fallthru
    _

// kernel: vae_res_forward.11
$region0: #{vae_res_forward.11}
  #allocation0 [shape = 'u32[]', space=smem, size = 0x4, offset = 0x4, fixed_abs, tag = 'smem constant byte address 0x4 - core index']
  #allocation1 [shape = 'u32[144,128]{1,0:T(1,128)}', space=vmem, size = 0x12000, scoped, tag = 'internal scratch']
  %s0 = inlined_call_operand.vmem [shape: bf16[16,144], index: 0, kind: input, shape index: {}]
  %s1 = inlined_call_operand.vmem [shape: bf16[144,64], index: 1, kind: input, shape index: {}]
  %s2 = inlined_call_operand.vmem [shape: bf16[144,64], index: 2, kind: input, shape index: {}]
  %s3 = inlined_call_operand.vmem [shape: f32[1,64], index: 3, kind: input, shape index: {}]
  %s4 = inlined_call_operand.vmem [shape: f32[1,64], index: 4, kind: input, shape index: {}]
  %s5 = inlined_call_operand.vmem [shape: f32[16,64], index: 5, kind: input, shape index: {}]
  %s6 = inlined_call_operand.vmem [shape: f32[16,64], index: 6, kind: output, shape index: {0}]
  %s7 = inlined_call_operand.vmem [shape: f32[16,64], index: 7, kind: output, shape index: {1}]
  %s8 = inlined_call_operand.vmem [shape: f32[16,64], index: 8, kind: output, shape index: {2}]
  %9 = xla_tuple %s6, %s7, %s8
  %s10 = sld [smem:[#allocation0]]
  $region50: #{vae_res_forward.11} parent=0
    _
  %s12 = ssub.s32 1, %s10
  %s13 = scalar_select 0, %s12, %s10
  // Predicated region
  $region2: #{vae_res_forward.11} parent=0 // pred_check
    _
  $region3: #{vae_res_forward.11} parent=0 // pred_check_branch
    %15 = sbr.rel (0) target = $region5
  $region4: #{vae_res_forward.11} parent=0 // pred_region
    _
  $region5: #{vae_res_forward.11} parent=0 // pred_fallthru
    _
  // Predicated region
  $region6: #{vae_res_forward.11} parent=0 // pred_check
    _
  $region7: #{vae_res_forward.11} parent=0 // pred_check_branch
    %17 = sbr.rel (0) target = $region9
  $region8: #{vae_res_forward.11} parent=0 // pred_region
    _
  $region9: #{vae_res_forward.11} parent=0 // pred_fallthru
    _
  // Predicated region
  $region10: #{vae_res_forward.11} parent=0 // pred_check
    _
  $region11: #{vae_res_forward.11} parent=0 // pred_check_branch
    %19 = sbr.rel (0) target = $region13
  $region12: #{vae_res_forward.11} parent=0 // pred_region
    _
  $region13: #{vae_res_forward.11} parent=0 // pred_fallthru
    _
  // Predicated region
  $region14: #{vae_res_forward.11} parent=0 // pred_check
    _
  $region15: #{vae_res_forward.11} parent=0 // pred_check_branch
    %21 = sbr.rel (0) target = $region17
  $region16: #{vae_res_forward.11} parent=0 // pred_region
    _
  $region17: #{vae_res_forward.11} parent=0 // pred_fallthru
    _
  // Predicated region
  $region18: #{vae_res_forward.11} parent=0 // pred_check
    _
  $region19: #{vae_res_forward.11} parent=0 // pred_check_branch
    %23 = sbr.rel (0) target = $region21
  $region20: #{vae_res_forward.11} parent=0 // pred_region
    _
  $region21: #{vae_res_forward.11} parent=0 // pred_fallthru
    _
  // Predicated region
  $region22: #{vae_res_forward.11} parent=0 // pred_check
    _
  $region23: #{vae_res_forward.11} parent=0 // pred_check_branch
    %25 = sbr.rel (0) target = $region25
  $region24: #{vae_res_forward.11} parent=0 // pred_region
    _
  $region25: #{vae_res_forward.11} parent=0 // pred_fallthru
    _
  %v27 = vld [vmem:[%s0] sm:$0xff]
  %v28 = vld [vmem:[%s0 + $0x8] sm:$0xff]
  %v29 = vld [vmem:[%s1] sm:$0xf]
  %v30 = vld [vmem:[%s1 + $0x4] sm:$0xf]
  %v31 = vld [vmem:[%s1 + $0x8] sm:$0xf]
  %v32 = vld [vmem:[%s1 + $0xc] sm:$0xf]
  %v33 = vld [vmem:[%s1 + $0x10] sm:$0xf]
  %v34 = vld [vmem:[%s1 + $0x14] sm:$0xf]
  %v35 = vld [vmem:[%s1 + $0x18] sm:$0xf]
  %v36 = vld [vmem:[%s1 + $0x1c] sm:$0xf]
  %v37 = vld [vmem:[%s1 + $0x20] sm:$0xf]
  %v38 = vld [vmem:[%s1 + $0x24] sm:$0xf]
  %v39 = vld [vmem:[%s1 + $0x28] sm:$0xf]
  %v40 = vld [vmem:[%s1 + $0x2c] sm:$0xf]
  %v41 = vld [vmem:[%s1 + $0x30] sm:$0xf]
  %v42 = vld [vmem:[%s1 + $0x34] sm:$0xf]
  %v43 = vld [vmem:[%s1 + $0x38] sm:$0xf]
  %v44 = vld [vmem:[%s1 + $0x3c] sm:$0xf]
  %v45 = vld [vmem:[%s1 + $0x40] sm:$0xf]
  %v46 = vld [vmem:[%s1 + $0x44] sm:$0xf]
  %v47 = vld [vmem:[%s3] sm:$0x1]
  %v49 = vlaneseq
  %v50 = vshrl.u32 %v49, 7
  %v51 = vsub.s32 0, %v50
  %v52 = vrot.slane %v47, %v51
  %v56 = vunpack.c.l.b16 %v27
  %v57 = vunpack.c.h.b16 %v27
  %v58 = vunpack.c.l.b16 %v28
  %v59 = vunpack.c.h.b16 %v28
  %v60 = vpack.c.b16 %v58, %v56
  %v61 = vpack.c.b16 %v59, %v57
  %v81 = vunpack.c.l.b16 %v29
  %v82 = vunpack.c.l.b16 %v30
  %v83 = vunpack.c.l.b16 %v31
  %v84 = vunpack.c.l.b16 %v32
  %v85 = vunpack.c.l.b16 %v33
  %v86 = vunpack.c.l.b16 %v34
  %v87 = vunpack.c.l.b16 %v35
  %v88 = vunpack.c.l.b16 %v36
  %v89 = vunpack.c.l.b16 %v37
  %v90 = vunpack.c.l.b16 %v38
  %v91 = vunpack.c.l.b16 %v39
  %v92 = vunpack.c.l.b16 %v40
  %v93 = vunpack.c.l.b16 %v41
  %v94 = vunpack.c.l.b16 %v42
  %v95 = vunpack.c.l.b16 %v43
  %v96 = vunpack.c.l.b16 %v44
  %v97 = vunpack.c.l.b16 %v45
  %v98 = vunpack.c.l.b16 %v46
  %v99 = vpack.c.b16 %v82, %v81
  %v100 = vpack.c.b16 %v84, %v83
  %v101 = vpack.c.b16 %v86, %v85
  %v102 = vpack.c.b16 %v88, %v87
  %v103 = vpack.c.b16 %v90, %v89
  %v104 = vpack.c.b16 %v92, %v91
  %v105 = vpack.c.b16 %v94, %v93
  %v106 = vpack.c.b16 %v96, %v95
  %v107 = vpack.c.b16 %v98, %v97
  %vm117 = vcmask 130048
  %v119 = vsel %vm117, %v61, 0
  %121 = vmatprep.subr.bf16.mxu0 0
  %122 = vmatpush1.bf16.msra.mxu0 %v99
  %123 = vmatprep.subr.bf16.mxu0 0
  %124 = vmatpush1.bf16.msra.mxu0 %v100
  %125 = vmatprep.subr.bf16.mxu0 0
  %126 = vmatpush1.bf16.msra.mxu0 %v101
  %127 = vmatprep.subr.bf16.mxu0 0
  %128 = vmatpush1.bf16.msra.mxu0 %v102
  %129 = vmatprep.subr.bf16.mxu0 0
  %130 = vmatpush1.bf16.msra.mxu0 %v103
  %131 = vmatprep.subr.bf16.mxu0 0
  %132 = vmatpush1.bf16.msra.mxu0 %v104
  %133 = vmatprep.subr.bf16.mxu0 0
  %134 = vmatpush1.bf16.msra.mxu0 %v105
  %135 = vmatprep.subr.bf16.mxu0 0
  %136 = vmatpush1.bf16.msra.mxu0 %v106
  %137 = vmatprep.subr.bf16.mxu0 0
  %138 = vmatpush1.bf16.msra.mxu0 %v107
  %139 = vmatprep.subr.bf16.mxu0 0
  %140 = vmatpush1.bf16.msra.mxu0 0
  %141 = vmatprep.subr.bf16.mxu0 0
  %142 = vmatpush1.bf16.msra.mxu0 0
  %143 = vmatprep.subr.bf16.mxu0 0
  %144 = vmatpush1.bf16.msra.mxu0 0
  %145 = vmatprep.subr.bf16.mxu0 0
  %146 = vmatpush1.bf16.msra.mxu0 0
  %147 = vmatprep.subr.bf16.mxu0 0
  %148 = vmatpush1.bf16.msra.mxu0 0
  %149 = vmatprep.subr.bf16.mxu0 0
  %150 = vmatpush1.bf16.msra.mxu0 0
  %151 = vmatprep.subr.bf16.mxu0 0
  %152 = vmatpush1.bf16.msra.mxu0 0
  %153 = vmatprep.mubr.bf16.mxu0 %v119
  %154 = vmatmul.mubr.bf16.gmra.mrb[0].mxu0 %v60
  %v155 = vpop.f32.mrb[0].mxu0
  %v156 = vadd.f32 %v52, %v155
  %v157 = vpop.f32.mrb[0].mxu0
  %v158 = vpop.f32.mrb[0].mxu0
  %v159 = vadd.f32 %v52, %v158
  %v160 = vpop.f32.mrb[0].mxu0
  %161 = vdwg.mxu0
  %v162 = vld [vmem:[%s2] sm:$0xf]
  %v163 = vld [vmem:[%s2 + $0x4] sm:$0xf]
  %v164 = vld [vmem:[%s2 + $0x8] sm:$0xf]
  %v165 = vld [vmem:[%s2 + $0xc] sm:$0xf]
  %v166 = vld [vmem:[%s2 + $0x10] sm:$0xf]
  %v167 = vld [vmem:[%s2 + $0x14] sm:$0xf]
  %v168 = vld [vmem:[%s2 + $0x18] sm:$0xf]
  %v169 = vld [vmem:[%s2 + $0x1c] sm:$0xf]
  %v170 = vld [vmem:[%s2 + $0x20] sm:$0xf]
  %v171 = vld [vmem:[%s2 + $0x24] sm:$0xf]
  %v172 = vld [vmem:[%s2 + $0x28] sm:$0xf]
  %v173 = vld [vmem:[%s2 + $0x2c] sm:$0xf]
  %v174 = vld [vmem:[%s2 + $0x30] sm:$0xf]
  %v175 = vld [vmem:[%s2 + $0x34] sm:$0xf]
  %v176 = vld [vmem:[%s2 + $0x38] sm:$0xf]
  %v177 = vld [vmem:[%s2 + $0x3c] sm:$0xf]
  %v178 = vld [vmem:[%s2 + $0x40] sm:$0xf]
  %v179 = vld [vmem:[%s2 + $0x44] sm:$0xf]
  %v180 = vld [vmem:[%s4] sm:$0x1]
  %v182 = vlaneseq
  %v183 = vshrl.u32 %v182, 7
  %v184 = vsub.s32 0, %v183
  %v185 = vrot.slane %v180, %v184
  %v205 = vunpack.c.l.b16 %v162
  %v206 = vunpack.c.l.b16 %v163
  %v207 = vunpack.c.l.b16 %v164
  %v208 = vunpack.c.l.b16 %v165
  %v209 = vunpack.c.l.b16 %v166
  %v210 = vunpack.c.l.b16 %v167
  %v211 = vunpack.c.l.b16 %v168
  %v212 = vunpack.c.l.b16 %v169
  %v213 = vunpack.c.l.b16 %v170
  %v214 = vunpack.c.l.b16 %v171
  %v215 = vunpack.c.l.b16 %v172
  %v216 = vunpack.c.l.b16 %v173
  %v217 = vunpack.c.l.b16 %v174
  %v218 = vunpack.c.l.b16 %v175
  %v219 = vunpack.c.l.b16 %v176
  %v220 = vunpack.c.l.b16 %v177
  %v221 = vunpack.c.l.b16 %v178
  %v222 = vunpack.c.l.b16 %v179
  %v223 = vpack.c.b16 %v206, %v205
  %v224 = vpack.c.b16 %v208, %v207
  %v225 = vpack.c.b16 %v210, %v209
  %v226 = vpack.c.b16 %v212, %v211
  %v227 = vpack.c.b16 %v214, %v213
  %v228 = vpack.c.b16 %v216, %v215
  %v229 = vpack.c.b16 %v218, %v217
  %v230 = vpack.c.b16 %v220, %v219
  %v231 = vpack.c.b16 %v222, %v221
  %241 = vmatprep.subr.bf16.mxu0 0
  %242 = vmatpush1.bf16.msra.mxu0 %v223
  %243 = vmatprep.subr.bf16.mxu0 0
  %244 = vmatpush1.bf16.msra.mxu0 %v224
  %245 = vmatprep.subr.bf16.mxu0 0
  %246 = vmatpush1.bf16.msra.mxu0 %v225
  %247 = vmatprep.subr.bf16.mxu0 0
  %248 = vmatpush1.bf16.msra.mxu0 %v226
  %249 = vmatprep.subr.bf16.mxu0 0
  %250 = vmatpush1.bf16.msra.mxu0 %v227
  %251 = vmatprep.subr.bf16.mxu0 0
  %252 = vmatpush1.bf16.msra.mxu0 %v228
  %253 = vmatprep.subr.bf16.mxu0 0
  %254 = vmatpush1.bf16.msra.mxu0 %v229
  %255 = vmatprep.subr.bf16.mxu0 0
  %256 = vmatpush1.bf16.msra.mxu0 %v230
  %257 = vmatprep.subr.bf16.mxu0 0
  %258 = vmatpush1.bf16.msra.mxu0 %v231
  %259 = vmatprep.subr.bf16.mxu0 0
  %260 = vmatpush1.bf16.msra.mxu0 0
  %261 = vmatprep.subr.bf16.mxu0 0
  %262 = vmatpush1.bf16.msra.mxu0 0
  %263 = vmatprep.subr.bf16.mxu0 0
  %264 = vmatpush1.bf16.msra.mxu0 0
  %265 = vmatprep.subr.bf16.mxu0 0
  %266 = vmatpush1.bf16.msra.mxu0 0
  %267 = vmatprep.subr.bf16.mxu0 0
  %268 = vmatpush1.bf16.msra.mxu0 0
  %269 = vmatprep.subr.bf16.mxu0 0
  %270 = vmatpush1.bf16.msra.mxu0 0
  %271 = vmatprep.subr.bf16.mxu0 0
  %272 = vmatpush1.bf16.msra.mxu0 0
  %273 = vmatprep.mubr.bf16.mxu0 %v119
  %274 = vmatmul.mubr.bf16.gmra.mrb[0].mxu0 %v60
  %v275 = vpop.f32.mrb[0].mxu0
  %v276 = vadd.f32 %v185, %v275
  %v277 = vpop.f32.mrb[0].mxu0
  %v278 = vpop.f32.mrb[0].mxu0
  %v279 = vadd.f32 %v185, %v278
  %v280 = vpop.f32.mrb[0].mxu0
  %281 = vdwg.mxu0
  %vm282 = vcmask 523264
  %283 = vst.msk [vmem:[%s6] sm:$0xff] %vm282, %v156
  %284 = vst.msk [vmem:[%s6 + $0x8] sm:$0xff] %vm282, %v159
  %285 = vst.msk [vmem:[%s7] sm:$0xff] %vm282, %v276
  %286 = vst.msk [vmem:[%s7 + $0x8] sm:$0xff] %vm282, %v279
  %v287 = vmul.f32 %v276, 0.5
  %v288 = vmul.f32 %v279, 0.5
  %v289 = vmul.f32 %v287, 1.442695
  %v290 = vpow.pop %v289
  %v291 = vmul.f32 %v288, 1.442695
  %v292 = vpow.pop %v291
  %v293 = vld [vmem:[%s5] sm:$0xff]
  %v294 = vld [vmem:[%s5 + $0x8] sm:$0xff]
  %v295 = vmul.f32 %v290, %v293
  %v296 = vmul.f32 %v292, %v294
  %v297 = vadd.f32 %v156, %v295
  %v298 = vadd.f32 %v159, %v296
  %299 = vst.msk [vmem:[%s8] sm:$0xff] %vm282, %v297
  %300 = vst.msk [vmem:[%s8 + $0x8] sm:$0xff] %vm282, %v298
  // Predicated region
  $region26: #{vae_res_forward.11} parent=0 // pred_check
    _
  $region27: #{vae_res_forward.11} parent=0 // pred_check_branch
    %302 = sbr.rel (0) target = $region29
  $region28: #{vae_res_forward.11} parent=0 // pred_region
    _
  $region29: #{vae_res_forward.11} parent=0 // pred_fallthru
    _
  // Predicated region
  $region30: #{vae_res_forward.11} parent=0 // pred_check
    _
  $region31: #{vae_res_forward.11} parent=0 // pred_check_branch
    %304 = sbr.rel (0) target = $region33
  $region32: #{vae_res_forward.11} parent=0 // pred_region
    _
  $region33: #{vae_res_forward.11} parent=0 // pred_fallthru
    _
  // Predicated region
  $region34: #{vae_res_forward.11} parent=0 // pred_check
    _
  $region35: #{vae_res_forward.11} parent=0 // pred_check_branch
    %306 = sbr.rel (0) target = $region37
  $region36: #{vae_res_forward.11} parent=0 // pred_region
    _
  $region37: #{vae_res_forward.11} parent=0 // pred_fallthru
    _
  // Predicated region
  $region38: #{vae_res_forward.11} parent=0 // pred_check
    _
  $region39: #{vae_res_forward.11} parent=0 // pred_check_branch
    %308 = sbr.rel (0) target = $region41
  $region40: #{vae_res_forward.11} parent=0 // pred_region
    _
  $region41: #{vae_res_forward.11} parent=0 // pred_fallthru
    _
  // Predicated region
  $region42: #{vae_res_forward.11} parent=0 // pred_check
    _
  $region43: #{vae_res_forward.11} parent=0 // pred_check_branch
    %310 = sbr.rel (0) target = $region45
  $region44: #{vae_res_forward.11} parent=0 // pred_region
    _
  $region45: #{vae_res_forward.11} parent=0 // pred_fallthru
    _
  // Predicated region
  $region46: #{vae_res_forward.11} parent=0 // pred_check
    _
  $region47: #{vae_res_forward.11} parent=0 // pred_check_branch
    %312 = sbr.rel (0) target = $region49
  $region48: #{vae_res_forward.11} parent=0 // pred_region
    _
  $region49: #{vae_res_forward.11} parent=0 // pred_fallthru
    _

// kernel: vae_res_forward.12
$region0: #{vae_res_forward.12}
  #allocation0 [shape = 'u32[]', space=smem, size = 0x4, offset = 0x4, fixed_abs, tag = 'smem constant byte address 0x4 - core index']
  #allocation1 [shape = 'u32[144,128]{1,0:T(1,128)}', space=vmem, size = 0x12000, scoped, tag = 'internal scratch']
  %s0 = inlined_call_operand.vmem [shape: bf16[112,288], index: 0, kind: input, shape index: {}]
  %s1 = inlined_call_operand.vmem [shape: bf16[288,32], index: 1, kind: input, shape index: {}]
  %s2 = inlined_call_operand.vmem [shape: f32[1,32], index: 2, kind: input, shape index: {}]
  %s3 = inlined_call_operand.vmem [shape: bf16[112,32], index: 3, kind: output, shape index: {}]
  %s4 = sld [smem:[#allocation0]]
  $region22: #{vae_res_forward.12} parent=0
    _
  %s6 = ssub.s32 1, %s4
  %s7 = scalar_select 0, %s6, %s4
  // Predicated region
  $region2: #{vae_res_forward.12} parent=0 // pred_check
    _
  $region3: #{vae_res_forward.12} parent=0 // pred_check_branch
    %9 = sbr.rel (0) target = $region5
  $region4: #{vae_res_forward.12} parent=0 // pred_region
    _
  $region5: #{vae_res_forward.12} parent=0 // pred_fallthru
    _
  // Predicated region
  $region6: #{vae_res_forward.12} parent=0 // pred_check
    _
  $region7: #{vae_res_forward.12} parent=0 // pred_check_branch
    %11 = sbr.rel (0) target = $region9
  $region8: #{vae_res_forward.12} parent=0 // pred_region
    _
  $region9: #{vae_res_forward.12} parent=0 // pred_fallthru
    _
  // Predicated region
  $region10: #{vae_res_forward.12} parent=0 // pred_check
    _
  $region11: #{vae_res_forward.12} parent=0 // pred_check_branch
    %13 = sbr.rel (0) target = $region13
  $region12: #{vae_res_forward.12} parent=0 // pred_region
    _
  $region13: #{vae_res_forward.12} parent=0 // pred_fallthru
    _
  %v15 = vld [vmem:[%s0] sm:$0xff]
  %v16 = vld [vmem:[%s0 + $0x8] sm:$0xf]
  %v17 = vld [vmem:[%s0 + $0xc] sm:$0xff]
  %v18 = vld [vmem:[%s0 + $0x14] sm:$0xf]
  %v19 = vld [vmem:[%s0 + $0x18] sm:$0xff]
  %v20 = vld [vmem:[%s0 + $0x20] sm:$0xf]
  %v21 = vld [vmem:[%s0 + $0x24] sm:$0xff]
  %v22 = vld [vmem:[%s0 + $0x2c] sm:$0xf]
  %v23 = vld [vmem:[%s0 + $0x30] sm:$0xff]
  %v24 = vld [vmem:[%s0 + $0x38] sm:$0xf]
  %v25 = vld [vmem:[%s0 + $0x3c] sm:$0xff]
  %v26 = vld [vmem:[%s0 + $0x44] sm:$0xf]
  %v27 = vld [vmem:[%s0 + $0x48] sm:$0xff]
  %v28 = vld [vmem:[%s0 + $0x50] sm:$0xf]
  %v29 = vld [vmem:[%s0 + $0x54] sm:$0xff]
  %v30 = vld [vmem:[%s0 + $0x5c] sm:$0xf]
  %v31 = vld [vmem:[%s0 + $0x60] sm:$0xff]
  %v32 = vld [vmem:[%s0 + $0x68] sm:$0xf]
  %v33 = vld [vmem:[%s0 + $0x6c] sm:$0xff]
  %v34 = vld [vmem:[%s0 + $0x74] sm:$0xf]
  %v35 = vld [vmem:[%s0 + $0x78] sm:$0xff]
  %v36 = vld [vmem:[%s0 + $0x80] sm:$0xf]
  %v37 = vld [vmem:[%s0 + $0x84] sm:$0xff]
  %v38 = vld [vmem:[%s0 + $0x8c] sm:$0xf]
  %v39 = vld [vmem:[%s0 + $0x90] sm:$0xff]
  %v40 = vld [vmem:[%s0 + $0x98] sm:$0xf]
  %v41 = vld [vmem:[%s0 + $0x9c] sm:$0xff]
  %v42 = vld [vmem:[%s0 + $0xa4] sm:$0xf]
  %v43 = vld [vmem:[%s1] sm:$0xf]
  %v44 = vld [vmem:[%s1 + $0x4] sm:$0xf]
  %v45 = vld [vmem:[%s1 + $0x8] sm:$0xf]
  %v46 = vld [vmem:[%s1 + $0xc] sm:$0xf]
  %v47 = vld [vmem:[%s1 + $0x10] sm:$0xf]
  %v48 = vld [vmem:[%s1 + $0x14] sm:$0xf]
  %v49 = vld [vmem:[%s1 + $0x18] sm:$0xf]
  %v50 = vld [vmem:[%s1 + $0x1c] sm:$0xf]
  %v51 = vld [vmem:[%s1 + $0x20] sm:$0xf]
  %v52 = vld [vmem:[%s1 + $0x24] sm:$0xf]
  %v53 = vld [vmem:[%s1 + $0x28] sm:$0xf]
  %v54 = vld [vmem:[%s1 + $0x2c] sm:$0xf]
  %v55 = vld [vmem:[%s1 + $0x30] sm:$0xf]
  %v56 = vld [vmem:[%s1 + $0x34] sm:$0xf]
  %v57 = vld [vmem:[%s1 + $0x38] sm:$0xf]
  %v58 = vld [vmem:[%s1 + $0x3c] sm:$0xf]
  %v59 = vld [vmem:[%s1 + $0x40] sm:$0xf]
  %v60 = vld [vmem:[%s1 + $0x44] sm:$0xf]
  %v61 = vld [vmem:[%s1 + $0x48] sm:$0xf]
  %v62 = vld [vmem:[%s1 + $0x4c] sm:$0xf]
  %v63 = vld [vmem:[%s1 + $0x50] sm:$0xf]
  %v64 = vld [vmem:[%s1 + $0x54] sm:$0xf]
  %v65 = vld [vmem:[%s1 + $0x58] sm:$0xf]
  %v66 = vld [vmem:[%s1 + $0x5c] sm:$0xf]
  %v67 = vld [vmem:[%s1 + $0x60] sm:$0xf]
  %v68 = vld [vmem:[%s1 + $0x64] sm:$0xf]
  %v69 = vld [vmem:[%s1 + $0x68] sm:$0xf]
  %v70 = vld [vmem:[%s1 + $0x6c] sm:$0xf]
  %v71 = vld [vmem:[%s1 + $0x70] sm:$0xf]
  %v72 = vld [vmem:[%s1 + $0x74] sm:$0xf]
  %v73 = vld [vmem:[%s1 + $0x78] sm:$0xf]
  %v74 = vld [vmem:[%s1 + $0x7c] sm:$0xf]
  %v75 = vld [vmem:[%s1 + $0x80] sm:$0xf]
  %v76 = vld [vmem:[%s1 + $0x84] sm:$0xf]
  %v77 = vld [vmem:[%s1 + $0x88] sm:$0xf]
  %v78 = vld [vmem:[%s1 + $0x8c] sm:$0xf]
  %v79 = vld [vmem:[%s2] sm:$0x1]
  %v81 = vlaneseq
  %v82 = vshrl.u32 %v81, 7
  %v83 = vsub.s32 0, %v82
  %v84 = vrot.slane %v79, %v83
  %v114 = vunpack.c.l.b16 %v15
  %v115 = vunpack.c.h.b16 %v15
  %v116 = vunpack.c.l.b16 %v16
  %v117 = vunpack.c.l.b16 %v17
  %v118 = vunpack.c.h.b16 %v17
  %v119 = vunpack.c.l.b16 %v18
  %v120 = vunpack.c.l.b16 %v19
  %v121 = vunpack.c.h.b16 %v19
  %v122 = vunpack.c.l.b16 %v20
  %v123 = vunpack.c.l.b16 %v21
  %v124 = vunpack.c.h.b16 %v21
  %v125 = vunpack.c.l.b16 %v22
  %v126 = vunpack.c.l.b16 %v23
  %v127 = vunpack.c.h.b16 %v23
  %v128 = vunpack.c.l.b16 %v24
  %v129 = vunpack.c.l.b16 %v25
  %v130 = vunpack.c.h.b16 %v25
  %v131 = vunpack.c.l.b16 %v26
  %v132 = vunpack.c.l.b16 %v27
  %v133 = vunpack.c.h.b16 %v27
  %v134 = vunpack.c.l.b16 %v28
  %v135 = vunpack.c.l.b16 %v29
  %v136 = vunpack.c.h.b16 %v29
  %v137 = vunpack.c.l.b16 %v30
  %v138 = vunpack.c.l.b16 %v31
  %v139 = vunpack.c.h.b16 %v31
  %v140 = vunpack.c.l.b16 %v32
  %v141 = vunpack.c.l.b16 %v33
  %v142 = vunpack.c.h.b16 %v33
  %v143 = vunpack.c.l.b16 %v34
  %v144 = vunpack.c.l.b16 %v35
  %v145 = vunpack.c.h.b16 %v35
  %v146 = vunpack.c.l.b16 %v36
  %v147 = vunpack.c.l.b16 %v37
  %v148 = vunpack.c.h.b16 %v37
  %v149 = vunpack.c.l.b16 %v38
  %v150 = vunpack.c.l.b16 %v39
  %v151 = vunpack.c.h.b16 %v39
  %v152 = vunpack.c.l.b16 %v40
  %v153 = vunpack.c.l.b16 %v41
  %v154 = vunpack.c.h.b16 %v41
  %v155 = vunpack.c.l.b16 %v42
  %v156 = vpack.c.b16 %v117, %v114
  %v157 = vpack.c.b16 %v118, %v115
  %v158 = vpack.c.b16 %v119, %v116
  %v159 = vpack.c.b16 %v123, %v120
  %v160 = vpack.c.b16 %v124, %v121
  %v161 = vpack.c.b16 %v125, %v122
  %v162 = vpack.c.b16 %v129, %v126
  %v163 = vpack.c.b16 %v130, %v127
  %v164 = vpack.c.b16 %v131, %v128
  %v165 = vpack.c.b16 %v135, %v132
  %v166 = vpack.c.b16 %v136, %v133
  %v167 = vpack.c.b16 %v137, %v134
  %v168 = vpack.c.b16 %v141, %v138
  %v169 = vpack.c.b16 %v142, %v139
  %v170 = vpack.c.b16 %v143, %v140
  %v171 = vpack.c.b16 %v147, %v144
  %v172 = vpack.c.b16 %v148, %v145
  %v173 = vpack.c.b16 %v149, %v146
  %v174 = vpack.c.b16 %v153, %v150
  %v175 = vpack.c.b16 %v154, %v151
  %v176 = vpack.c.b16 %v155, %v152
  %v227 = vunpack.c.l.b16 %v43
  %v228 = vunpack.c.l.b16 %v44
  %v229 = vunpack.c.l.b16 %v45
  %v230 = vunpack.c.l.b16 %v46
  %v231 = vunpack.c.l.b16 %v47
  %v232 = vunpack.c.l.b16 %v48
  %v233 = vunpack.c.l.b16 %v49
  %v234 = vunpack.c.l.b16 %v50
  %v235 = vunpack.c.l.b16 %v51
  %v236 = vunpack.c.l.b16 %v52
  %v237 = vunpack.c.l.b16 %v53
  %v238 = vunpack.c.l.b16 %v54
  %v239 = vunpack.c.l.b16 %v55
  %v240 = vunpack.c.l.b16 %v56
  %v241 = vunpack.c.l.b16 %v57
  %v242 = vunpack.c.l.b16 %v58
  %v243 = vunpack.c.l.b16 %v59
  %v244 = vunpack.c.l.b16 %v60
  %v245 = vunpack.c.l.b16 %v61
  %v246 = vunpack.c.l.b16 %v62
  %v247 = vunpack.c.l.b16 %v63
  %v248 = vunpack.c.l.b16 %v64
  %v249 = vunpack.c.l.b16 %v65
  %v250 = vunpack.c.l.b16 %v66
  %v251 = vunpack.c.l.b16 %v67
  %v252 = vunpack.c.l.b16 %v68
  %v253 = vunpack.c.l.b16 %v69
  %v254 = vunpack.c.l.b16 %v70
  %v255 = vunpack.c.l.b16 %v71
  %v256 = vunpack.c.l.b16 %v72
  %v257 = vunpack.c.l.b16 %v73
  %v258 = vunpack.c.l.b16 %v74
  %v259 = vunpack.c.l.b16 %v75
  %v260 = vunpack.c.l.b16 %v76
  %v261 = vunpack.c.l.b16 %v77
  %v262 = vunpack.c.l.b16 %v78
  %v263 = vpack.c.b16 %v228, %v227
  %v264 = vpack.c.b16 %v230, %v229
  %v265 = vpack.c.b16 %v232, %v231
  %v266 = vpack.c.b16 %v234, %v233
  %v267 = vpack.c.b16 %v236, %v235
  %v268 = vpack.c.b16 %v238, %v237
  %v269 = vpack.c.b16 %v240, %v239
  %v270 = vpack.c.b16 %v242, %v241
  %v271 = vpack.c.b16 %v244, %v243
  %v272 = vpack.c.b16 %v246, %v245
  %v273 = vpack.c.b16 %v248, %v247
  %v274 = vpack.c.b16 %v250, %v249
  %v275 = vpack.c.b16 %v252, %v251
  %v276 = vpack.c.b16 %v254, %v253
  %v277 = vpack.c.b16 %v256, %v255
  %v278 = vpack.c.b16 %v258, %v257
  %v279 = vpack.c.b16 %v260, %v259
  %v280 = vpack.c.b16 %v262, %v261
  %vm299 = vcmask 261120
  %v301 = vsel %vm299, %v158, 0
  %v304 = vsel %vm299, %v161, 0
  %v307 = vsel %vm299, %v164, 0
  %v310 = vsel %vm299, %v167, 0
  %v313 = vsel %vm299, %v170, 0
  %v316 = vsel %vm299, %v173, 0
  %v319 = vsel %vm299, %v176, 0
  %321 = vmatprep.subr.bf16.mxu0 0
  %322 = vmatpush1.bf16.msra.mxu0 %v263
  %323 = vmatprep.subr.bf16.mxu0 0
  %324 = vmatpush1.bf16.msra.mxu0 %v264
  %325 = vmatprep.subr.bf16.mxu0 0
  %326 = vmatpush1.bf16.msra.mxu0 %v265
  %327 = vmatprep.subr.bf16.mxu0 0
  %328 = vmatpush1.bf16.msra.mxu0 %v266
  %329 = vmatprep.subr.bf16.mxu0 0
  %330 = vmatpush1.bf16.msra.mxu0 %v267
  %331 = vmatprep.subr.bf16.mxu0 0
  %332 = vmatpush1.bf16.msra.mxu0 %v268
  %333 = vmatprep.subr.bf16.mxu0 0
  %334 = vmatpush1.bf16.msra.mxu0 %v269
  %335 = vmatprep.subr.bf16.mxu0 0
  %336 = vmatpush1.bf16.msra.mxu0 %v270
  %337 = vmatprep.subr.bf16.mxu0 0
  %338 = vmatpush1.bf16.msra.mxu0 %v271
  %339 = vmatprep.subr.bf16.mxu0 0
  %340 = vmatpush1.bf16.msra.mxu0 %v272
  %341 = vmatprep.subr.bf16.mxu0 0
  %342 = vmatpush1.bf16.msra.mxu0 %v273
  %343 = vmatprep.subr.bf16.mxu0 0
  %344 = vmatpush1.bf16.msra.mxu0 %v274
  %345 = vmatprep.subr.bf16.mxu0 0
  %346 = vmatpush1.bf16.msra.mxu0 %v275
  %347 = vmatprep.subr.bf16.mxu0 0
  %348 = vmatpush1.bf16.msra.mxu0 %v276
  %349 = vmatprep.subr.bf16.mxu0 0
  %350 = vmatpush1.bf16.msra.mxu0 %v277
  %351 = vmatprep.subr.bf16.mxu0 0
  %352 = vmatpush1.bf16.msra.mxu0 %v278
  %353 = vmatprep.mubr.bf16.mxu0 %v157
  %354 = vmatmul.mubr.bf16.gmra.mrb[0].mxu0 %v156
  %v355 = vpop.f32.mrb[0].mxu0
  %v356 = vadd.f32 %v84, %v355
  %v357 = vpop.f32.mrb[0].mxu0
  %v358 = vpop.f32.mrb[0].mxu0
  %v359 = vadd.f32 %v84, %v358
  %v360 = vpop.f32.mrb[0].mxu0
  %361 = vmatprep.mubr.bf16.mxu0 %v160
  %362 = vmatmul.mubr.bf16.gmra.mrb[0].mxu0 %v159
  %v363 = vpop.f32.mrb[0].mxu0
  %v364 = vadd.f32 %v84, %v363
  %v365 = vpop.f32.mrb[0].mxu0
  %v366 = vpop.f32.mrb[0].mxu0
  %v367 = vadd.f32 %v84, %v366
  %v368 = vpop.f32.mrb[0].mxu0
  %369 = vmatprep.mubr.bf16.mxu0 %v163
  %370 = vmatmul.mubr.bf16.gmra.mrb[0].mxu0 %v162
  %v371 = vpop.f32.mrb[0].mxu0
  %v372 = vadd.f32 %v84, %v371
  %v373 = vpop.f32.mrb[0].mxu0
  %v374 = vpop.f32.mrb[0].mxu0
  %v375 = vadd.f32 %v84, %v374
  %v376 = vpop.f32.mrb[0].mxu0
  %377 = vmatprep.mubr.bf16.mxu0 %v166
  %378 = vmatmul.mubr.bf16.gmra.mrb[0].mxu0 %v165
  %v379 = vpop.f32.mrb[0].mxu0
  %v380 = vadd.f32 %v84, %v379
  %v381 = vpop.f32.mrb[0].mxu0
  %v382 = vpop.f32.mrb[0].mxu0
  %v383 = vadd.f32 %v84, %v382
  %v384 = vpop.f32.mrb[0].mxu0
  %385 = vmatprep.mubr.bf16.mxu0 %v169
  %386 = vmatmul.mubr.bf16.gmra.mrb[0].mxu0 %v168
  %v387 = vpop.f32.mrb[0].mxu0
  %v388 = vadd.f32 %v84, %v387
  %v389 = vpop.f32.mrb[0].mxu0
  %v390 = vpop.f32.mrb[0].mxu0
  %v391 = vadd.f32 %v84, %v390
  %v392 = vpop.f32.mrb[0].mxu0
  %393 = vmatprep.mubr.bf16.mxu0 %v172
  %394 = vmatmul.mubr.bf16.gmra.mrb[0].mxu0 %v171
  %v395 = vpop.f32.mrb[0].mxu0
  %v396 = vadd.f32 %v84, %v395
  %v397 = vpop.f32.mrb[0].mxu0
  %v398 = vpop.f32.mrb[0].mxu0
  %v399 = vadd.f32 %v84, %v398
  %v400 = vpop.f32.mrb[0].mxu0
  %401 = vmatprep.mubr.bf16.mxu0 %v175
  %402 = vmatmul.mubr.bf16.gmra.mrb[0].mxu0 %v174
  %v403 = vpop.f32.mrb[0].mxu0
  %v404 = vadd.f32 %v84, %v403
  %v405 = vpop.f32.mrb[0].mxu0
  %v406 = vpop.f32.mrb[0].mxu0
  %v407 = vadd.f32 %v84, %v406
  %v408 = vpop.f32.mrb[0].mxu0
  %409 = vdwg.mxu0
  %410 = vmatprep.subr.bf16.mxu0 0
  %411 = vmatpush1.bf16.msra.mxu0 %v279
  %412 = vmatprep.subr.bf16.mxu0 0
  %413 = vmatpush1.bf16.msra.mxu0 %v280
  %414 = vmatprep.subr.bf16.mxu0 0
  %415 = vmatpush1.bf16.msra.mxu0 0
  %416 = vmatprep.subr.bf16.mxu0 0
  %417 = vmatpush1.bf16.msra.mxu0 0
  %418 = vmatprep.subr.bf16.mxu0 0
  %419 = vmatpush1.bf16.msra.mxu0 0
  %420 = vmatprep.subr.bf16.mxu0 0
  %421 = vmatpush1.bf16.msra.mxu0 0
  %422 = vmatprep.subr.bf16.mxu0 0
  %423 = vmatpush1.bf16.msra.mxu0 0
  %424 = vmatprep.subr.bf16.mxu0 0
  %425 = vmatpush1.bf16.msra.mxu0 0
  %426 = vmatprep.subr.bf16.mxu0 0
  %427 = vmatpush1.bf16.msra.mxu0 0
  %428 = vmatprep.subr.bf16.mxu0 0
  %429 = vmatpush1.bf16.msra.mxu0 0
  %430 = vmatprep.subr.bf16.mxu0 0
  %431 = vmatpush1.bf16.msra.mxu0 0
  %432 = vmatprep.subr.bf16.mxu0 0
  %433 = vmatpush1.bf16.msra.mxu0 0
  %434 = vmatprep.subr.bf16.mxu0 0
  %435 = vmatpush1.bf16.msra.mxu0 0
  %436 = vmatprep.subr.bf16.mxu0 0
  %437 = vmatpush1.bf16.msra.mxu0 0
  %438 = vmatprep.subr.bf16.mxu0 0
  %439 = vmatpush1.bf16.msra.mxu0 0
  %440 = vmatprep.subr.bf16.mxu0 0
  %441 = vmatpush1.bf16.msra.mxu0 0
  %442 = vmatprep.mubr.bf16.mxu0 0
  %443 = vmatmul.mubr.bf16.gmra.mrb[0].mxu0 %v301
  %v444 = vpop.f32.mrb[0].mxu0
  %v445 = vadd.f32 %v356, %v444
  %v446 = vpop.f32.mrb[0].mxu0
  %v447 = vpop.f32.mrb[0].mxu0
  %v448 = vadd.f32 %v359, %v447
  %v449 = vpop.f32.mrb[0].mxu0
  %450 = vmatprep.mubr.bf16.mxu0 0
  %451 = vmatmul.mubr.bf16.gmra.mrb[0].mxu0 %v304
  %v452 = vpop.f32.mrb[0].mxu0
  %v453 = vadd.f32 %v364, %v452
  %v454 = vpop.f32.mrb[0].mxu0
  %v455 = vpop.f32.mrb[0].mxu0
  %v456 = vadd.f32 %v367, %v455
  %v457 = vpop.f32.mrb[0].mxu0
  %458 = vmatprep.mubr.bf16.mxu0 0
  %459 = vmatmul.mubr.bf16.gmra.mrb[0].mxu0 %v307
  %v460 = vpop.f32.mrb[0].mxu0
  %v461 = vadd.f32 %v372, %v460
  %v462 = vpop.f32.mrb[0].mxu0
  %v463 = vpop.f32.mrb[0].mxu0
  %v464 = vadd.f32 %v375, %v463
  %v465 = vpop.f32.mrb[0].mxu0
  %466 = vmatprep.mubr.bf16.mxu0 0
  %467 = vmatmul.mubr.bf16.gmra.mrb[0].mxu0 %v310
  %v468 = vpop.f32.mrb[0].mxu0
  %v469 = vadd.f32 %v380, %v468
  %v470 = vpop.f32.mrb[0].mxu0
  %v471 = vpop.f32.mrb[0].mxu0
  %v472 = vadd.f32 %v383, %v471
  %v473 = vpop.f32.mrb[0].mxu0
  %474 = vmatprep.mubr.bf16.mxu0 0
  %475 = vmatmul.mubr.bf16.gmra.mrb[0].mxu0 %v313
  %v476 = vpop.f32.mrb[0].mxu0
  %v477 = vadd.f32 %v388, %v476
  %v478 = vpop.f32.mrb[0].mxu0
  %v479 = vpop.f32.mrb[0].mxu0
  %v480 = vadd.f32 %v391, %v479
  %v481 = vpop.f32.mrb[0].mxu0
  %482 = vmatprep.mubr.bf16.mxu0 0
  %483 = vmatmul.mubr.bf16.gmra.mrb[0].mxu0 %v316
  %v484 = vpop.f32.mrb[0].mxu0
  %v485 = vadd.f32 %v396, %v484
  %v486 = vpop.f32.mrb[0].mxu0
  %v487 = vpop.f32.mrb[0].mxu0
  %v488 = vadd.f32 %v399, %v487
  %v489 = vpop.f32.mrb[0].mxu0
  %490 = vmatprep.mubr.bf16.mxu0 0
  %491 = vmatmul.mubr.bf16.gmra.mrb[0].mxu0 %v319
  %v492 = vpop.f32.mrb[0].mxu0
  %v493 = vadd.f32 %v404, %v492
  %v494 = vpop.f32.mrb[0].mxu0
  %v495 = vpop.f32.mrb[0].mxu0
  %v496 = vadd.f32 %v407, %v495
  %v497 = vpop.f32.mrb[0].mxu0
  %498 = vdwg.mxu0
  %v499 = vmax.f32 %v445, 0.0
  %v500 = vmax.f32 %v448, 0.0
  %v501 = vmax.f32 %v453, 0.0
  %v502 = vmax.f32 %v456, 0.0
  %v503 = vmax.f32 %v461, 0.0
  %v504 = vmax.f32 %v464, 0.0
  %v505 = vmax.f32 %v469, 0.0
  %v506 = vmax.f32 %v472, 0.0
  %v507 = vmax.f32 %v477, 0.0
  %v508 = vmax.f32 %v480, 0.0
  %v509 = vmax.f32 %v485, 0.0
  %v510 = vmax.f32 %v488, 0.0
  %v511 = vmax.f32 %v493, 0.0
  %v512 = vmax.f32 %v496, 0.0
  %v513 = vpack.c.bf16 %v500, %v499
  %v514 = vpack.c.bf16 %v502, %v501
  %v515 = vpack.c.bf16 %v504, %v503
  %v516 = vpack.c.bf16 %v506, %v505
  %v517 = vpack.c.bf16 %v508, %v507
  %v518 = vpack.c.bf16 %v510, %v509
  %v519 = vpack.c.bf16 %v512, %v511
  %v527 = vunpack.c.l.b16 %v513
  %v528 = vunpack.c.h.b16 %v513
  %v529 = vunpack.c.l.b16 %v514
  %v530 = vunpack.c.h.b16 %v514
  %v531 = vunpack.c.l.b16 %v515
  %v532 = vunpack.c.h.b16 %v515
  %v533 = vunpack.c.l.b16 %v516
  %v534 = vunpack.c.h.b16 %v516
  %v535 = vunpack.c.l.b16 %v517
  %v536 = vunpack.c.h.b16 %v517
  %v537 = vunpack.c.l.b16 %v518
  %v538 = vunpack.c.h.b16 %v518
  %v539 = vunpack.c.l.b16 %v519
  %v540 = vunpack.c.h.b16 %v519
  %v541 = vpack.c.b16 %v527, %v527
  %v542 = vpack.c.b16 %v528, %v528
  %v543 = vpack.c.b16 %v529, %v529
  %v544 = vpack.c.b16 %v530, %v530
  %v545 = vpack.c.b16 %v531, %v531
  %v546 = vpack.c.b16 %v532, %v532
  %v547 = vpack.c.b16 %v533, %v533
  %v548 = vpack.c.b16 %v534, %v534
  %v549 = vpack.c.b16 %v535, %v535
  %v550 = vpack.c.b16 %v536, %v536
  %v551 = vpack.c.b16 %v537, %v537
  %v552 = vpack.c.b16 %v538, %v538
  %v553 = vpack.c.b16 %v539, %v539
  %v554 = vpack.c.b16 %v540, %v540
  %vm569 = vcmask 257024
  %570 = vst.msk [vmem:[%s3] sm:$0xf] %vm569, %v541
  %571 = vst.msk [vmem:[%s3 + $0x4] sm:$0xf] %vm569, %v542
  %572 = vst.msk [vmem:[%s3 + $0x8] sm:$0xf] %vm569, %v543
  %573 = vst.msk [vmem:[%s3 + $0xc] sm:$0xf] %vm569, %v544
  %574 = vst.msk [vmem:[%s3 + $0x10] sm:$0xf] %vm569, %v545
  %575 = vst.msk [vmem:[%s3 + $0x14] sm:$0xf] %vm569, %v546
  %576 = vst.msk [vmem:[%s3 + $0x18] sm:$0xf] %vm569, %v547
  %577 = vst.msk [vmem:[%s3 + $0x1c] sm:$0xf] %vm569, %v548
  %578 = vst.msk [vmem:[%s3 + $0x20] sm:$0xf] %vm569, %v549
  %579 = vst.msk [vmem:[%s3 + $0x24] sm:$0xf] %vm569, %v550
  %580 = vst.msk [vmem:[%s3 + $0x28] sm:$0xf] %vm569, %v551
  %581 = vst.msk [vmem:[%s3 + $0x2c] sm:$0xf] %vm569, %v552
  %582 = vst.msk [vmem:[%s3 + $0x30] sm:$0xf] %vm569, %v553
  %583 = vst.msk [vmem:[%s3 + $0x34] sm:$0xf] %vm569, %v554
  // Predicated region
  $region14: #{vae_res_forward.12} parent=0 // pred_check
    _
  $region15: #{vae_res_forward.12} parent=0 // pred_check_branch
    %585 = sbr.rel (0) target = $region17
  $region16: #{vae_res_forward.12} parent=0 // pred_region
    _
  $region17: #{vae_res_forward.12} parent=0 // pred_fallthru
    _
  // Predicated region
  $region18: #{vae_res_forward.12} parent=0 // pred_check
    _
  $region19: #{vae_res_forward.12} parent=0 // pred_check_branch
    %587 = sbr.rel (0) target = $region21
  $region20: #{vae_res_forward.12} parent=0 // pred_region
    _
  $region21: #{vae_res_forward.12} parent=0 // pred_fallthru
    _

// kernel: vae_res_forward.13
$region0: #{vae_res_forward.13}
  #allocation0 [shape = 'u32[]', space=smem, size = 0x4, offset = 0x4, fixed_abs, tag = 'smem constant byte address 0x4 - core index']
  #allocation1 [shape = 'u32[144,128]{1,0:T(1,128)}', space=vmem, size = 0x12000, scoped, tag = 'internal scratch']
  %s0 = inlined_call_operand.vmem [shape: bf16[64,288], index: 0, kind: input, shape index: {}]
  %s1 = inlined_call_operand.vmem [shape: bf16[288,16], index: 1, kind: input, shape index: {}]
  %s2 = inlined_call_operand.vmem [shape: f32[1,16], index: 2, kind: input, shape index: {}]
  %s3 = inlined_call_operand.vmem [shape: bf16[64,16], index: 3, kind: output, shape index: {}]
  %s4 = sld [smem:[#allocation0]]
  $region22: #{vae_res_forward.13} parent=0
    _
  %s6 = ssub.s32 1, %s4
  %s7 = scalar_select 0, %s6, %s4
  // Predicated region
  $region2: #{vae_res_forward.13} parent=0 // pred_check
    _
  $region3: #{vae_res_forward.13} parent=0 // pred_check_branch
    %9 = sbr.rel (0) target = $region5
  $region4: #{vae_res_forward.13} parent=0 // pred_region
    _
  $region5: #{vae_res_forward.13} parent=0 // pred_fallthru
    _
  // Predicated region
  $region6: #{vae_res_forward.13} parent=0 // pred_check
    _
  $region7: #{vae_res_forward.13} parent=0 // pred_check_branch
    %11 = sbr.rel (0) target = $region9
  $region8: #{vae_res_forward.13} parent=0 // pred_region
    _
  $region9: #{vae_res_forward.13} parent=0 // pred_fallthru
    _
  // Predicated region
  $region10: #{vae_res_forward.13} parent=0 // pred_check
    _
  $region11: #{vae_res_forward.13} parent=0 // pred_check_branch
    %13 = sbr.rel (0) target = $region13
  $region12: #{vae_res_forward.13} parent=0 // pred_region
    _
  $region13: #{vae_res_forward.13} parent=0 // pred_fallthru
    _
  %v15 = vld [vmem:[%s0] sm:$0xff]
  %v16 = vld [vmem:[%s0 + $0x8] sm:$0xf]
  %v17 = vld [vmem:[%s0 + $0xc] sm:$0xff]
  %v18 = vld [vmem:[%s0 + $0x14] sm:$0xf]
  %v19 = vld [vmem:[%s0 + $0x18] sm:$0xff]
  %v20 = vld [vmem:[%s0 + $0x20] sm:$0xf]
  %v21 = vld [vmem:[%s0 + $0x24] sm:$0xff]
  %v22 = vld [vmem:[%s0 + $0x2c] sm:$0xf]
  %v23 = vld [vmem:[%s0 + $0x30] sm:$0xff]
  %v24 = vld [vmem:[%s0 + $0x38] sm:$0xf]
  %v25 = vld [vmem:[%s0 + $0x3c] sm:$0xff]
  %v26 = vld [vmem:[%s0 + $0x44] sm:$0xf]
  %v27 = vld [vmem:[%s0 + $0x48] sm:$0xff]
  %v28 = vld [vmem:[%s0 + $0x50] sm:$0xf]
  %v29 = vld [vmem:[%s0 + $0x54] sm:$0xff]
  %v30 = vld [vmem:[%s0 + $0x5c] sm:$0xf]
  %v31 = vld [vmem:[%s1] sm:$0xf]
  %v32 = vld [vmem:[%s1 + $0x4] sm:$0xf]
  %v33 = vld [vmem:[%s1 + $0x8] sm:$0xf]
  %v34 = vld [vmem:[%s1 + $0xc] sm:$0xf]
  %v35 = vld [vmem:[%s1 + $0x10] sm:$0xf]
  %v36 = vld [vmem:[%s1 + $0x14] sm:$0xf]
  %v37 = vld [vmem:[%s1 + $0x18] sm:$0xf]
  %v38 = vld [vmem:[%s1 + $0x1c] sm:$0xf]
  %v39 = vld [vmem:[%s1 + $0x20] sm:$0xf]
  %v40 = vld [vmem:[%s1 + $0x24] sm:$0xf]
  %v41 = vld [vmem:[%s1 + $0x28] sm:$0xf]
  %v42 = vld [vmem:[%s1 + $0x2c] sm:$0xf]
  %v43 = vld [vmem:[%s1 + $0x30] sm:$0xf]
  %v44 = vld [vmem:[%s1 + $0x34] sm:$0xf]
  %v45 = vld [vmem:[%s1 + $0x38] sm:$0xf]
  %v46 = vld [vmem:[%s1 + $0x3c] sm:$0xf]
  %v47 = vld [vmem:[%s1 + $0x40] sm:$0xf]
  %v48 = vld [vmem:[%s1 + $0x44] sm:$0xf]
  %v49 = vld [vmem:[%s1 + $0x48] sm:$0xf]
  %v50 = vld [vmem:[%s1 + $0x4c] sm:$0xf]
  %v51 = vld [vmem:[%s1 + $0x50] sm:$0xf]
  %v52 = vld [vmem:[%s1 + $0x54] sm:$0xf]
  %v53 = vld [vmem:[%s1 + $0x58] sm:$0xf]
  %v54 = vld [vmem:[%s1 + $0x5c] sm:$0xf]
  %v55 = vld [vmem:[%s1 + $0x60] sm:$0xf]
  %v56 = vld [vmem:[%s1 + $0x64] sm:$0xf]
  %v57 = vld [vmem:[%s1 + $0x68] sm:$0xf]
  %v58 = vld [vmem:[%s1 + $0x6c] sm:$0xf]
  %v59 = vld [vmem:[%s1 + $0x70] sm:$0xf]
  %v60 = vld [vmem:[%s1 + $0x74] sm:$0xf]
  %v61 = vld [vmem:[%s1 + $0x78] sm:$0xf]
  %v62 = vld [vmem:[%s1 + $0x7c] sm:$0xf]
  %v63 = vld [vmem:[%s1 + $0x80] sm:$0xf]
  %v64 = vld [vmem:[%s1 + $0x84] sm:$0xf]
  %v65 = vld [vmem:[%s1 + $0x88] sm:$0xf]
  %v66 = vld [vmem:[%s1 + $0x8c] sm:$0xf]
  %v67 = vld [vmem:[%s2] sm:$0x1]
  %v69 = vlaneseq
  %v70 = vshrl.u32 %v69, 7
  %v71 = vsub.s32 0, %v70
  %v72 = vrot.slane %v67, %v71
  %v90 = vunpack.c.l.b16 %v15
  %v91 = vunpack.c.h.b16 %v15
  %v92 = vunpack.c.l.b16 %v16
  %v93 = vunpack.c.l.b16 %v17
  %v94 = vunpack.c.h.b16 %v17
  %v95 = vunpack.c.l.b16 %v18
  %v96 = vunpack.c.l.b16 %v19
  %v97 = vunpack.c.h.b16 %v19
  %v98 = vunpack.c.l.b16 %v20
  %v99 = vunpack.c.l.b16 %v21
  %v100 = vunpack.c.h.b16 %v21
  %v101 = vunpack.c.l.b16 %v22
  %v102 = vunpack.c.l.b16 %v23
  %v103 = vunpack.c.h.b16 %v23
  %v104 = vunpack.c.l.b16 %v24
  %v105 = vunpack.c.l.b16 %v25
  %v106 = vunpack.c.h.b16 %v25
  %v107 = vunpack.c.l.b16 %v26
  %v108 = vunpack.c.l.b16 %v27
  %v109 = vunpack.c.h.b16 %v27
  %v110 = vunpack.c.l.b16 %v28
  %v111 = vunpack.c.l.b16 %v29
  %v112 = vunpack.c.h.b16 %v29
  %v113 = vunpack.c.l.b16 %v30
  %v114 = vpack.c.b16 %v93, %v90
  %v115 = vpack.c.b16 %v94, %v91
  %v116 = vpack.c.b16 %v95, %v92
  %v117 = vpack.c.b16 %v99, %v96
  %v118 = vpack.c.b16 %v100, %v97
  %v119 = vpack.c.b16 %v101, %v98
  %v120 = vpack.c.b16 %v105, %v102
  %v121 = vpack.c.b16 %v106, %v103
  %v122 = vpack.c.b16 %v107, %v104
  %v123 = vpack.c.b16 %v111, %v108
  %v124 = vpack.c.b16 %v112, %v109
  %v125 = vpack.c.b16 %v113, %v110
  %v170 = vunpack.c.l.b16 %v31
  %v171 = vunpack.c.l.b16 %v32
  %v172 = vunpack.c.l.b16 %v33
  %v173 = vunpack.c.l.b16 %v34
  %v174 = vunpack.c.l.b16 %v35
  %v175 = vunpack.c.l.b16 %v36
  %v176 = vunpack.c.l.b16 %v37
  %v177 = vunpack.c.l.b16 %v38
  %v178 = vunpack.c.l.b16 %v39
  %v179 = vunpack.c.l.b16 %v40
  %v180 = vunpack.c.l.b16 %v41
  %v181 = vunpack.c.l.b16 %v42
  %v182 = vunpack.c.l.b16 %v43
  %v183 = vunpack.c.l.b16 %v44
  %v184 = vunpack.c.l.b16 %v45
  %v185 = vunpack.c.l.b16 %v46
  %v186 = vunpack.c.l.b16 %v47
  %v187 = vunpack.c.l.b16 %v48
  %v188 = vunpack.c.l.b16 %v49
  %v189 = vunpack.c.l.b16 %v50
  %v190 = vunpack.c.l.b16 %v51
  %v191 = vunpack.c.l.b16 %v52
  %v192 = vunpack.c.l.b16 %v53
  %v193 = vunpack.c.l.b16 %v54
  %v194 = vunpack.c.l.b16 %v55
  %v195 = vunpack.c.l.b16 %v56
  %v196 = vunpack.c.l.b16 %v57
  %v197 = vunpack.c.l.b16 %v58
  %v198 = vunpack.c.l.b16 %v59
  %v199 = vunpack.c.l.b16 %v60
  %v200 = vunpack.c.l.b16 %v61
  %v201 = vunpack.c.l.b16 %v62
  %v202 = vunpack.c.l.b16 %v63
  %v203 = vunpack.c.l.b16 %v64
  %v204 = vunpack.c.l.b16 %v65
  %v205 = vunpack.c.l.b16 %v66
  %v206 = vpack.c.b16 %v171, %v170
  %v207 = vpack.c.b16 %v173, %v172
  %v208 = vpack.c.b16 %v175, %v174
  %v209 = vpack.c.b16 %v177, %v176
  %v210 = vpack.c.b16 %v179, %v178
  %v211 = vpack.c.b16 %v181, %v180
  %v212 = vpack.c.b16 %v183, %v182
  %v213 = vpack.c.b16 %v185, %v184
  %v214 = vpack.c.b16 %v187, %v186
  %v215 = vpack.c.b16 %v189, %v188
  %v216 = vpack.c.b16 %v191, %v190
  %v217 = vpack.c.b16 %v193, %v192
  %v218 = vpack.c.b16 %v195, %v194
  %v219 = vpack.c.b16 %v197, %v196
  %v220 = vpack.c.b16 %v199, %v198
  %v221 = vpack.c.b16 %v201, %v200
  %v222 = vpack.c.b16 %v203, %v202
  %v223 = vpack.c.b16 %v205, %v204
  %vm242 = vcmask 261120
  %v244 = vsel %vm242, %v116, 0
  %v247 = vsel %vm242, %v119, 0
  %v250 = vsel %vm242, %v122, 0
  %v253 = vsel %vm242, %v125, 0
  %255 = vmatprep.subr.bf16.mxu0 0
  %256 = vmatpush1.bf16.msra.mxu0 %v206
  %257 = vmatprep.subr.bf16.mxu0 0
  %258 = vmatpush1.bf16.msra.mxu0 %v207
  %259 = vmatprep.subr.bf16.mxu0 0
  %260 = vmatpush1.bf16.msra.mxu0 %v208
  %261 = vmatprep.subr.bf16.mxu0 0
  %262 = vmatpush1.bf16.msra.mxu0 %v209
  %263 = vmatprep.subr.bf16.mxu0 0
  %264 = vmatpush1.bf16.msra.mxu0 %v210
  %265 = vmatprep.subr.bf16.mxu0 0
  %266 = vmatpush1.bf16.msra.mxu0 %v211
  %267 = vmatprep.subr.bf16.mxu0 0
  %268 = vmatpush1.bf16.msra.mxu0 %v212
  %269 = vmatprep.subr.bf16.mxu0 0
  %270 = vmatpush1.bf16.msra.mxu0 %v213
  %271 = vmatprep.subr.bf16.mxu0 0
  %272 = vmatpush1.bf16.msra.mxu0 %v214
  %273 = vmatprep.subr.bf16.mxu0 0
  %274 = vmatpush1.bf16.msra.mxu0 %v215
  %275 = vmatprep.subr.bf16.mxu0 0
  %276 = vmatpush1.bf16.msra.mxu0 %v216
  %277 = vmatprep.subr.bf16.mxu0 0
  %278 = vmatpush1.bf16.msra.mxu0 %v217
  %279 = vmatprep.subr.bf16.mxu0 0
  %280 = vmatpush1.bf16.msra.mxu0 %v218
  %281 = vmatprep.subr.bf16.mxu0 0
  %282 = vmatpush1.bf16.msra.mxu0 %v219
  %283 = vmatprep.subr.bf16.mxu0 0
  %284 = vmatpush1.bf16.msra.mxu0 %v220
  %285 = vmatprep.subr.bf16.mxu0 0
  %286 = vmatpush1.bf16.msra.mxu0 %v221
  %287 = vmatprep.mubr.bf16.mxu0 %v115
  %288 = vmatmul.mubr.bf16.gmra.mrb[0].mxu0 %v114
  %v289 = vpop.f32.mrb[0].mxu0
  %v290 = vadd.f32 %v72, %v289
  %v291 = vpop.f32.mrb[0].mxu0
  %v292 = vpop.f32.mrb[0].mxu0
  %v293 = vadd.f32 %v72, %v292
  %v294 = vpop.f32.mrb[0].mxu0
  %295 = vmatprep.mubr.bf16.mxu0 %v118
  %296 = vmatmul.mubr.bf16.gmra.mrb[0].mxu0 %v117
  %v297 = vpop.f32.mrb[0].mxu0
  %v298 = vadd.f32 %v72, %v297
  %v299 = vpop.f32.mrb[0].mxu0
  %v300 = vpop.f32.mrb[0].mxu0
  %v301 = vadd.f32 %v72, %v300
  %v302 = vpop.f32.mrb[0].mxu0
  %303 = vmatprep.mubr.bf16.mxu0 %v121
  %304 = vmatmul.mubr.bf16.gmra.mrb[0].mxu0 %v120
  %v305 = vpop.f32.mrb[0].mxu0
  %v306 = vadd.f32 %v72, %v305
  %v307 = vpop.f32.mrb[0].mxu0
  %v308 = vpop.f32.mrb[0].mxu0
  %v309 = vadd.f32 %v72, %v308
  %v310 = vpop.f32.mrb[0].mxu0
  %311 = vmatprep.mubr.bf16.mxu0 %v124
  %312 = vmatmul.mubr.bf16.gmra.mrb[0].mxu0 %v123
  %v313 = vpop.f32.mrb[0].mxu0
  %v314 = vadd.f32 %v72, %v313
  %v315 = vpop.f32.mrb[0].mxu0
  %v316 = vpop.f32.mrb[0].mxu0
  %v317 = vadd.f32 %v72, %v316
  %v318 = vpop.f32.mrb[0].mxu0
  %319 = vdwg.mxu0
  %320 = vmatprep.subr.bf16.mxu0 0
  %321 = vmatpush1.bf16.msra.mxu0 %v222
  %322 = vmatprep.subr.bf16.mxu0 0
  %323 = vmatpush1.bf16.msra.mxu0 %v223
  %324 = vmatprep.subr.bf16.mxu0 0
  %325 = vmatpush1.bf16.msra.mxu0 0
  %326 = vmatprep.subr.bf16.mxu0 0
  %327 = vmatpush1.bf16.msra.mxu0 0
  %328 = vmatprep.subr.bf16.mxu0 0
  %329 = vmatpush1.bf16.msra.mxu0 0
  %330 = vmatprep.subr.bf16.mxu0 0
  %331 = vmatpush1.bf16.msra.mxu0 0
  %332 = vmatprep.subr.bf16.mxu0 0
  %333 = vmatpush1.bf16.msra.mxu0 0
  %334 = vmatprep.subr.bf16.mxu0 0
  %335 = vmatpush1.bf16.msra.mxu0 0
  %336 = vmatprep.subr.bf16.mxu0 0
  %337 = vmatpush1.bf16.msra.mxu0 0
  %338 = vmatprep.subr.bf16.mxu0 0
  %339 = vmatpush1.bf16.msra.mxu0 0
  %340 = vmatprep.subr.bf16.mxu0 0
  %341 = vmatpush1.bf16.msra.mxu0 0
  %342 = vmatprep.subr.bf16.mxu0 0
  %343 = vmatpush1.bf16.msra.mxu0 0
  %344 = vmatprep.subr.bf16.mxu0 0
  %345 = vmatpush1.bf16.msra.mxu0 0
  %346 = vmatprep.subr.bf16.mxu0 0
  %347 = vmatpush1.bf16.msra.mxu0 0
  %348 = vmatprep.subr.bf16.mxu0 0
  %349 = vmatpush1.bf16.msra.mxu0 0
  %350 = vmatprep.subr.bf16.mxu0 0
  %351 = vmatpush1.bf16.msra.mxu0 0
  %352 = vmatprep.mubr.bf16.mxu0 0
  %353 = vmatmul.mubr.bf16.gmra.mrb[0].mxu0 %v244
  %v354 = vpop.f32.mrb[0].mxu0
  %v355 = vadd.f32 %v290, %v354
  %v356 = vpop.f32.mrb[0].mxu0
  %v357 = vpop.f32.mrb[0].mxu0
  %v358 = vadd.f32 %v293, %v357
  %v359 = vpop.f32.mrb[0].mxu0
  %360 = vmatprep.mubr.bf16.mxu0 0
  %361 = vmatmul.mubr.bf16.gmra.mrb[0].mxu0 %v247
  %v362 = vpop.f32.mrb[0].mxu0
  %v363 = vadd.f32 %v298, %v362
  %v364 = vpop.f32.mrb[0].mxu0
  %v365 = vpop.f32.mrb[0].mxu0
  %v366 = vadd.f32 %v301, %v365
  %v367 = vpop.f32.mrb[0].mxu0
  %368 = vmatprep.mubr.bf16.mxu0 0
  %369 = vmatmul.mubr.bf16.gmra.mrb[0].mxu0 %v250
  %v370 = vpop.f32.mrb[0].mxu0
  %v371 = vadd.f32 %v306, %v370
  %v372 = vpop.f32.mrb[0].mxu0
  %v373 = vpop.f32.mrb[0].mxu0
  %v374 = vadd.f32 %v309, %v373
  %v375 = vpop.f32.mrb[0].mxu0
  %376 = vmatprep.mubr.bf16.mxu0 0
  %377 = vmatmul.mubr.bf16.gmra.mrb[0].mxu0 %v253
  %v378 = vpop.f32.mrb[0].mxu0
  %v379 = vadd.f32 %v314, %v378
  %v380 = vpop.f32.mrb[0].mxu0
  %v381 = vpop.f32.mrb[0].mxu0
  %v382 = vadd.f32 %v317, %v381
  %v383 = vpop.f32.mrb[0].mxu0
  %384 = vdwg.mxu0
  %v385 = vpack.c.bf16 %v358, %v355
  %v386 = vpack.c.bf16 %v366, %v363
  %v387 = vpack.c.bf16 %v374, %v371
  %v388 = vpack.c.bf16 %v382, %v379
  %v393 = vunpack.c.l.b16 %v385
  %v394 = vunpack.c.h.b16 %v385
  %v395 = vunpack.c.l.b16 %v386
  %v396 = vunpack.c.h.b16 %v386
  %v397 = vunpack.c.l.b16 %v387
  %v398 = vunpack.c.h.b16 %v387
  %v399 = vunpack.c.l.b16 %v388
  %v400 = vunpack.c.h.b16 %v388
  %v401 = vpack.c.b16 %v393, %v393
  %v402 = vpack.c.b16 %v394, %v394
  %v403 = vpack.c.b16 %v395, %v395
  %v404 = vpack.c.b16 %v396, %v396
  %v405 = vpack.c.b16 %v397, %v397
  %v406 = vpack.c.b16 %v398, %v398
  %v407 = vpack.c.b16 %v399, %v399
  %v408 = vpack.c.b16 %v400, %v400
  %vm417 = vcmask 125952
  %418 = vst.msk [vmem:[%s3] sm:$0xf] %vm417, %v401
  %419 = vst.msk [vmem:[%s3 + $0x4] sm:$0xf] %vm417, %v402
  %420 = vst.msk [vmem:[%s3 + $0x8] sm:$0xf] %vm417, %v403
  %421 = vst.msk [vmem:[%s3 + $0xc] sm:$0xf] %vm417, %v404
  %422 = vst.msk [vmem:[%s3 + $0x10] sm:$0xf] %vm417, %v405
  %423 = vst.msk [vmem:[%s3 + $0x14] sm:$0xf] %vm417, %v406
  %424 = vst.msk [vmem:[%s3 + $0x18] sm:$0xf] %vm417, %v407
  %425 = vst.msk [vmem:[%s3 + $0x1c] sm:$0xf] %vm417, %v408
  // Predicated region
  $region14: #{vae_res_forward.13} parent=0 // pred_check
    _
  $region15: #{vae_res_forward.13} parent=0 // pred_check_branch
    %427 = sbr.rel (0) target = $region17
  $region16: #{vae_res_forward.13} parent=0 // pred_region
    _
  $region17: #{vae_res_forward.13} parent=0 // pred_fallthru
    _
  // Predicated region
  $region18: #{vae_res_forward.13} parent=0 // pred_check
    _
  $region19: #{vae_res_forward.13} parent=0 // pred_check_branch
    %429 = sbr.rel (0) target = $region21
  $region20: #{vae_res_forward.13} parent=0 // pred_region
    _
  $region21: #{vae_res_forward.13} parent=0 // pred_fallthru
    _

// kernel: vae_res_forward.14
$region0: #{vae_res_forward.14}
  #allocation0 [shape = 'u32[]', space=smem, size = 0x4, offset = 0x4, fixed_abs, tag = 'smem constant byte address 0x4 - core index']
  #allocation1 [shape = 'u32[144,128]{1,0:T(1,128)}', space=vmem, size = 0x12000, scoped, tag = 'internal scratch']
  %s0 = inlined_call_operand.vmem [shape: bf16[16,400], index: 0, kind: input, shape index: {}]
  %s1 = inlined_call_operand.vmem [shape: bf16[400,64], index: 1, kind: input, shape index: {}]
  %s2 = inlined_call_operand.vmem [shape: f32[1,64], index: 2, kind: input, shape index: {}]
  %s3 = inlined_call_operand.vmem [shape: f32[16,64], index: 3, kind: output, shape index: {}]
  %s4 = sld [smem:[#allocation0]]
  $region22: #{vae_res_forward.14} parent=0
    _
  %s6 = ssub.s32 1, %s4
  %s7 = scalar_select 0, %s6, %s4
  // Predicated region
  $region2: #{vae_res_forward.14} parent=0 // pred_check
    _
  $region3: #{vae_res_forward.14} parent=0 // pred_check_branch
    %9 = sbr.rel (0) target = $region5
  $region4: #{vae_res_forward.14} parent=0 // pred_region
    _
  $region5: #{vae_res_forward.14} parent=0 // pred_fallthru
    _
  // Predicated region
  $region6: #{vae_res_forward.14} parent=0 // pred_check
    _
  $region7: #{vae_res_forward.14} parent=0 // pred_check_branch
    %11 = sbr.rel (0) target = $region9
  $region8: #{vae_res_forward.14} parent=0 // pred_region
    _
  $region9: #{vae_res_forward.14} parent=0 // pred_fallthru
    _
  // Predicated region
  $region10: #{vae_res_forward.14} parent=0 // pred_check
    _
  $region11: #{vae_res_forward.14} parent=0 // pred_check_branch
    %13 = sbr.rel (0) target = $region13
  $region12: #{vae_res_forward.14} parent=0 // pred_region
    _
  $region13: #{vae_res_forward.14} parent=0 // pred_fallthru
    _
  %v15 = vld [vmem:[%s0] sm:$0xff]
  %v16 = vld [vmem:[%s0 + $0x8] sm:$0xff]
  %v17 = vld [vmem:[%s0 + $0x10] sm:$0xff]
  %v18 = vld [vmem:[%s0 + $0x18] sm:$0xff]
  %v19 = vld [vmem:[%s1] sm:$0xf]
  %v20 = vld [vmem:[%s1 + $0x4] sm:$0xf]
  %v21 = vld [vmem:[%s1 + $0x8] sm:$0xf]
  %v22 = vld [vmem:[%s1 + $0xc] sm:$0xf]
  %v23 = vld [vmem:[%s1 + $0x10] sm:$0xf]
  %v24 = vld [vmem:[%s1 + $0x14] sm:$0xf]
  %v25 = vld [vmem:[%s1 + $0x18] sm:$0xf]
  %v26 = vld [vmem:[%s1 + $0x1c] sm:$0xf]
  %v27 = vld [vmem:[%s1 + $0x20] sm:$0xf]
  %v28 = vld [vmem:[%s1 + $0x24] sm:$0xf]
  %v29 = vld [vmem:[%s1 + $0x28] sm:$0xf]
  %v30 = vld [vmem:[%s1 + $0x2c] sm:$0xf]
  %v31 = vld [vmem:[%s1 + $0x30] sm:$0xf]
  %v32 = vld [vmem:[%s1 + $0x34] sm:$0xf]
  %v33 = vld [vmem:[%s1 + $0x38] sm:$0xf]
  %v34 = vld [vmem:[%s1 + $0x3c] sm:$0xf]
  %v35 = vld [vmem:[%s1 + $0x40] sm:$0xf]
  %v36 = vld [vmem:[%s1 + $0x44] sm:$0xf]
  %v37 = vld [vmem:[%s1 + $0x48] sm:$0xf]
  %v38 = vld [vmem:[%s1 + $0x4c] sm:$0xf]
  %v39 = vld [vmem:[%s1 + $0x50] sm:$0xf]
  %v40 = vld [vmem:[%s1 + $0x54] sm:$0xf]
  %v41 = vld [vmem:[%s1 + $0x58] sm:$0xf]
  %v42 = vld [vmem:[%s1 + $0x5c] sm:$0xf]
  %v43 = vld [vmem:[%s1 + $0x60] sm:$0xf]
  %v44 = vld [vmem:[%s1 + $0x64] sm:$0xf]
  %v45 = vld [vmem:[%s1 + $0x68] sm:$0xf]
  %v46 = vld [vmem:[%s1 + $0x6c] sm:$0xf]
  %v47 = vld [vmem:[%s1 + $0x70] sm:$0xf]
  %v48 = vld [vmem:[%s1 + $0x74] sm:$0xf]
  %v49 = vld [vmem:[%s1 + $0x78] sm:$0xf]
  %v50 = vld [vmem:[%s1 + $0x7c] sm:$0xf]
  %v51 = vld [vmem:[%s1 + $0x80] sm:$0xf]
  %v52 = vld [vmem:[%s1 + $0x84] sm:$0xf]
  %v53 = vld [vmem:[%s1 + $0x88] sm:$0xf]
  %v54 = vld [vmem:[%s1 + $0x8c] sm:$0xf]
  %v55 = vld [vmem:[%s1 + $0x90] sm:$0xf]
  %v56 = vld [vmem:[%s1 + $0x94] sm:$0xf]
  %v57 = vld [vmem:[%s1 + $0x98] sm:$0xf]
  %v58 = vld [vmem:[%s1 + $0x9c] sm:$0xf]
  %v59 = vld [vmem:[%s1 + $0xa0] sm:$0xf]
  %v60 = vld [vmem:[%s1 + $0xa4] sm:$0xf]
  %v61 = vld [vmem:[%s1 + $0xa8] sm:$0xf]
  %v62 = vld [vmem:[%s1 + $0xac] sm:$0xf]
  %v63 = vld [vmem:[%s1 + $0xb0] sm:$0xf]
  %v64 = vld [vmem:[%s1 + $0xb4] sm:$0xf]
  %v65 = vld [vmem:[%s1 + $0xb8] sm:$0xf]
  %v66 = vld [vmem:[%s1 + $0xbc] sm:$0xf]
  %v67 = vld [vmem:[%s1 + $0xc0] sm:$0xf]
  %v68 = vld [vmem:[%s1 + $0xc4] sm:$0xf]
  %v69 = vld [vmem:[%s2] sm:$0x1]
  %v71 = vlaneseq
  %v72 = vshrl.u32 %v71, 7
  %v73 = vsub.s32 0, %v72
  %v74 = vrot.slane %v69, %v73
  %v80 = vunpack.c.l.b16 %v15
  %v81 = vunpack.c.h.b16 %v15
  %v82 = vunpack.c.l.b16 %v16
  %v83 = vunpack.c.h.b16 %v16
  %v84 = vunpack.c.l.b16 %v17
  %v85 = vunpack.c.h.b16 %v17
  %v86 = vunpack.c.l.b16 %v18
  %v87 = vunpack.c.h.b16 %v18
  %v88 = vpack.c.b16 %v84, %v80
  %v89 = vpack.c.b16 %v85, %v81
  %v90 = vpack.c.b16 %v86, %v82
  %v91 = vpack.c.b16 %v87, %v83
  %v145 = vunpack.c.l.b16 %v19
  %v146 = vunpack.c.l.b16 %v20
  %v147 = vunpack.c.l.b16 %v21
  %v148 = vunpack.c.l.b16 %v22
  %v149 = vunpack.c.l.b16 %v23
  %v150 = vunpack.c.l.b16 %v24
  %v151 = vunpack.c.l.b16 %v25
  %v152 = vunpack.c.l.b16 %v26
  %v153 = vunpack.c.l.b16 %v27
  %v154 = vunpack.c.l.b16 %v28
  %v155 = vunpack.c.l.b16 %v29
  %v156 = vunpack.c.l.b16 %v30
  %v157 = vunpack.c.l.b16 %v31
  %v158 = vunpack.c.l.b16 %v32
  %v159 = vunpack.c.l.b16 %v33
  %v160 = vunpack.c.l.b16 %v34
  %v161 = vunpack.c.l.b16 %v35
  %v162 = vunpack.c.l.b16 %v36
  %v163 = vunpack.c.l.b16 %v37
  %v164 = vunpack.c.l.b16 %v38
  %v165 = vunpack.c.l.b16 %v39
  %v166 = vunpack.c.l.b16 %v40
  %v167 = vunpack.c.l.b16 %v41
  %v168 = vunpack.c.l.b16 %v42
  %v169 = vunpack.c.l.b16 %v43
  %v170 = vunpack.c.l.b16 %v44
  %v171 = vunpack.c.l.b16 %v45
  %v172 = vunpack.c.l.b16 %v46
  %v173 = vunpack.c.l.b16 %v47
  %v174 = vunpack.c.l.b16 %v48
  %v175 = vunpack.c.l.b16 %v49
  %v176 = vunpack.c.l.b16 %v50
  %v177 = vunpack.c.l.b16 %v51
  %v178 = vunpack.c.l.b16 %v52
  %v179 = vunpack.c.l.b16 %v53
  %v180 = vunpack.c.l.b16 %v54
  %v181 = vunpack.c.l.b16 %v55
  %v182 = vunpack.c.l.b16 %v56
  %v183 = vunpack.c.l.b16 %v57
  %v184 = vunpack.c.l.b16 %v58
  %v185 = vunpack.c.l.b16 %v59
  %v186 = vunpack.c.l.b16 %v60
  %v187 = vunpack.c.l.b16 %v61
  %v188 = vunpack.c.l.b16 %v62
  %v189 = vunpack.c.l.b16 %v63
  %v190 = vunpack.c.l.b16 %v64
  %v191 = vunpack.c.l.b16 %v65
  %v192 = vunpack.c.l.b16 %v66
  %v193 = vunpack.c.l.b16 %v67
  %v194 = vunpack.c.l.b16 %v68
  %v195 = vpack.c.b16 %v146, %v145
  %v196 = vpack.c.b16 %v148, %v147
  %v197 = vpack.c.b16 %v150, %v149
  %v198 = vpack.c.b16 %v152, %v151
  %v199 = vpack.c.b16 %v154, %v153
  %v200 = vpack.c.b16 %v156, %v155
  %v201 = vpack.c.b16 %v158, %v157
  %v202 = vpack.c.b16 %v160, %v159
  %v203 = vpack.c.b16 %v162, %v161
  %v204 = vpack.c.b16 %v164, %v163
  %v205 = vpack.c.b16 %v166, %v165
  %v206 = vpack.c.b16 %v168, %v167
  %v207 = vpack.c.b16 %v170, %v169
  %v208 = vpack.c.b16 %v172, %v171
  %v209 = vpack.c.b16 %v174, %v173
  %v210 = vpack.c.b16 %v176, %v175
  %v211 = vpack.c.b16 %v178, %v177
  %v212 = vpack.c.b16 %v180, %v179
  %v213 = vpack.c.b16 %v182, %v181
  %v214 = vpack.c.b16 %v184, %v183
  %v215 = vpack.c.b16 %v186, %v185
  %v216 = vpack.c.b16 %v188, %v187
  %v217 = vpack.c.b16 %v190, %v189
  %v218 = vpack.c.b16 %v192, %v191
  %v219 = vpack.c.b16 %v194, %v193
  %vm245 = vcmask 130048
  %v247 = vsel %vm245, %v91, 0
  %249 = vmatprep.subr.bf16.mxu0 0
  %250 = vmatpush1.bf16.msra.mxu0 %v195
  %251 = vmatprep.subr.bf16.mxu0 0
  %252 = vmatpush1.bf16.msra.mxu0 %v196
  %253 = vmatprep.subr.bf16.mxu0 0
  %254 = vmatpush1.bf16.msra.mxu0 %v197
  %255 = vmatprep.subr.bf16.mxu0 0
  %256 = vmatpush1.bf16.msra.mxu0 %v198
  %257 = vmatprep.subr.bf16.mxu0 0
  %258 = vmatpush1.bf16.msra.mxu0 %v199
  %259 = vmatprep.subr.bf16.mxu0 0
  %260 = vmatpush1.bf16.msra.mxu0 %v200
  %261 = vmatprep.subr.bf16.mxu0 0
  %262 = vmatpush1.bf16.msra.mxu0 %v201
  %263 = vmatprep.subr.bf16.mxu0 0
  %264 = vmatpush1.bf16.msra.mxu0 %v202
  %265 = vmatprep.subr.bf16.mxu0 0
  %266 = vmatpush1.bf16.msra.mxu0 %v203
  %267 = vmatprep.subr.bf16.mxu0 0
  %268 = vmatpush1.bf16.msra.mxu0 %v204
  %269 = vmatprep.subr.bf16.mxu0 0
  %270 = vmatpush1.bf16.msra.mxu0 %v205
  %271 = vmatprep.subr.bf16.mxu0 0
  %272 = vmatpush1.bf16.msra.mxu0 %v206
  %273 = vmatprep.subr.bf16.mxu0 0
  %274 = vmatpush1.bf16.msra.mxu0 %v207
  %275 = vmatprep.subr.bf16.mxu0 0
  %276 = vmatpush1.bf16.msra.mxu0 %v208
  %277 = vmatprep.subr.bf16.mxu0 0
  %278 = vmatpush1.bf16.msra.mxu0 %v209
  %279 = vmatprep.subr.bf16.mxu0 0
  %280 = vmatpush1.bf16.msra.mxu0 %v210
  %281 = vmatprep.mubr.bf16.mxu0 %v89
  %282 = vmatmul.mubr.bf16.gmra.mrb[0].mxu0 %v88
  %v283 = vpop.f32.mrb[0].mxu0
  %v284 = vadd.f32 %v74, %v283
  %v285 = vpop.f32.mrb[0].mxu0
  %v286 = vpop.f32.mrb[0].mxu0
  %v287 = vadd.f32 %v74, %v286
  %v288 = vpop.f32.mrb[0].mxu0
  %289 = vdwg.mxu0
  %290 = vmatprep.subr.bf16.mxu0 0
  %291 = vmatpush1.bf16.msra.mxu0 %v211
  %292 = vmatprep.subr.bf16.mxu0 0
  %293 = vmatpush1.bf16.msra.mxu0 %v212
  %294 = vmatprep.subr.bf16.mxu0 0
  %295 = vmatpush1.bf16.msra.mxu0 %v213
  %296 = vmatprep.subr.bf16.mxu0 0
  %297 = vmatpush1.bf16.msra.mxu0 %v214
  %298 = vmatprep.subr.bf16.mxu0 0
  %299 = vmatpush1.bf16.msra.mxu0 %v215
  %300 = vmatprep.subr.bf16.mxu0 0
  %301 = vmatpush1.bf16.msra.mxu0 %v216
  %302 = vmatprep.subr.bf16.mxu0 0
  %303 = vmatpush1.bf16.msra.mxu0 %v217
  %304 = vmatprep.subr.bf16.mxu0 0
  %305 = vmatpush1.bf16.msra.mxu0 %v218
  %306 = vmatprep.subr.bf16.mxu0 0
  %307 = vmatpush1.bf16.msra.mxu0 %v219
  %308 = vmatprep.subr.bf16.mxu0 0
  %309 = vmatpush1.bf16.msra.mxu0 0
  %310 = vmatprep.subr.bf16.mxu0 0
  %311 = vmatpush1.bf16.msra.mxu0 0
  %312 = vmatprep.subr.bf16.mxu0 0
  %313 = vmatpush1.bf16.msra.mxu0 0
  %314 = vmatprep.subr.bf16.mxu0 0
  %315 = vmatpush1.bf16.msra.mxu0 0
  %316 = vmatprep.subr.bf16.mxu0 0
  %317 = vmatpush1.bf16.msra.mxu0 0
  %318 = vmatprep.subr.bf16.mxu0 0
  %319 = vmatpush1.bf16.msra.mxu0 0
  %320 = vmatprep.subr.bf16.mxu0 0
  %321 = vmatpush1.bf16.msra.mxu0 0
  %322 = vmatprep.mubr.bf16.mxu0 %v247
  %323 = vmatmul.mubr.bf16.gmra.mrb[0].mxu0 %v90
  %v324 = vpop.f32.mrb[0].mxu0
  %v325 = vadd.f32 %v284, %v324
  %v326 = vpop.f32.mrb[0].mxu0
  %v327 = vpop.f32.mrb[0].mxu0
  %v328 = vadd.f32 %v287, %v327
  %v329 = vpop.f32.mrb[0].mxu0
  %330 = vdwg.mxu0
  %vm331 = vcmask 523264
  %332 = vst.msk [vmem:[%s3] sm:$0xff] %vm331, %v325
  %333 = vst.msk [vmem:[%s3 + $0x8] sm:$0xff] %vm331, %v328
  // Predicated region
  $region14: #{vae_res_forward.14} parent=0 // pred_check
    _
  $region15: #{vae_res_forward.14} parent=0 // pred_check_branch
    %335 = sbr.rel (0) target = $region17
  $region16: #{vae_res_forward.14} parent=0 // pred_region
    _
  $region17: #{vae_res_forward.14} parent=0 // pred_fallthru
    _
  // Predicated region
  $region18: #{vae_res_forward.14} parent=0 // pred_check
    _
  $region19: #{vae_res_forward.14} parent=0 // pred_check_branch
    %337 = sbr.rel (0) target = $region21
  $region20: #{vae_res_forward.14} parent=0 // pred_region
    _
  $region21: #{vae_res_forward.14} parent=0 // pred_fallthru
    _

// kernel: vae_res_forward.15
$region0: #{vae_res_forward.15}
  #allocation0 [shape = 'u32[]', space=smem, size = 0x4, offset = 0x4, fixed_abs, tag = 'smem constant byte address 0x4 - core index']
  #allocation1 [shape = 'u32[144,128]{1,0:T(1,128)}', space=vmem, size = 0x12000, scoped, tag = 'internal scratch']
  %s0 = inlined_call_operand.vmem [shape: bf16[16,128], index: 0, kind: input, shape index: {}]
  %s1 = inlined_call_operand.vmem [shape: bf16[128,288], index: 1, kind: input, shape index: {}]
  %s2 = inlined_call_operand.vmem [shape: f32[1,288], index: 2, kind: input, shape index: {}]
  %s3 = inlined_call_operand.vmem [shape: bf16[16,288], index: 3, kind: output, shape index: {}]
  %s4 = sld [smem:[#allocation0]]
  $region22: #{vae_res_forward.15} parent=0
    _
  %s6 = ssub.s32 1, %s4
  %s7 = scalar_select 0, %s6, %s4
  // Predicated region
  $region2: #{vae_res_forward.15} parent=0 // pred_check
    _
  $region3: #{vae_res_forward.15} parent=0 // pred_check_branch
    %9 = sbr.rel (0) target = $region5
  $region4: #{vae_res_forward.15} parent=0 // pred_region
    _
  $region5: #{vae_res_forward.15} parent=0 // pred_fallthru
    _
  // Predicated region
  $region6: #{vae_res_forward.15} parent=0 // pred_check
    _
  $region7: #{vae_res_forward.15} parent=0 // pred_check_branch
    %11 = sbr.rel (0) target = $region9
  $region8: #{vae_res_forward.15} parent=0 // pred_region
    _
  $region9: #{vae_res_forward.15} parent=0 // pred_fallthru
    _
  // Predicated region
  $region10: #{vae_res_forward.15} parent=0 // pred_check
    _
  $region11: #{vae_res_forward.15} parent=0 // pred_check_branch
    %13 = sbr.rel (0) target = $region13
  $region12: #{vae_res_forward.15} parent=0 // pred_region
    _
  $region13: #{vae_res_forward.15} parent=0 // pred_fallthru
    _
  %v15 = vld [vmem:[%s0] sm:$0xf]
  %v16 = vld [vmem:[%s0 + $0x4] sm:$0xf]
  %v17 = vld [vmem:[%s1] sm:$0xff]
  %v18 = vld [vmem:[%s1 + $0x8] sm:$0xf]
  %v19 = vld [vmem:[%s1 + $0xc] sm:$0xff]
  %v20 = vld [vmem:[%s1 + $0x14] sm:$0xf]
  %v21 = vld [vmem:[%s1 + $0x18] sm:$0xff]
  %v22 = vld [vmem:[%s1 + $0x20] sm:$0xf]
  %v23 = vld [vmem:[%s1 + $0x24] sm:$0xff]
  %v24 = vld [vmem:[%s1 + $0x2c] sm:$0xf]
  %v25 = vld [vmem:[%s1 + $0x30] sm:$0xff]
  %v26 = vld [vmem:[%s1 + $0x38] sm:$0xf]
  %v27 = vld [vmem:[%s1 + $0x3c] sm:$0xff]
  %v28 = vld [vmem:[%s1 + $0x44] sm:$0xf]
  %v29 = vld [vmem:[%s1 + $0x48] sm:$0xff]
  %v30 = vld [vmem:[%s1 + $0x50] sm:$0xf]
  %v31 = vld [vmem:[%s1 + $0x54] sm:$0xff]
  %v32 = vld [vmem:[%s1 + $0x5c] sm:$0xf]
  %v33 = vld [vmem:[%s1 + $0x60] sm:$0xff]
  %v34 = vld [vmem:[%s1 + $0x68] sm:$0xf]
  %v35 = vld [vmem:[%s1 + $0x6c] sm:$0xff]
  %v36 = vld [vmem:[%s1 + $0x74] sm:$0xf]
  %v37 = vld [vmem:[%s1 + $0x78] sm:$0xff]
  %v38 = vld [vmem:[%s1 + $0x80] sm:$0xf]
  %v39 = vld [vmem:[%s1 + $0x84] sm:$0xff]
  %v40 = vld [vmem:[%s1 + $0x8c] sm:$0xf]
  %v41 = vld [vmem:[%s1 + $0x90] sm:$0xff]
  %v42 = vld [vmem:[%s1 + $0x98] sm:$0xf]
  %v43 = vld [vmem:[%s1 + $0x9c] sm:$0xff]
  %v44 = vld [vmem:[%s1 + $0xa4] sm:$0xf]
  %v45 = vld [vmem:[%s1 + $0xa8] sm:$0xff]
  %v46 = vld [vmem:[%s1 + $0xb0] sm:$0xf]
  %v47 = vld [vmem:[%s1 + $0xb4] sm:$0xff]
  %v48 = vld [vmem:[%s1 + $0xbc] sm:$0xf]
  %v49 = vld [vmem:[%s2] sm:$0x7]
  %v51 = vlaneseq
  %v52 = vshrl.u32 %v51, 7
  %v53 = vsub.s32 0, %v52
  %v54 = vrot.slane %v49, %v53
  %v55 = vlaneseq
  %v56 = vshrl.u32 %v55, 7
  %v57 = vsub.s32 1, %v56
  %v58 = vrot.slane %v49, %v57
  %v59 = vlaneseq
  %v60 = vshrl.u32 %v59, 7
  %v61 = vsub.s32 2, %v60
  %v62 = vrot.slane %v49, %v61
  %v68 = vunpack.c.l.b16 %v15
  %v69 = vunpack.c.l.b16 %v16
  %v70 = vpack.c.b16 %v69, %v68
  %v104 = vunpack.c.l.b16 %v17
  %v105 = vunpack.c.h.b16 %v17
  %v106 = vunpack.c.l.b16 %v18
  %v107 = vunpack.c.l.b16 %v19
  %v108 = vunpack.c.h.b16 %v19
  %v109 = vunpack.c.l.b16 %v20
  %v110 = vunpack.c.l.b16 %v21
  %v111 = vunpack.c.h.b16 %v21
  %v112 = vunpack.c.l.b16 %v22
  %v113 = vunpack.c.l.b16 %v23
  %v114 = vunpack.c.h.b16 %v23
  %v115 = vunpack.c.l.b16 %v24
  %v116 = vunpack.c.l.b16 %v25
  %v117 = vunpack.c.h.b16 %v25
  %v118 = vunpack.c.l.b16 %v26
  %v119 = vunpack.c.l.b16 %v27
  %v120 = vunpack.c.h.b16 %v27
  %v121 = vunpack.c.l.b16 %v28
  %v122 = vunpack.c.l.b16 %v29
  %v123 = vunpack.c.h.b16 %v29
  %v124 = vunpack.c.l.b16 %v30
  %v125 = vunpack.c.l.b16 %v31
  %v126 = vunpack.c.h.b16 %v31
  %v127 = vunpack.c.l.b16 %v32
  %v128 = vunpack.c.l.b16 %v33
  %v129 = vunpack.c.h.b16 %v33
  %v130 = vunpack.c.l.b16 %v34
  %v131 = vunpack.c.l.b16 %v35
  %v132 = vunpack.c.h.b16 %v35
  %v133 = vunpack.c.l.b16 %v36
  %v134 = vunpack.c.l.b16 %v37
  %v135 = vunpack.c.h.b16 %v37
  %v136 = vunpack.c.l.b16 %v38
  %v137 = vunpack.c.l.b16 %v39
  %v138 = vunpack.c.h.b16 %v39
  %v139 = vunpack.c.l.b16 %v40
  %v140 = vunpack.c.l.b16 %v41
  %v141 = vunpack.c.h.b16 %v41
  %v142 = vunpack.c.l.b16 %v42
  %v143 = vunpack.c.l.b16 %v43
  %v144 = vunpack.c.h.b16 %v43
  %v145 = vunpack.c.l.b16 %v44
  %v146 = vunpack.c.l.b16 %v45
  %v147 = vunpack.c.h.b16 %v45
  %v148 = vunpack.c.l.b16 %v46
  %v149 = vunpack.c.l.b16 %v47
  %v150 = vunpack.c.h.b16 %v47
  %v151 = vunpack.c.l.b16 %v48
  %v152 = vpack.c.b16 %v107, %v104
  %v153 = vpack.c.b16 %v108, %v105
  %v154 = vpack.c.b16 %v109, %v106
  %v155 = vpack.c.b16 %v113, %v110
  %v156 = vpack.c.b16 %v114, %v111
  %v157 = vpack.c.b16 %v115, %v112
  %v158 = vpack.c.b16 %v119, %v116
  %v159 = vpack.c.b16 %v120, %v117
  %v160 = vpack.c.b16 %v121, %v118
  %v161 = vpack.c.b16 %v125, %v122
  %v162 = vpack.c.b16 %v126, %v123
  %v163 = vpack.c.b16 %v127, %v124
  %v164 = vpack.c.b16 %v131, %v128
  %v165 = vpack.c.b16 %v132, %v129
  %v166 = vpack.c.b16 %v133, %v130
  %v167 = vpack.c.b16 %v137, %v134
  %v168 = vpack.c.b16 %v138, %v135
  %v169 = vpack.c.b16 %v139, %v136
  %v170 = vpack.c.b16 %v143, %v140
  %v171 = vpack.c.b16 %v144, %v141
  %v172 = vpack.c.b16 %v145, %v142
  %v173 = vpack.c.b16 %v149, %v146
  %v174 = vpack.c.b16 %v150, %v147
  %v175 = vpack.c.b16 %v151, %v148
  %200 = vmatprep.subr.bf16.mxu0 %v153
  %201 = vmatpush1.bf16.msra.mxu0 %v152
  %202 = vmatprep.subr.bf16.mxu0 %v156
  %203 = vmatpush1.bf16.msra.mxu0 %v155
  %204 = vmatprep.subr.bf16.mxu0 %v159
  %205 = vmatpush1.bf16.msra.mxu0 %v158
  %206 = vmatprep.subr.bf16.mxu0 %v162
  %207 = vmatpush1.bf16.msra.mxu0 %v161
  %208 = vmatprep.subr.bf16.mxu0 %v165
  %209 = vmatpush1.bf16.msra.mxu0 %v164
  %210 = vmatprep.subr.bf16.mxu0 %v168
  %211 = vmatpush1.bf16.msra.mxu0 %v167
  %212 = vmatprep.subr.bf16.mxu0 %v171
  %213 = vmatpush1.bf16.msra.mxu0 %v170
  %214 = vmatprep.subr.bf16.mxu0 %v174
  %215 = vmatpush1.bf16.msra.mxu0 %v173
  %216 = vmatprep.subr.bf16.mxu0 0
  %217 = vmatpush1.bf16.msra.mxu0 0
  %218 = vmatprep.subr.bf16.mxu0 0
  %219 = vmatpush1.bf16.msra.mxu0 0
  %220 = vmatprep.subr.bf16.mxu0 0
  %221 = vmatpush1.bf16.msra.mxu0 0
  %222 = vmatprep.subr.bf16.mxu0 0
  %223 = vmatpush1.bf16.msra.mxu0 0
  %224 = vmatprep.subr.bf16.mxu0 0
  %225 = vmatpush1.bf16.msra.mxu0 0
  %226 = vmatprep.subr.bf16.mxu0 0
  %227 = vmatpush1.bf16.msra.mxu0 0
  %228 = vmatprep.subr.bf16.mxu0 0
  %229 = vmatpush1.bf16.msra.mxu0 0
  %230 = vmatprep.subr.bf16.mxu0 0
  %231 = vmatpush1.bf16.msra.mxu0 0
  %232 = vmatprep.mubr.bf16.mxu0 0
  %233 = vmatmul.mubr.bf16.gmra.mrb[0].mxu0 %v70
  %v234 = vpop.f32.mrb[0].mxu0
  %v235 = vadd.f32 %v54, %v234
  %v236 = vpop.f32.mrb[0].mxu0
  %v237 = vadd.f32 %v58, %v236
  %v238 = vpop.f32.mrb[0].mxu0
  %v239 = vadd.f32 %v54, %v238
  %v240 = vpop.f32.mrb[0].mxu0
  %v241 = vadd.f32 %v58, %v240
  %242 = vdwg.mxu0
  %243 = vmatprep.subr.bf16.mxu0 0
  %244 = vmatpush1.bf16.msra.mxu0 %v154
  %245 = vmatprep.subr.bf16.mxu0 0
  %246 = vmatpush1.bf16.msra.mxu0 %v157
  %247 = vmatprep.subr.bf16.mxu0 0
  %248 = vmatpush1.bf16.msra.mxu0 %v160
  %249 = vmatprep.subr.bf16.mxu0 0
  %250 = vmatpush1.bf16.msra.mxu0 %v163
  %251 = vmatprep.subr.bf16.mxu0 0
  %252 = vmatpush1.bf16.msra.mxu0 %v166
  %253 = vmatprep.subr.bf16.mxu0 0
  %254 = vmatpush1.bf16.msra.mxu0 %v169
  %255 = vmatprep.subr.bf16.mxu0 0
  %256 = vmatpush1.bf16.msra.mxu0 %v172
  %257 = vmatprep.subr.bf16.mxu0 0
  %258 = vmatpush1.bf16.msra.mxu0 %v175
  %259 = vmatprep.subr.bf16.mxu0 0
  %260 = vmatpush1.bf16.msra.mxu0 0
  %261 = vmatprep.subr.bf16.mxu0 0
  %262 = vmatpush1.bf16.msra.mxu0 0
  %263 = vmatprep.subr.bf16.mxu0 0
  %264 = vmatpush1.bf16.msra.mxu0 0
  %265 = vmatprep.subr.bf16.mxu0 0
  %266 = vmatpush1.bf16.msra.mxu0 0
  %267 = vmatprep.subr.bf16.mxu0 0
  %268 = vmatpush1.bf16.msra.mxu0 0
  %269 = vmatprep.subr.bf16.mxu0 0
  %270 = vmatpush1.bf16.msra.mxu0 0
  %271 = vmatprep.subr.bf16.mxu0 0
  %272 = vmatpush1.bf16.msra.mxu0 0
  %273 = vmatprep.subr.bf16.mxu0 0
  %274 = vmatpush1.bf16.msra.mxu0 0
  %275 = vmatprep.mubr.bf16.mxu0 0
  %276 = vmatmul.mubr.bf16.gmra.mrb[0].mxu0 %v70
  %v277 = vpop.f32.mrb[0].mxu0
  %v278 = vadd.f32 %v62, %v277
  %v279 = vpop.f32.mrb[0].mxu0
  %v280 = vpop.f32.mrb[0].mxu0
  %v281 = vadd.f32 %v62, %v280
  %v282 = vpop.f32.mrb[0].mxu0
  %283 = vdwg.mxu0
  %v284 = vmax.f32 %v235, 0.0
  %v285 = vmax.f32 %v237, 0.0
  %v286 = vmax.f32 %v278, 0.0
  %v287 = vmax.f32 %v239, 0.0
  %v288 = vmax.f32 %v241, 0.0
  %v289 = vmax.f32 %v281, 0.0
  %v290 = vpack.c.bf16 %v287, %v284
  %v291 = vpack.c.bf16 %v288, %v285
  %v292 = vpack.c.bf16 %v289, %v286
  %v296 = vunpack.c.l.b16 %v290
  %v297 = vunpack.c.l.b16 %v291
  %v298 = vunpack.c.l.b16 %v292
  %v299 = vunpack.c.h.b16 %v290
  %v300 = vunpack.c.h.b16 %v291
  %v301 = vunpack.c.h.b16 %v292
  %v302 = vpack.c.b16 %v297, %v296
  %v303 = vpack.c.b16 %v298, %v298
  %v304 = vpack.c.b16 %v300, %v299
  %v305 = vpack.c.b16 %v301, %v301
  %310 = vst [vmem:[%s3] sm:$0xff] %v302
  %vm311 = vcmask 257024
  %312 = vst.msk [vmem:[%s3 + $0x8] sm:$0xf] %vm311, %v303
  %313 = vst [vmem:[%s3 + $0xc] sm:$0xff] %v304
  %314 = vst.msk [vmem:[%s3 + $0x14] sm:$0xf] %vm311, %v305
  // Predicated region
  $region14: #{vae_res_forward.15} parent=0 // pred_check
    _
  $region15: #{vae_res_forward.15} parent=0 // pred_check_branch
    %316 = sbr.rel (0) target = $region17
  $region16: #{vae_res_forward.15} parent=0 // pred_region
    _
  $region17: #{vae_res_forward.15} parent=0 // pred_fallthru
    _
  // Predicated region
  $region18: #{vae_res_forward.15} parent=0 // pred_check
    _
  $region19: #{vae_res_forward.15} parent=0 // pred_check_branch
    %318 = sbr.rel (0) target = $region21
  $region20: #{vae_res_forward.15} parent=0 // pred_region
    _
  $region21: #{vae_res_forward.15} parent=0 // pred_fallthru
    _

// kernel: vae_res_forward.17
$region0: #{vae_res_forward.17}
  #allocation0 [shape = 'u32[]', space=smem, size = 0x4, offset = 0x4, fixed_abs, tag = 'smem constant byte address 0x4 - core index']
  #allocation1 [shape = 'u32[144,128]{1,0:T(1,128)}', space=vmem, size = 0x12000, scoped, tag = 'internal scratch']
  %s0 = inlined_call_operand.vmem [shape: bf16[112,288], index: 0, kind: input, shape index: {}]
  %s1 = inlined_call_operand.vmem [shape: bf16[288,32], index: 1, kind: input, shape index: {}]
  %s2 = inlined_call_operand.vmem [shape: f32[1,32], index: 2, kind: input, shape index: {}]
  %s3 = inlined_call_operand.vmem [shape: f32[112,32], index: 3, kind: output, shape index: {}]
  %s4 = sld [smem:[#allocation0]]
  $region22: #{vae_res_forward.17} parent=0
    _
  %s6 = ssub.s32 1, %s4
  %s7 = scalar_select 0, %s6, %s4
  // Predicated region
  $region2: #{vae_res_forward.17} parent=0 // pred_check
    _
  $region3: #{vae_res_forward.17} parent=0 // pred_check_branch
    %9 = sbr.rel (0) target = $region5
  $region4: #{vae_res_forward.17} parent=0 // pred_region
    _
  $region5: #{vae_res_forward.17} parent=0 // pred_fallthru
    _
  // Predicated region
  $region6: #{vae_res_forward.17} parent=0 // pred_check
    _
  $region7: #{vae_res_forward.17} parent=0 // pred_check_branch
    %11 = sbr.rel (0) target = $region9
  $region8: #{vae_res_forward.17} parent=0 // pred_region
    _
  $region9: #{vae_res_forward.17} parent=0 // pred_fallthru
    _
  // Predicated region
  $region10: #{vae_res_forward.17} parent=0 // pred_check
    _
  $region11: #{vae_res_forward.17} parent=0 // pred_check_branch
    %13 = sbr.rel (0) target = $region13
  $region12: #{vae_res_forward.17} parent=0 // pred_region
    _
  $region13: #{vae_res_forward.17} parent=0 // pred_fallthru
    _
  %v15 = vld [vmem:[%s0] sm:$0xff]
  %v16 = vld [vmem:[%s0 + $0x8] sm:$0xf]
  %v17 = vld [vmem:[%s0 + $0xc] sm:$0xff]
  %v18 = vld [vmem:[%s0 + $0x14] sm:$0xf]
  %v19 = vld [vmem:[%s0 + $0x18] sm:$0xff]
  %v20 = vld [vmem:[%s0 + $0x20] sm:$0xf]
  %v21 = vld [vmem:[%s0 + $0x24] sm:$0xff]
  %v22 = vld [vmem:[%s0 + $0x2c] sm:$0xf]
  %v23 = vld [vmem:[%s0 + $0x30] sm:$0xff]
  %v24 = vld [vmem:[%s0 + $0x38] sm:$0xf]
  %v25 = vld [vmem:[%s0 + $0x3c] sm:$0xff]
  %v26 = vld [vmem:[%s0 + $0x44] sm:$0xf]
  %v27 = vld [vmem:[%s0 + $0x48] sm:$0xff]
  %v28 = vld [vmem:[%s0 + $0x50] sm:$0xf]
  %v29 = vld [vmem:[%s0 + $0x54] sm:$0xff]
  %v30 = vld [vmem:[%s0 + $0x5c] sm:$0xf]
  %v31 = vld [vmem:[%s0 + $0x60] sm:$0xff]
  %v32 = vld [vmem:[%s0 + $0x68] sm:$0xf]
  %v33 = vld [vmem:[%s0 + $0x6c] sm:$0xff]
  %v34 = vld [vmem:[%s0 + $0x74] sm:$0xf]
  %v35 = vld [vmem:[%s0 + $0x78] sm:$0xff]
  %v36 = vld [vmem:[%s0 + $0x80] sm:$0xf]
  %v37 = vld [vmem:[%s0 + $0x84] sm:$0xff]
  %v38 = vld [vmem:[%s0 + $0x8c] sm:$0xf]
  %v39 = vld [vmem:[%s0 + $0x90] sm:$0xff]
  %v40 = vld [vmem:[%s0 + $0x98] sm:$0xf]
  %v41 = vld [vmem:[%s0 + $0x9c] sm:$0xff]
  %v42 = vld [vmem:[%s0 + $0xa4] sm:$0xf]
  %v43 = vld [vmem:[%s1] sm:$0xf]
  %v44 = vld [vmem:[%s1 + $0x4] sm:$0xf]
  %v45 = vld [vmem:[%s1 + $0x8] sm:$0xf]
  %v46 = vld [vmem:[%s1 + $0xc] sm:$0xf]
  %v47 = vld [vmem:[%s1 + $0x10] sm:$0xf]
  %v48 = vld [vmem:[%s1 + $0x14] sm:$0xf]
  %v49 = vld [vmem:[%s1 + $0x18] sm:$0xf]
  %v50 = vld [vmem:[%s1 + $0x1c] sm:$0xf]
  %v51 = vld [vmem:[%s1 + $0x20] sm:$0xf]
  %v52 = vld [vmem:[%s1 + $0x24] sm:$0xf]
  %v53 = vld [vmem:[%s1 + $0x28] sm:$0xf]
  %v54 = vld [vmem:[%s1 + $0x2c] sm:$0xf]
  %v55 = vld [vmem:[%s1 + $0x30] sm:$0xf]
  %v56 = vld [vmem:[%s1 + $0x34] sm:$0xf]
  %v57 = vld [vmem:[%s1 + $0x38] sm:$0xf]
  %v58 = vld [vmem:[%s1 + $0x3c] sm:$0xf]
  %v59 = vld [vmem:[%s1 + $0x40] sm:$0xf]
  %v60 = vld [vmem:[%s1 + $0x44] sm:$0xf]
  %v61 = vld [vmem:[%s1 + $0x48] sm:$0xf]
  %v62 = vld [vmem:[%s1 + $0x4c] sm:$0xf]
  %v63 = vld [vmem:[%s1 + $0x50] sm:$0xf]
  %v64 = vld [vmem:[%s1 + $0x54] sm:$0xf]
  %v65 = vld [vmem:[%s1 + $0x58] sm:$0xf]
  %v66 = vld [vmem:[%s1 + $0x5c] sm:$0xf]
  %v67 = vld [vmem:[%s1 + $0x60] sm:$0xf]
  %v68 = vld [vmem:[%s1 + $0x64] sm:$0xf]
  %v69 = vld [vmem:[%s1 + $0x68] sm:$0xf]
  %v70 = vld [vmem:[%s1 + $0x6c] sm:$0xf]
  %v71 = vld [vmem:[%s1 + $0x70] sm:$0xf]
  %v72 = vld [vmem:[%s1 + $0x74] sm:$0xf]
  %v73 = vld [vmem:[%s1 + $0x78] sm:$0xf]
  %v74 = vld [vmem:[%s1 + $0x7c] sm:$0xf]
  %v75 = vld [vmem:[%s1 + $0x80] sm:$0xf]
  %v76 = vld [vmem:[%s1 + $0x84] sm:$0xf]
  %v77 = vld [vmem:[%s1 + $0x88] sm:$0xf]
  %v78 = vld [vmem:[%s1 + $0x8c] sm:$0xf]
  %v79 = vld [vmem:[%s2] sm:$0x1]
  %v81 = vlaneseq
  %v82 = vshrl.u32 %v81, 7
  %v83 = vsub.s32 0, %v82
  %v84 = vrot.slane %v79, %v83
  %v114 = vunpack.c.l.b16 %v15
  %v115 = vunpack.c.h.b16 %v15
  %v116 = vunpack.c.l.b16 %v16
  %v117 = vunpack.c.l.b16 %v17
  %v118 = vunpack.c.h.b16 %v17
  %v119 = vunpack.c.l.b16 %v18
  %v120 = vunpack.c.l.b16 %v19
  %v121 = vunpack.c.h.b16 %v19
  %v122 = vunpack.c.l.b16 %v20
  %v123 = vunpack.c.l.b16 %v21
  %v124 = vunpack.c.h.b16 %v21
  %v125 = vunpack.c.l.b16 %v22
  %v126 = vunpack.c.l.b16 %v23
  %v127 = vunpack.c.h.b16 %v23
  %v128 = vunpack.c.l.b16 %v24
  %v129 = vunpack.c.l.b16 %v25
  %v130 = vunpack.c.h.b16 %v25
  %v131 = vunpack.c.l.b16 %v26
  %v132 = vunpack.c.l.b16 %v27
  %v133 = vunpack.c.h.b16 %v27
  %v134 = vunpack.c.l.b16 %v28
  %v135 = vunpack.c.l.b16 %v29
  %v136 = vunpack.c.h.b16 %v29
  %v137 = vunpack.c.l.b16 %v30
  %v138 = vunpack.c.l.b16 %v31
  %v139 = vunpack.c.h.b16 %v31
  %v140 = vunpack.c.l.b16 %v32
  %v141 = vunpack.c.l.b16 %v33
  %v142 = vunpack.c.h.b16 %v33
  %v143 = vunpack.c.l.b16 %v34
  %v144 = vunpack.c.l.b16 %v35
  %v145 = vunpack.c.h.b16 %v35
  %v146 = vunpack.c.l.b16 %v36
  %v147 = vunpack.c.l.b16 %v37
  %v148 = vunpack.c.h.b16 %v37
  %v149 = vunpack.c.l.b16 %v38
  %v150 = vunpack.c.l.b16 %v39
  %v151 = vunpack.c.h.b16 %v39
  %v152 = vunpack.c.l.b16 %v40
  %v153 = vunpack.c.l.b16 %v41
  %v154 = vunpack.c.h.b16 %v41
  %v155 = vunpack.c.l.b16 %v42
  %v156 = vpack.c.b16 %v117, %v114
  %v157 = vpack.c.b16 %v118, %v115
  %v158 = vpack.c.b16 %v119, %v116
  %v159 = vpack.c.b16 %v123, %v120
  %v160 = vpack.c.b16 %v124, %v121
  %v161 = vpack.c.b16 %v125, %v122
  %v162 = vpack.c.b16 %v129, %v126
  %v163 = vpack.c.b16 %v130, %v127
  %v164 = vpack.c.b16 %v131, %v128
  %v165 = vpack.c.b16 %v135, %v132
  %v166 = vpack.c.b16 %v136, %v133
  %v167 = vpack.c.b16 %v137, %v134
  %v168 = vpack.c.b16 %v141, %v138
  %v169 = vpack.c.b16 %v142, %v139
  %v170 = vpack.c.b16 %v143, %v140
  %v171 = vpack.c.b16 %v147, %v144
  %v172 = vpack.c.b16 %v148, %v145
  %v173 = vpack.c.b16 %v149, %v146
  %v174 = vpack.c.b16 %v153, %v150
  %v175 = vpack.c.b16 %v154, %v151
  %v176 = vpack.c.b16 %v155, %v152
  %v227 = vunpack.c.l.b16 %v43
  %v228 = vunpack.c.l.b16 %v44
  %v229 = vunpack.c.l.b16 %v45
  %v230 = vunpack.c.l.b16 %v46
  %v231 = vunpack.c.l.b16 %v47
  %v232 = vunpack.c.l.b16 %v48
  %v233 = vunpack.c.l.b16 %v49
  %v234 = vunpack.c.l.b16 %v50
  %v235 = vunpack.c.l.b16 %v51
  %v236 = vunpack.c.l.b16 %v52
  %v237 = vunpack.c.l.b16 %v53
  %v238 = vunpack.c.l.b16 %v54
  %v239 = vunpack.c.l.b16 %v55
  %v240 = vunpack.c.l.b16 %v56
  %v241 = vunpack.c.l.b16 %v57
  %v242 = vunpack.c.l.b16 %v58
  %v243 = vunpack.c.l.b16 %v59
  %v244 = vunpack.c.l.b16 %v60
  %v245 = vunpack.c.l.b16 %v61
  %v246 = vunpack.c.l.b16 %v62
  %v247 = vunpack.c.l.b16 %v63
  %v248 = vunpack.c.l.b16 %v64
  %v249 = vunpack.c.l.b16 %v65
  %v250 = vunpack.c.l.b16 %v66
  %v251 = vunpack.c.l.b16 %v67
  %v252 = vunpack.c.l.b16 %v68
  %v253 = vunpack.c.l.b16 %v69
  %v254 = vunpack.c.l.b16 %v70
  %v255 = vunpack.c.l.b16 %v71
  %v256 = vunpack.c.l.b16 %v72
  %v257 = vunpack.c.l.b16 %v73
  %v258 = vunpack.c.l.b16 %v74
  %v259 = vunpack.c.l.b16 %v75
  %v260 = vunpack.c.l.b16 %v76
  %v261 = vunpack.c.l.b16 %v77
  %v262 = vunpack.c.l.b16 %v78
  %v263 = vpack.c.b16 %v228, %v227
  %v264 = vpack.c.b16 %v230, %v229
  %v265 = vpack.c.b16 %v232, %v231
  %v266 = vpack.c.b16 %v234, %v233
  %v267 = vpack.c.b16 %v236, %v235
  %v268 = vpack.c.b16 %v238, %v237
  %v269 = vpack.c.b16 %v240, %v239
  %v270 = vpack.c.b16 %v242, %v241
  %v271 = vpack.c.b16 %v244, %v243
  %v272 = vpack.c.b16 %v246, %v245
  %v273 = vpack.c.b16 %v248, %v247
  %v274 = vpack.c.b16 %v250, %v249
  %v275 = vpack.c.b16 %v252, %v251
  %v276 = vpack.c.b16 %v254, %v253
  %v277 = vpack.c.b16 %v256, %v255
  %v278 = vpack.c.b16 %v258, %v257
  %v279 = vpack.c.b16 %v260, %v259
  %v280 = vpack.c.b16 %v262, %v261
  %vm299 = vcmask 261120
  %v301 = vsel %vm299, %v158, 0
  %v304 = vsel %vm299, %v161, 0
  %v307 = vsel %vm299, %v164, 0
  %v310 = vsel %vm299, %v167, 0
  %v313 = vsel %vm299, %v170, 0
  %v316 = vsel %vm299, %v173, 0
  %v319 = vsel %vm299, %v176, 0
  %321 = vmatprep.subr.bf16.mxu0 0
  %322 = vmatpush1.bf16.msra.mxu0 %v263
  %323 = vmatprep.subr.bf16.mxu0 0
  %324 = vmatpush1.bf16.msra.mxu0 %v264
  %325 = vmatprep.subr.bf16.mxu0 0
  %326 = vmatpush1.bf16.msra.mxu0 %v265
  %327 = vmatprep.subr.bf16.mxu0 0
  %328 = vmatpush1.bf16.msra.mxu0 %v266
  %329 = vmatprep.subr.bf16.mxu0 0
  %330 = vmatpush1.bf16.msra.mxu0 %v267
  %331 = vmatprep.subr.bf16.mxu0 0
  %332 = vmatpush1.bf16.msra.mxu0 %v268
  %333 = vmatprep.subr.bf16.mxu0 0
  %334 = vmatpush1.bf16.msra.mxu0 %v269
  %335 = vmatprep.subr.bf16.mxu0 0
  %336 = vmatpush1.bf16.msra.mxu0 %v270
  %337 = vmatprep.subr.bf16.mxu0 0
  %338 = vmatpush1.bf16.msra.mxu0 %v271
  %339 = vmatprep.subr.bf16.mxu0 0
  %340 = vmatpush1.bf16.msra.mxu0 %v272
  %341 = vmatprep.subr.bf16.mxu0 0
  %342 = vmatpush1.bf16.msra.mxu0 %v273
  %343 = vmatprep.subr.bf16.mxu0 0
  %344 = vmatpush1.bf16.msra.mxu0 %v274
  %345 = vmatprep.subr.bf16.mxu0 0
  %346 = vmatpush1.bf16.msra.mxu0 %v275
  %347 = vmatprep.subr.bf16.mxu0 0
  %348 = vmatpush1.bf16.msra.mxu0 %v276
  %349 = vmatprep.subr.bf16.mxu0 0
  %350 = vmatpush1.bf16.msra.mxu0 %v277
  %351 = vmatprep.subr.bf16.mxu0 0
  %352 = vmatpush1.bf16.msra.mxu0 %v278
  %353 = vmatprep.mubr.bf16.mxu0 %v157
  %354 = vmatmul.mubr.bf16.gmra.mrb[0].mxu0 %v156
  %v355 = vpop.f32.mrb[0].mxu0
  %v356 = vadd.f32 %v84, %v355
  %v357 = vpop.f32.mrb[0].mxu0
  %v358 = vpop.f32.mrb[0].mxu0
  %v359 = vadd.f32 %v84, %v358
  %v360 = vpop.f32.mrb[0].mxu0
  %361 = vmatprep.mubr.bf16.mxu0 %v160
  %362 = vmatmul.mubr.bf16.gmra.mrb[0].mxu0 %v159
  %v363 = vpop.f32.mrb[0].mxu0
  %v364 = vadd.f32 %v84, %v363
  %v365 = vpop.f32.mrb[0].mxu0
  %v366 = vpop.f32.mrb[0].mxu0
  %v367 = vadd.f32 %v84, %v366
  %v368 = vpop.f32.mrb[0].mxu0
  %369 = vmatprep.mubr.bf16.mxu0 %v163
  %370 = vmatmul.mubr.bf16.gmra.mrb[0].mxu0 %v162
  %v371 = vpop.f32.mrb[0].mxu0
  %v372 = vadd.f32 %v84, %v371
  %v373 = vpop.f32.mrb[0].mxu0
  %v374 = vpop.f32.mrb[0].mxu0
  %v375 = vadd.f32 %v84, %v374
  %v376 = vpop.f32.mrb[0].mxu0
  %377 = vmatprep.mubr.bf16.mxu0 %v166
  %378 = vmatmul.mubr.bf16.gmra.mrb[0].mxu0 %v165
  %v379 = vpop.f32.mrb[0].mxu0
  %v380 = vadd.f32 %v84, %v379
  %v381 = vpop.f32.mrb[0].mxu0
  %v382 = vpop.f32.mrb[0].mxu0
  %v383 = vadd.f32 %v84, %v382
  %v384 = vpop.f32.mrb[0].mxu0
  %385 = vmatprep.mubr.bf16.mxu0 %v169
  %386 = vmatmul.mubr.bf16.gmra.mrb[0].mxu0 %v168
  %v387 = vpop.f32.mrb[0].mxu0
  %v388 = vadd.f32 %v84, %v387
  %v389 = vpop.f32.mrb[0].mxu0
  %v390 = vpop.f32.mrb[0].mxu0
  %v391 = vadd.f32 %v84, %v390
  %v392 = vpop.f32.mrb[0].mxu0
  %393 = vmatprep.mubr.bf16.mxu0 %v172
  %394 = vmatmul.mubr.bf16.gmra.mrb[0].mxu0 %v171
  %v395 = vpop.f32.mrb[0].mxu0
  %v396 = vadd.f32 %v84, %v395
  %v397 = vpop.f32.mrb[0].mxu0
  %v398 = vpop.f32.mrb[0].mxu0
  %v399 = vadd.f32 %v84, %v398
  %v400 = vpop.f32.mrb[0].mxu0
  %401 = vmatprep.mubr.bf16.mxu0 %v175
  %402 = vmatmul.mubr.bf16.gmra.mrb[0].mxu0 %v174
  %v403 = vpop.f32.mrb[0].mxu0
  %v404 = vadd.f32 %v84, %v403
  %v405 = vpop.f32.mrb[0].mxu0
  %v406 = vpop.f32.mrb[0].mxu0
  %v407 = vadd.f32 %v84, %v406
  %v408 = vpop.f32.mrb[0].mxu0
  %409 = vdwg.mxu0
  %410 = vmatprep.subr.bf16.mxu0 0
  %411 = vmatpush1.bf16.msra.mxu0 %v279
  %412 = vmatprep.subr.bf16.mxu0 0
  %413 = vmatpush1.bf16.msra.mxu0 %v280
  %414 = vmatprep.subr.bf16.mxu0 0
  %415 = vmatpush1.bf16.msra.mxu0 0
  %416 = vmatprep.subr.bf16.mxu0 0
  %417 = vmatpush1.bf16.msra.mxu0 0
  %418 = vmatprep.subr.bf16.mxu0 0
  %419 = vmatpush1.bf16.msra.mxu0 0
  %420 = vmatprep.subr.bf16.mxu0 0
  %421 = vmatpush1.bf16.msra.mxu0 0
  %422 = vmatprep.subr.bf16.mxu0 0
  %423 = vmatpush1.bf16.msra.mxu0 0
  %424 = vmatprep.subr.bf16.mxu0 0
  %425 = vmatpush1.bf16.msra.mxu0 0
  %426 = vmatprep.subr.bf16.mxu0 0
  %427 = vmatpush1.bf16.msra.mxu0 0
  %428 = vmatprep.subr.bf16.mxu0 0
  %429 = vmatpush1.bf16.msra.mxu0 0
  %430 = vmatprep.subr.bf16.mxu0 0
  %431 = vmatpush1.bf16.msra.mxu0 0
  %432 = vmatprep.subr.bf16.mxu0 0
  %433 = vmatpush1.bf16.msra.mxu0 0
  %434 = vmatprep.subr.bf16.mxu0 0
  %435 = vmatpush1.bf16.msra.mxu0 0
  %436 = vmatprep.subr.bf16.mxu0 0
  %437 = vmatpush1.bf16.msra.mxu0 0
  %438 = vmatprep.subr.bf16.mxu0 0
  %439 = vmatpush1.bf16.msra.mxu0 0
  %440 = vmatprep.subr.bf16.mxu0 0
  %441 = vmatpush1.bf16.msra.mxu0 0
  %442 = vmatprep.mubr.bf16.mxu0 0
  %443 = vmatmul.mubr.bf16.gmra.mrb[0].mxu0 %v301
  %v444 = vpop.f32.mrb[0].mxu0
  %v445 = vadd.f32 %v356, %v444
  %v446 = vpop.f32.mrb[0].mxu0
  %v447 = vpop.f32.mrb[0].mxu0
  %v448 = vadd.f32 %v359, %v447
  %v449 = vpop.f32.mrb[0].mxu0
  %450 = vmatprep.mubr.bf16.mxu0 0
  %451 = vmatmul.mubr.bf16.gmra.mrb[0].mxu0 %v304
  %v452 = vpop.f32.mrb[0].mxu0
  %v453 = vadd.f32 %v364, %v452
  %v454 = vpop.f32.mrb[0].mxu0
  %v455 = vpop.f32.mrb[0].mxu0
  %v456 = vadd.f32 %v367, %v455
  %v457 = vpop.f32.mrb[0].mxu0
  %458 = vmatprep.mubr.bf16.mxu0 0
  %459 = vmatmul.mubr.bf16.gmra.mrb[0].mxu0 %v307
  %v460 = vpop.f32.mrb[0].mxu0
  %v461 = vadd.f32 %v372, %v460
  %v462 = vpop.f32.mrb[0].mxu0
  %v463 = vpop.f32.mrb[0].mxu0
  %v464 = vadd.f32 %v375, %v463
  %v465 = vpop.f32.mrb[0].mxu0
  %466 = vmatprep.mubr.bf16.mxu0 0
  %467 = vmatmul.mubr.bf16.gmra.mrb[0].mxu0 %v310
  %v468 = vpop.f32.mrb[0].mxu0
  %v469 = vadd.f32 %v380, %v468
  %v470 = vpop.f32.mrb[0].mxu0
  %v471 = vpop.f32.mrb[0].mxu0
  %v472 = vadd.f32 %v383, %v471
  %v473 = vpop.f32.mrb[0].mxu0
  %474 = vmatprep.mubr.bf16.mxu0 0
  %475 = vmatmul.mubr.bf16.gmra.mrb[0].mxu0 %v313
  %v476 = vpop.f32.mrb[0].mxu0
  %v477 = vadd.f32 %v388, %v476
  %v478 = vpop.f32.mrb[0].mxu0
  %v479 = vpop.f32.mrb[0].mxu0
  %v480 = vadd.f32 %v391, %v479
  %v481 = vpop.f32.mrb[0].mxu0
  %482 = vmatprep.mubr.bf16.mxu0 0
  %483 = vmatmul.mubr.bf16.gmra.mrb[0].mxu0 %v316
  %v484 = vpop.f32.mrb[0].mxu0
  %v485 = vadd.f32 %v396, %v484
  %v486 = vpop.f32.mrb[0].mxu0
  %v487 = vpop.f32.mrb[0].mxu0
  %v488 = vadd.f32 %v399, %v487
  %v489 = vpop.f32.mrb[0].mxu0
  %490 = vmatprep.mubr.bf16.mxu0 0
  %491 = vmatmul.mubr.bf16.gmra.mrb[0].mxu0 %v319
  %v492 = vpop.f32.mrb[0].mxu0
  %v493 = vadd.f32 %v404, %v492
  %v494 = vpop.f32.mrb[0].mxu0
  %v495 = vpop.f32.mrb[0].mxu0
  %v496 = vadd.f32 %v407, %v495
  %v497 = vpop.f32.mrb[0].mxu0
  %498 = vdwg.mxu0
  %v499 = vmul.f32 %v445, 0.5
  %v500 = vmul.f32 %v448, 0.5
  %v501 = vmul.f32 %v453, 0.5
  %v502 = vmul.f32 %v456, 0.5
  %v503 = vmul.f32 %v461, 0.5
  %v504 = vmul.f32 %v464, 0.5
  %v505 = vmul.f32 %v469, 0.5
  %v506 = vmul.f32 %v472, 0.5
  %v507 = vmul.f32 %v477, 0.5
  %v508 = vmul.f32 %v480, 0.5
  %v509 = vmul.f32 %v485, 0.5
  %v510 = vmul.f32 %v488, 0.5
  %v511 = vmul.f32 %v493, 0.5
  %v512 = vmul.f32 %v496, 0.5
  %v513 = vtanh.pop %v499
  %v514 = vtanh.pop %v500
  %v515 = vtanh.pop %v501
  %v516 = vtanh.pop %v502
  %v517 = vtanh.pop %v503
  %v518 = vtanh.pop %v504
  %v519 = vtanh.pop %v505
  %v520 = vtanh.pop %v506
  %v521 = vtanh.pop %v507
  %v522 = vtanh.pop %v508
  %v523 = vtanh.pop %v509
  %v524 = vtanh.pop %v510
  %v525 = vtanh.pop %v511
  %v526 = vtanh.pop %v512
  %v527 = vadd.f32 %v513, 1.0
  %v528 = vadd.f32 %v514, 1.0
  %v529 = vadd.f32 %v515, 1.0
  %v530 = vadd.f32 %v516, 1.0
  %v531 = vadd.f32 %v517, 1.0
  %v532 = vadd.f32 %v518, 1.0
  %v533 = vadd.f32 %v519, 1.0
  %v534 = vadd.f32 %v520, 1.0
  %v535 = vadd.f32 %v521, 1.0
  %v536 = vadd.f32 %v522, 1.0
  %v537 = vadd.f32 %v523, 1.0
  %v538 = vadd.f32 %v524, 1.0
  %v539 = vadd.f32 %v525, 1.0
  %v540 = vadd.f32 %v526, 1.0
  %v541 = vmul.f32 %v527, 0.5
  %v542 = vmul.f32 %v528, 0.5
  %v543 = vmul.f32 %v529, 0.5
  %v544 = vmul.f32 %v530, 0.5
  %v545 = vmul.f32 %v531, 0.5
  %v546 = vmul.f32 %v532, 0.5
  %v547 = vmul.f32 %v533, 0.5
  %v548 = vmul.f32 %v534, 0.5
  %v549 = vmul.f32 %v535, 0.5
  %v550 = vmul.f32 %v536, 0.5
  %v551 = vmul.f32 %v537, 0.5
  %v552 = vmul.f32 %v538, 0.5
  %v553 = vmul.f32 %v539, 0.5
  %v554 = vmul.f32 %v540, 0.5
  %555 = vst.msk [vmem:[%s3] sm:$0xff] %vm299, %v541
  %556 = vst.msk [vmem:[%s3 + $0x8] sm:$0xff] %vm299, %v542
  %557 = vst.msk [vmem:[%s3 + $0x10] sm:$0xff] %vm299, %v543
  %558 = vst.msk [vmem:[%s3 + $0x18] sm:$0xff] %vm299, %v544
  %559 = vst.msk [vmem:[%s3 + $0x20] sm:$0xff] %vm299, %v545
  %560 = vst.msk [vmem:[%s3 + $0x28] sm:$0xff] %vm299, %v546
  %561 = vst.msk [vmem:[%s3 + $0x30] sm:$0xff] %vm299, %v547
  %562 = vst.msk [vmem:[%s3 + $0x38] sm:$0xff] %vm299, %v548
  %563 = vst.msk [vmem:[%s3 + $0x40] sm:$0xff] %vm299, %v549
  %564 = vst.msk [vmem:[%s3 + $0x48] sm:$0xff] %vm299, %v550
  %565 = vst.msk [vmem:[%s3 + $0x50] sm:$0xff] %vm299, %v551
  %566 = vst.msk [vmem:[%s3 + $0x58] sm:$0xff] %vm299, %v552
  %567 = vst.msk [vmem:[%s3 + $0x60] sm:$0xff] %vm299, %v553
  %568 = vst.msk [vmem:[%s3 + $0x68] sm:$0xff] %vm299, %v554
  // Predicated region
  $region14: #{vae_res_forward.17} parent=0 // pred_check
    _
  $region15: #{vae_res_forward.17} parent=0 // pred_check_branch
    %570 = sbr.rel (0) target = $region17
  $region16: #{vae_res_forward.17} parent=0 // pred_region
    _
  $region17: #{vae_res_forward.17} parent=0 // pred_fallthru
    _
  // Predicated region
  $region18: #{vae_res_forward.17} parent=0 // pred_check
    _
  $region19: #{vae_res_forward.17} parent=0 // pred_check_branch
    %572 = sbr.rel (0) target = $region21
  $region20: #{vae_res_forward.17} parent=0 // pred_region
    _
  $region21: #{vae_res_forward.17} parent=0 // pred_fallthru
    _

</llo_original>
